<compile_context>
chip_gen: v7x
topology: tpu7x:2x2x1
jax: 0.10.0
libtpu: 0.0.40
codegen_flags: <defaults>
</compile_context>

<pallas_src>
import functools

import jax
import jax.numpy as jnp
from jax import lax
from jax.experimental import pallas as pl
from jax.experimental.pallas import tpu as pltpu


# ------------------------------------------------------------------ pallas glue

def _vmem_spec():
    # no grid -> single invocation, whole array resident in VMEM, single buffer
    return pl.BlockSpec(memory_space=pltpu.MemorySpace.VMEM)


def _att_rows(att):
    """[H, C] attention vector -> [H, H*C] rows: row h holds att[h] at lanes h*C:(h+1)*C.
    Parameter-layout plumbing done once in the wrapper (enables one batched MXU
    contraction for all heads instead of per-head M=1 matmuls)."""
    h, c = att.shape
    eye = jnp.eye(h, dtype=att.dtype)
    return (eye[:, :, None] * att[None, :, :]).reshape(h, h * c)


# ------------------------------------------------------------------ fused kernel

def fused_forward_kernel(
        adj_pd_ref, adj_dp_ref, x_p_ref, x_d_ref, eli_ref,
        spd_wl_ref, spd_wr_ref, spd_b_ref,
        sdp_wl_ref, sdp_wr_ref, sdp_b_ref,
        gpd_ws_ref, gpd_wd_ref, gpd_as_ref, gpd_ad_ref, gpd_b_ref,
        gdp_ws_ref, gdp_wd_ref, gdp_as_ref, gdp_ad_ref, gdp_b_ref,
        lp_w_ref, lp_b_ref, ld_w_ref, ld_b_ref,
        lk_ws_ref, lk_wd_ref, lk_b_ref,
        out_ref, *, heads, hdim):
    f32 = jnp.float32

    def sage_relu(adj, x_src, x_dst, wl, wr, b):
        # SAGEConv(mean) + ReLU; mean normalisation fused in-kernel.
        deg = jnp.sum(adj, axis=-1, keepdims=True)
        inv_deg = jnp.where(deg > 0, pl.reciprocal(deg, approx=False), 0.0)
        agg = jnp.dot(adj, x_src, preferred_element_type=f32) * inv_deg
        out = (jnp.dot(agg, wl, preferred_element_type=f32)
               + jnp.dot(x_dst, wr, preferred_element_type=f32) + b)
        return jnp.maximum(out, 0.0)

    def gat_relu(adj, x_src, x_dst, ws, wd, a_src_rows, a_dst_rows, b):
        # GATConv (bipartite, multi-head, concat=False -> head mean,
        # add_self_loops=False, negative_slope=0.2) + ReLU.
        # Edge softmax = dense softmax; non-edges zeroed by `* adj`.
        n_src = x_src.shape[0]
        hs = jnp.dot(x_src, ws, preferred_element_type=f32)      # [Ns, H*C]
        hd = jnp.dot(x_dst, wd, preferred_element_type=f32)      # [Nd, H*C]
        dn = (((1,), (1,)), ((), ()))                            # contract last dims
        a_s = lax.dot_general(a_src_rows, hs, dn,
                              preferred_element_type=f32)        # [H, Ns]
        a_d = lax.dot_general(hd, a_dst_rows, dn,
                              preferred_element_type=f32)        # [Nd, H]
        p_blocks = []
        for h in range(heads):
            e = a_d[:, h:h + 1] + a_s[h:h + 1, :]                # [Nd, Ns]
            e = jnp.where(e > 0, e, 0.2 * e)                     # LeakyReLU(0.2)
            # unmasked row-max is a valid (>=) stabiliser; * adj zeroes non-edges
            m = jnp.max(e, axis=-1, keepdims=True)
            p = jnp.exp(e - m) * adj
            denom = jnp.sum(p, axis=-1, keepdims=True)
            inv = jnp.where(denom > 0, pl.reciprocal(denom, approx=False), 0.0)
            p_blocks.append(p * inv)
        # one MXU contraction for all heads: K = H*Ns instead of H calls of K=Ns
        p_cat = jnp.concatenate(p_blocks, axis=1)                # [Nd, H*Ns]
        hs_hm = jnp.transpose(hs.reshape(n_src, heads, hdim),
                              (1, 0, 2)).reshape(heads * n_src, hdim)  # [H*Ns, C]
        acc = jnp.dot(p_cat, hs_hm, preferred_element_type=f32)  # [Nd, C]
        out = acc * (1.0 / heads) + b
        return jnp.maximum(out, 0.0)

    # bf16 adjacency input (only O(N^2) operand), f32 working copy for compute
    adj_pd = adj_pd_ref[...].astype(f32)   # [Nd, Np]  protein -> drug_class
    adj_dp = adj_dp_ref[...].astype(f32)   # [Np, Nd]  drug_class -> protein
    x_p = x_p_ref[...]
    x_d = x_d_ref[...]

    # conv1: SAGEConv per edge type (to_hetero), then ReLU
    h_d = sage_relu(adj_pd, x_p, x_d, spd_wl_ref[...], spd_wr_ref[...], spd_b_ref[...])
    h_p = sage_relu(adj_dp, x_d, x_p, sdp_wl_ref[...], sdp_wr_ref[...], sdp_b_ref[...])

    # conv2: GATConv per edge type, then ReLU
    g_d = gat_relu(adj_pd, h_p, h_d, gpd_ws_ref[...], gpd_wd_ref[...],
                   gpd_as_ref[...], gpd_ad_ref[...], gpd_b_ref[...])
    g_p = gat_relu(adj_dp, h_d, h_p, gdp_ws_ref[...], gdp_wd_ref[...],
                   gdp_as_ref[...], gdp_ad_ref[...], gdp_b_ref[...])

    # per-node-type Linear
    z_p = jnp.dot(g_p, lp_w_ref[...], preferred_element_type=f32) + lp_b_ref[...]
    z_d = jnp.dot(g_d, ld_w_ref[...], preferred_element_type=f32) + ld_b_ref[...]

    # link predictor: concat([src, dst]) @ W + b == src @ W_s + dst @ W_d + b.
    # One scalar per node first (VPU mul + lane-sum, no N=1 matmul) ...
    sp = jnp.sum(z_p * lk_ws_ref[...], axis=-1, keepdims=True)   # [Np, 1]
    sd = jnp.sum(z_d * lk_wd_ref[...], axis=-1, keepdims=True)   # [Nd, 1]
    # ... then per-edge gather with an in-VMEM iota==index select (lane-dense out).
    src = eli_ref[0:1, :]                                        # [1, E_pad] int32
    dst = eli_ref[1:2, :]                                        # [1, E_pad] int32
    e_pad = src.shape[1]
    iota_p = lax.broadcasted_iota(jnp.int32, (sp.shape[0], e_pad), 0)
    iota_d = lax.broadcasted_iota(jnp.int32, (sd.shape[0], e_pad), 0)
    g_src = jnp.sum(jnp.where(iota_p == src, sp, 0.0), axis=0, keepdims=True)
    g_dst = jnp.sum(jnp.where(iota_d == dst, sd, 0.0), axis=0, keepdims=True)
    logit = g_src + g_dst + lk_b_ref[...]                        # [1, E_pad]
    out_ref[...] = 1.0 / (1.0 + jnp.exp(-logit))                 # sigmoid


# ------------------------------------------------------------------ model wrapper

def init_params(key, f_p, f_d, hidden, out, heads):
    keys = iter(jax.random.split(key, 32))

    def w(shape):
        k = next(keys)
        return (jax.random.normal(k, shape, jnp.float32)
                / jnp.sqrt(jnp.float32(shape[0]))).astype(jnp.float32)

    return {
        # to_hetero: one SAGEConv per edge type (conv1)
        "sage_pd": {"wl": w((f_p, hidden)), "wr": w((f_d, hidden)), "b": w((1, hidden))},
        "sage_dp": {"wl": w((f_d, hidden)), "wr": w((f_p, hidden)), "b": w((1, hidden))},
        # to_hetero: one GATConv per edge type (conv2), heads=4, concat=False
        "gat_pd": {"ws": w((hidden, heads * hidden)), "wd": w((hidden, heads * hidden)),
                   "as": w((heads, hidden)), "ad": w((heads, hidden)), "b": w((1, hidden))},
        "gat_dp": {"ws": w((hidden, heads * hidden)), "wd": w((hidden, heads * hidden)),
                   "as": w((heads, hidden)), "ad": w((heads, hidden)), "b": w((1, hidden))},
        # to_hetero: one Linear per node type
        "lin_p": {"w": w((hidden, out)), "b": w((1, out))},
        "lin_d": {"w": w((hidden, out)), "b": w((1, out))},
        # LinkPredictor: Linear(2*out, 1) split into src/dst halves
        "link": {"ws": w((out, 1)), "wd": w((out, 1)), "b": w((1, 1))},
    }


def hetero_link_prediction_forward(params, x_dict, edge_index_dict, edge_label_index,
                                   *, heads=4):
    x_p = x_dict["protein"].astype(jnp.float32)
    x_d = x_dict["drug_class"].astype(jnp.float32)
    n_p, n_d = x_p.shape[0], x_d.shape[0]

    ei_pd = edge_index_dict[("protein", "interacts_with", "drug_class")]
    ei_dp = edge_index_dict[("drug_class", "rev_interacts_with", "protein")]

    # dense 0/1 adjacency [num_dst, num_src] in bf16 (values exact in bf16);
    # mean-normalisation / f32 accumulation happen in-kernel.
    adj_pd = jnp.zeros((n_d, n_p), jnp.bfloat16).at[ei_pd[1], ei_pd[0]].set(1.0)
    adj_dp = jnp.zeros((n_p, n_d), jnp.bfloat16).at[ei_dp[1], ei_dp[0]].set(1.0)

    # lane-dense padded edge indices (padding points at node 0; sliced off below).
    n_e = edge_label_index.shape[1]
    e_pad = max(128, ((n_e + 127) // 128) * 128)
    eli = jnp.zeros((2, e_pad), jnp.int32).at[:, :n_e].set(
        edge_label_index.astype(jnp.int32))

    # parameter-layout plumbing (once, outside the kernel)
    gpd, gdp = params["gat_pd"], params["gat_dp"]
    gpd_as, gpd_ad = _att_rows(gpd["as"]), _att_rows(gpd["ad"])
    gdp_as, gdp_ad = _att_rows(gdp["as"]), _att_rows(gdp["ad"])
    lk_ws = params["link"]["ws"].reshape(1, -1)
    lk_wd = params["link"]["wd"].reshape(1, -1)

    hidden = params["sage_pd"]["wl"].shape[1]

    args = (adj_pd, adj_dp, x_p, x_d, eli,
            params["sage_pd"]["wl"], params["sage_pd"]["wr"], params["sage_pd"]["b"],
            params["sage_dp"]["wl"], params["sage_dp"]["wr"], params["sage_dp"]["b"],
            gpd["ws"], gpd["wd"], gpd_as, gpd_ad, gpd["b"],
            gdp["ws"], gdp["wd"], gdp_as, gdp_ad, gdp["b"],
            params["lin_p"]["w"], params["lin_p"]["b"],
            params["lin_d"]["w"], params["lin_d"]["b"],
            lk_ws, lk_wd, params["link"]["b"])

    # VMEM budget from the actual footprint (operands + generous intermediate
    # estimate), clamped to [16 MiB, 56 MiB] so it is safe on v5e..v7x.
    arg_bytes = sum(int(a.size) * a.dtype.itemsize for a in args) + 4 * e_pad
    inter_bytes = 4 * (
        2 * n_p * n_d                               # f32 adjacency working copies
        + 2 * (heads + 2) * n_p * n_d               # per-head e/p + p_cat temporaries
        + 8 * (n_p + n_d) * heads * hidden          # hs/hd/h/g/z activations
        + 2 * (n_p + n_d) * e_pad                   # predictor iota/select masks
    )
    vmem_limit = int(min(max(2 * (arg_bytes + inter_bytes) + (2 << 20), 16 << 20),
                         56 << 20))

    kern = functools.partial(fused_forward_kernel, heads=heads, hdim=hidden)
    # Single fused, un-pipelined pallas_call (no grid): every operand and
    # intermediate is VMEM-resident with a SINGLE buffer per input.
    pred = pl.pallas_call(
        kern,
        in_specs=[_vmem_spec() for _ in args],
        out_specs=_vmem_spec(),
        out_shape=jax.ShapeDtypeStruct((1, e_pad), jnp.float32),
        compiler_params=pltpu.CompilerParams(vmem_limit_bytes=vmem_limit),
    )(*args)
    return pred[0, :n_e]      # == torch .squeeze()


# ------------------------------------------------------------------ main

if __name__ == "__main__":
    N_P, N_D = 16, 8            # protein / drug_class node counts
    F_P, F_D = 16, 8            # heterogeneous input feature dims ((-1, -1) lazy dims)
    HIDDEN, OUT, HEADS = 32, 16, 4
    E_LABEL = 12                # number of candidate links to score

    key = jax.random.PRNGKey(0)
    k_xp, k_xd, k_el, k_par = jax.random.split(key, 4)

    x_p = jax.random.normal(k_xp, (N_P, F_P), jnp.float32)
    x_d = jax.random.normal(k_xd, (N_D, F_D), jnp.float32)

    # deterministic bipartite edges: proteins 2d, 2d+1 -> drug_class d
    src = jnp.arange(N_P, dtype=jnp.int32)
    dst = (jnp.arange(N_P, dtype=jnp.int32) // 2) % N_D
    edge_index_pd = jnp.stack([src, dst])          # protein -> drug_class
    edge_index_dp = jnp.stack([dst, src])          # reverse edge type (to_hetero)

    edge_label_index = jnp.stack([
        jax.random.randint(k_el, (E_LABEL,), 0, N_P, dtype=jnp.int32),
        jax.random.randint(jax.random.fold_in(k_el, 1), (E_LABEL,), 0, N_D,
                           dtype=jnp.int32),
    ])

    params = init_params(k_par, F_P, F_D, HIDDEN, OUT, HEADS)

    x_dict = {"protein": x_p, "drug_class": x_d}
    edge_index_dict = {
        ("protein", "interacts_with", "drug_class"): edge_index_pd,
        ("drug_class", "rev_interacts_with", "protein"): edge_index_dp,
    }

    fwd = jax.jit(functools.partial(hetero_link_prediction_forward, heads=HEADS))
    pred = fwd(params, x_dict, edge_index_dict, edge_label_index)
    pred = jax.block_until_ready(pred)

    assert pred.shape == (E_LABEL,)
    assert bool(jnp.all(jnp.isfinite(pred)))
    assert bool(jnp.all((pred >= 0.0) & (pred <= 1.0)))
    print("KERNEL_OK")
</pallas_src>

<mosaic_0001>
module attributes {stable_mosaic.version = 11 : i64} {
  func.func @fused_forward_kernel(%arg0: memref<8x16xbf16, #tpu.memory_space<vmem>>, %arg1: memref<16x8xbf16, #tpu.memory_space<vmem>>, %arg2: memref<16x16xf32, #tpu.memory_space<vmem>>, %arg3: memref<8x8xf32, #tpu.memory_space<vmem>>, %arg4: memref<2x128xi32, #tpu.memory_space<vmem>>, %arg5: memref<16x32xf32, #tpu.memory_space<vmem>>, %arg6: memref<8x32xf32, #tpu.memory_space<vmem>>, %arg7: memref<1x32xf32, #tpu.memory_space<vmem>>, %arg8: memref<8x32xf32, #tpu.memory_space<vmem>>, %arg9: memref<16x32xf32, #tpu.memory_space<vmem>>, %arg10: memref<1x32xf32, #tpu.memory_space<vmem>>, %arg11: memref<32x128xf32, #tpu.memory_space<vmem>>, %arg12: memref<32x128xf32, #tpu.memory_space<vmem>>, %arg13: memref<4x128xf32, #tpu.memory_space<vmem>>, %arg14: memref<4x128xf32, #tpu.memory_space<vmem>>, %arg15: memref<1x32xf32, #tpu.memory_space<vmem>>, %arg16: memref<32x128xf32, #tpu.memory_space<vmem>>, %arg17: memref<32x128xf32, #tpu.memory_space<vmem>>, %arg18: memref<4x128xf32, #tpu.memory_space<vmem>>, %arg19: memref<4x128xf32, #tpu.memory_space<vmem>>, %arg20: memref<1x32xf32, #tpu.memory_space<vmem>>, %arg21: memref<32x16xf32, #tpu.memory_space<vmem>>, %arg22: memref<1x16xf32, #tpu.memory_space<vmem>>, %arg23: memref<32x16xf32, #tpu.memory_space<vmem>>, %arg24: memref<1x16xf32, #tpu.memory_space<vmem>>, %arg25: memref<1x16xf32, #tpu.memory_space<vmem>>, %arg26: memref<1x16xf32, #tpu.memory_space<vmem>>, %arg27: memref<1x1xf32, #tpu.memory_space<vmem>>, %arg28: memref<1x128xf32, #tpu.memory_space<vmem>>) attributes {dimension_semantics = [], scalar_prefetch = 0 : i64, scratch_operands = 0 : i64, tpu.core_type = #tpu.core_type<tc>} {
    %c0 = arith.constant 0 : index
    %c0_0 = arith.constant 0 : index
    %0 = vector.load %arg0[%c0, %c0_0] : memref<8x16xbf16, #tpu.memory_space<vmem>>, vector<8x16xbf16>
    %1 = arith.extf %0 : vector<8x16xbf16> to vector<8x16xf32>
    %c0_1 = arith.constant 0 : index
    %c0_2 = arith.constant 0 : index
    %2 = vector.load %arg1[%c0_1, %c0_2] : memref<16x8xbf16, #tpu.memory_space<vmem>>, vector<16x8xbf16>
    %3 = arith.extf %2 : vector<16x8xbf16> to vector<16x8xf32>
    %c0_3 = arith.constant 0 : index
    %c0_4 = arith.constant 0 : index
    %4 = vector.load %arg2[%c0_3, %c0_4] : memref<16x16xf32, #tpu.memory_space<vmem>>, vector<16x16xf32>
    %c0_5 = arith.constant 0 : index
    %c0_6 = arith.constant 0 : index
    %5 = vector.load %arg3[%c0_5, %c0_6] : memref<8x8xf32, #tpu.memory_space<vmem>>, vector<8x8xf32>
    %c0_7 = arith.constant 0 : index
    %c0_8 = arith.constant 0 : index
    %6 = vector.load %arg5[%c0_7, %c0_8] : memref<16x32xf32, #tpu.memory_space<vmem>>, vector<16x32xf32>
    %c0_9 = arith.constant 0 : index
    %c0_10 = arith.constant 0 : index
    %7 = vector.load %arg6[%c0_9, %c0_10] : memref<8x32xf32, #tpu.memory_space<vmem>>, vector<8x32xf32>
    %c0_11 = arith.constant 0 : index
    %c0_12 = arith.constant 0 : index
    %8 = vector.load %arg7[%c0_11, %c0_12] : memref<1x32xf32, #tpu.memory_space<vmem>>, vector<1x32xf32>
    %cst = arith.constant dense<0.000000e+00> : vector<8xf32>
    %9 = vector.multi_reduction <add>, %1, %cst [1] : vector<8x16xf32> to vector<8xf32>
    %10 = vector.shape_cast %9 : vector<8xf32> to vector<8x1xf32>
    %cst_13 = arith.constant 0.000000e+00 : f32
    %11 = vector.broadcast %cst_13 : f32 to vector<8x1xf32>
    %12 = arith.cmpf ogt, %10, %11 : vector<8x1xf32>
    %13 = tpu.reciprocal %10 : vector<8x1xf32> -> vector<8x1xf32>
    %cst_14 = arith.constant 0.000000e+00 : f32
    %14 = vector.broadcast %cst_14 : f32 to vector<8x1xf32>
    %15 = arith.select %12, %13, %14 : vector<8x1xi1>, vector<8x1xf32>
    %cst_15 = arith.constant dense<0.000000e+00> : vector<8x16xf32>
    %16 = tpu.matmul %1, %4, %cst_15 {dimension_numbers = #tpu.dot_dimension_numbers<[1], [0], [0], [1], [0, 0, 1, 1], [], []>} : vector<8x16xf32>, vector<16x16xf32>, vector<8x16xf32> -> vector<8x16xf32>
    %17 = vector.broadcast %15 : vector<8x1xf32> to vector<8x16xf32>
    %18 = arith.mulf %16, %17 : vector<8x16xf32>
    %cst_16 = arith.constant dense<0.000000e+00> : vector<8x32xf32>
    %19 = tpu.matmul %18, %6, %cst_16 {dimension_numbers = #tpu.dot_dimension_numbers<[1], [0], [0], [1], [0, 0, 1, 1], [], []>} : vector<8x16xf32>, vector<16x32xf32>, vector<8x32xf32> -> vector<8x32xf32>
    %cst_17 = arith.constant dense<0.000000e+00> : vector<8x32xf32>
    %20 = tpu.matmul %5, %7, %cst_17 {dimension_numbers = #tpu.dot_dimension_numbers<[1], [0], [0], [1], [0, 0, 1, 1], [], []>} : vector<8x8xf32>, vector<8x32xf32>, vector<8x32xf32> -> vector<8x32xf32>
    %21 = arith.addf %19, %20 : vector<8x32xf32>
    %22 = vector.broadcast %8 : vector<1x32xf32> to vector<8x32xf32>
    %23 = arith.addf %21, %22 : vector<8x32xf32>
    %cst_18 = arith.constant 0.000000e+00 : f32
    %24 = vector.broadcast %cst_18 : f32 to vector<8x32xf32>
    %25 = arith.maximumf %23, %24 : vector<8x32xf32>
    %c0_19 = arith.constant 0 : index
    %c0_20 = arith.constant 0 : index
    %26 = vector.load %arg8[%c0_19, %c0_20] : memref<8x32xf32, #tpu.memory_space<vmem>>, vector<8x32xf32>
    %c0_21 = arith.constant 0 : index
    %c0_22 = arith.constant 0 : index
    %27 = vector.load %arg9[%c0_21, %c0_22] : memref<16x32xf32, #tpu.memory_space<vmem>>, vector<16x32xf32>
    %c0_23 = arith.constant 0 : index
    %c0_24 = arith.constant 0 : index
    %28 = vector.load %arg10[%c0_23, %c0_24] : memref<1x32xf32, #tpu.memory_space<vmem>>, vector<1x32xf32>
    %cst_25 = arith.constant dense<0.000000e+00> : vector<16xf32>
    %29 = vector.multi_reduction <add>, %3, %cst_25 [1] : vector<16x8xf32> to vector<16xf32>
    %30 = vector.shape_cast %29 : vector<16xf32> to vector<16x1xf32>
    %cst_26 = arith.constant 0.000000e+00 : f32
    %31 = vector.broadcast %cst_26 : f32 to vector<16x1xf32>
    %32 = arith.cmpf ogt, %30, %31 : vector<16x1xf32>
    %33 = tpu.reciprocal %30 : vector<16x1xf32> -> vector<16x1xf32>
    %cst_27 = arith.constant 0.000000e+00 : f32
    %34 = vector.broadcast %cst_27 : f32 to vector<16x1xf32>
    %35 = arith.select %32, %33, %34 : vector<16x1xi1>, vector<16x1xf32>
    %cst_28 = arith.constant dense<0.000000e+00> : vector<16x8xf32>
    %36 = tpu.matmul %3, %5, %cst_28 {dimension_numbers = #tpu.dot_dimension_numbers<[1], [0], [0], [1], [0, 0, 1, 1], [], []>} : vector<16x8xf32>, vector<8x8xf32>, vector<16x8xf32> -> vector<16x8xf32>
    %37 = vector.broadcast %35 : vector<16x1xf32> to vector<16x8xf32>
    %38 = arith.mulf %36, %37 : vector<16x8xf32>
    %cst_29 = arith.constant dense<0.000000e+00> : vector<16x32xf32>
    %39 = tpu.matmul %38, %26, %cst_29 {dimension_numbers = #tpu.dot_dimension_numbers<[1], [0], [0], [1], [0, 0, 1, 1], [], []>} : vector<16x8xf32>, vector<8x32xf32>, vector<16x32xf32> -> vector<16x32xf32>
    %cst_30 = arith.constant dense<0.000000e+00> : vector<16x32xf32>
    %40 = tpu.matmul %4, %27, %cst_30 {dimension_numbers = #tpu.dot_dimension_numbers<[1], [0], [0], [1], [0, 0, 1, 1], [], []>} : vector<16x16xf32>, vector<16x32xf32>, vector<16x32xf32> -> vector<16x32xf32>
    %41 = arith.addf %39, %40 : vector<16x32xf32>
    %42 = vector.broadcast %28 : vector<1x32xf32> to vector<16x32xf32>
    %43 = arith.addf %41, %42 : vector<16x32xf32>
    %cst_31 = arith.constant 0.000000e+00 : f32
    %44 = vector.broadcast %cst_31 : f32 to vector<16x32xf32>
    %45 = arith.maximumf %43, %44 : vector<16x32xf32>
    %c0_32 = arith.constant 0 : index
    %c0_33 = arith.constant 0 : index
    %46 = vector.load %arg11[%c0_32, %c0_33] : memref<32x128xf32, #tpu.memory_space<vmem>>, vector<32x128xf32>
    %c0_34 = arith.constant 0 : index
    %c0_35 = arith.constant 0 : index
    %47 = vector.load %arg12[%c0_34, %c0_35] : memref<32x128xf32, #tpu.memory_space<vmem>>, vector<32x128xf32>
    %c0_36 = arith.constant 0 : index
    %c0_37 = arith.constant 0 : index
    %48 = vector.load %arg13[%c0_36, %c0_37] : memref<4x128xf32, #tpu.memory_space<vmem>>, vector<4x128xf32>
    %c0_38 = arith.constant 0 : index
    %c0_39 = arith.constant 0 : index
    %49 = vector.load %arg14[%c0_38, %c0_39] : memref<4x128xf32, #tpu.memory_space<vmem>>, vector<4x128xf32>
    %c0_40 = arith.constant 0 : index
    %c0_41 = arith.constant 0 : index
    %50 = vector.load %arg15[%c0_40, %c0_41] : memref<1x32xf32, #tpu.memory_space<vmem>>, vector<1x32xf32>
    %cst_42 = arith.constant dense<0.000000e+00> : vector<16x128xf32>
    %51 = tpu.matmul %45, %46, %cst_42 {dimension_numbers = #tpu.dot_dimension_numbers<[1], [0], [0], [1], [0, 0, 1, 1], [], []>} : vector<16x32xf32>, vector<32x128xf32>, vector<16x128xf32> -> vector<16x128xf32>
    %cst_43 = arith.constant dense<0.000000e+00> : vector<8x128xf32>
    %52 = tpu.matmul %25, %47, %cst_43 {dimension_numbers = #tpu.dot_dimension_numbers<[1], [0], [0], [1], [0, 0, 1, 1], [], []>} : vector<8x32xf32>, vector<32x128xf32>, vector<8x128xf32> -> vector<8x128xf32>
    %cst_44 = arith.constant dense<0.000000e+00> : vector<4x16xf32>
    %53 = tpu.matmul %48, %51, %cst_44 {dimension_numbers = #tpu.dot_dimension_numbers<[1], [1], [0], [0], [0, 0, 1, 0], [], []>} : vector<4x128xf32>, vector<16x128xf32>, vector<4x16xf32> -> vector<4x16xf32>
    %cst_45 = arith.constant dense<0.000000e+00> : vector<8x4xf32>
    %54 = tpu.matmul %52, %49, %cst_45 {dimension_numbers = #tpu.dot_dimension_numbers<[1], [1], [0], [0], [0, 0, 1, 0], [], []>} : vector<8x128xf32>, vector<4x128xf32>, vector<8x4xf32> -> vector<8x4xf32>
    %55 = vector.extract_strided_slice %54 {offsets = [0, 0], sizes = [8, 1], strides = [1, 1]} : vector<8x4xf32> to vector<8x1xf32>
    %56 = vector.extract_strided_slice %53 {offsets = [0, 0], sizes = [1, 16], strides = [1, 1]} : vector<4x16xf32> to vector<1x16xf32>
    %57 = vector.broadcast %55 : vector<8x1xf32> to vector<8x16xf32>
    %58 = vector.broadcast %56 : vector<1x16xf32> to vector<8x16xf32>
    %59 = arith.addf %57, %58 : vector<8x16xf32>
    %cst_46 = arith.constant 0.000000e+00 : f32
    %60 = vector.broadcast %cst_46 : f32 to vector<8x16xf32>
    %61 = arith.cmpf ogt, %59, %60 : vector<8x16xf32>
    %cst_47 = arith.constant 2.000000e-01 : f32
    %62 = vector.broadcast %cst_47 : f32 to vector<8x16xf32>
    %63 = arith.mulf %62, %59 : vector<8x16xf32>
    %64 = arith.select %61, %59, %63 : vector<8x16xi1>, vector<8x16xf32>
    %cst_48 = arith.constant dense<0xFF800000> : vector<8xf32>
    %65 = vector.multi_reduction <maximumf>, %64, %cst_48 [1] : vector<8x16xf32> to vector<8xf32>
    %66 = vector.shape_cast %65 : vector<8xf32> to vector<8x1xf32>
    %67 = vector.broadcast %66 : vector<8x1xf32> to vector<8x16xf32>
    %68 = arith.subf %64, %67 : vector<8x16xf32>
    %69 = math.exp %68 : vector<8x16xf32>
    %70 = arith.mulf %69, %1 : vector<8x16xf32>
    %cst_49 = arith.constant dense<0.000000e+00> : vector<8xf32>
    %71 = vector.multi_reduction <add>, %70, %cst_49 [1] : vector<8x16xf32> to vector<8xf32>
    %72 = vector.shape_cast %71 : vector<8xf32> to vector<8x1xf32>
    %cst_50 = arith.constant 0.000000e+00 : f32
    %73 = vector.broadcast %cst_50 : f32 to vector<8x1xf32>
    %74 = arith.cmpf ogt, %72, %73 : vector<8x1xf32>
    %75 = tpu.reciprocal %72 : vector<8x1xf32> -> vector<8x1xf32>
    %cst_51 = arith.constant 0.000000e+00 : f32
    %76 = vector.broadcast %cst_51 : f32 to vector<8x1xf32>
    %77 = arith.select %74, %75, %76 : vector<8x1xi1>, vector<8x1xf32>
    %78 = vector.broadcast %77 : vector<8x1xf32> to vector<8x16xf32>
    %79 = arith.mulf %70, %78 : vector<8x16xf32>
    %80 = vector.extract_strided_slice %54 {offsets = [0, 1], sizes = [8, 1], strides = [1, 1]} : vector<8x4xf32> to vector<8x1xf32>
    %81 = vector.extract_strided_slice %53 {offsets = [1, 0], sizes = [1, 16], strides = [1, 1]} : vector<4x16xf32> to vector<1x16xf32>
    %82 = vector.broadcast %80 : vector<8x1xf32> to vector<8x16xf32>
    %83 = vector.broadcast %81 : vector<1x16xf32> to vector<8x16xf32>
    %84 = arith.addf %82, %83 : vector<8x16xf32>
    %cst_52 = arith.constant 0.000000e+00 : f32
    %85 = vector.broadcast %cst_52 : f32 to vector<8x16xf32>
    %86 = arith.cmpf ogt, %84, %85 : vector<8x16xf32>
    %cst_53 = arith.constant 2.000000e-01 : f32
    %87 = vector.broadcast %cst_53 : f32 to vector<8x16xf32>
    %88 = arith.mulf %87, %84 : vector<8x16xf32>
    %89 = arith.select %86, %84, %88 : vector<8x16xi1>, vector<8x16xf32>
    %cst_54 = arith.constant dense<0xFF800000> : vector<8xf32>
    %90 = vector.multi_reduction <maximumf>, %89, %cst_54 [1] : vector<8x16xf32> to vector<8xf32>
    %91 = vector.shape_cast %90 : vector<8xf32> to vector<8x1xf32>
    %92 = vector.broadcast %91 : vector<8x1xf32> to vector<8x16xf32>
    %93 = arith.subf %89, %92 : vector<8x16xf32>
    %94 = math.exp %93 : vector<8x16xf32>
    %95 = arith.mulf %94, %1 : vector<8x16xf32>
    %cst_55 = arith.constant dense<0.000000e+00> : vector<8xf32>
    %96 = vector.multi_reduction <add>, %95, %cst_55 [1] : vector<8x16xf32> to vector<8xf32>
    %97 = vector.shape_cast %96 : vector<8xf32> to vector<8x1xf32>
    %cst_56 = arith.constant 0.000000e+00 : f32
    %98 = vector.broadcast %cst_56 : f32 to vector<8x1xf32>
    %99 = arith.cmpf ogt, %97, %98 : vector<8x1xf32>
    %100 = tpu.reciprocal %97 : vector<8x1xf32> -> vector<8x1xf32>
    %cst_57 = arith.constant 0.000000e+00 : f32
    %101 = vector.broadcast %cst_57 : f32 to vector<8x1xf32>
    %102 = arith.select %99, %100, %101 : vector<8x1xi1>, vector<8x1xf32>
    %103 = vector.broadcast %102 : vector<8x1xf32> to vector<8x16xf32>
    %104 = arith.mulf %95, %103 : vector<8x16xf32>
    %105 = vector.extract_strided_slice %54 {offsets = [0, 2], sizes = [8, 1], strides = [1, 1]} : vector<8x4xf32> to vector<8x1xf32>
    %106 = vector.extract_strided_slice %53 {offsets = [2, 0], sizes = [1, 16], strides = [1, 1]} : vector<4x16xf32> to vector<1x16xf32>
    %107 = vector.broadcast %105 : vector<8x1xf32> to vector<8x16xf32>
    %108 = vector.broadcast %106 : vector<1x16xf32> to vector<8x16xf32>
    %109 = arith.addf %107, %108 : vector<8x16xf32>
    %cst_58 = arith.constant 0.000000e+00 : f32
    %110 = vector.broadcast %cst_58 : f32 to vector<8x16xf32>
    %111 = arith.cmpf ogt, %109, %110 : vector<8x16xf32>
    %cst_59 = arith.constant 2.000000e-01 : f32
    %112 = vector.broadcast %cst_59 : f32 to vector<8x16xf32>
    %113 = arith.mulf %112, %109 : vector<8x16xf32>
    %114 = arith.select %111, %109, %113 : vector<8x16xi1>, vector<8x16xf32>
    %cst_60 = arith.constant dense<0xFF800000> : vector<8xf32>
    %115 = vector.multi_reduction <maximumf>, %114, %cst_60 [1] : vector<8x16xf32> to vector<8xf32>
    %116 = vector.shape_cast %115 : vector<8xf32> to vector<8x1xf32>
    %117 = vector.broadcast %116 : vector<8x1xf32> to vector<8x16xf32>
    %118 = arith.subf %114, %117 : vector<8x16xf32>
    %119 = math.exp %118 : vector<8x16xf32>
    %120 = arith.mulf %119, %1 : vector<8x16xf32>
    %cst_61 = arith.constant dense<0.000000e+00> : vector<8xf32>
    %121 = vector.multi_reduction <add>, %120, %cst_61 [1] : vector<8x16xf32> to vector<8xf32>
    %122 = vector.shape_cast %121 : vector<8xf32> to vector<8x1xf32>
    %cst_62 = arith.constant 0.000000e+00 : f32
    %123 = vector.broadcast %cst_62 : f32 to vector<8x1xf32>
    %124 = arith.cmpf ogt, %122, %123 : vector<8x1xf32>
    %125 = tpu.reciprocal %122 : vector<8x1xf32> -> vector<8x1xf32>
    %cst_63 = arith.constant 0.000000e+00 : f32
    %126 = vector.broadcast %cst_63 : f32 to vector<8x1xf32>
    %127 = arith.select %124, %125, %126 : vector<8x1xi1>, vector<8x1xf32>
    %128 = vector.broadcast %127 : vector<8x1xf32> to vector<8x16xf32>
    %129 = arith.mulf %120, %128 : vector<8x16xf32>
    %130 = vector.extract_strided_slice %54 {offsets = [0, 3], sizes = [8, 1], strides = [1, 1]} : vector<8x4xf32> to vector<8x1xf32>
    %131 = vector.extract_strided_slice %53 {offsets = [3, 0], sizes = [1, 16], strides = [1, 1]} : vector<4x16xf32> to vector<1x16xf32>
    %132 = vector.broadcast %130 : vector<8x1xf32> to vector<8x16xf32>
    %133 = vector.broadcast %131 : vector<1x16xf32> to vector<8x16xf32>
    %134 = arith.addf %132, %133 : vector<8x16xf32>
    %cst_64 = arith.constant 0.000000e+00 : f32
    %135 = vector.broadcast %cst_64 : f32 to vector<8x16xf32>
    %136 = arith.cmpf ogt, %134, %135 : vector<8x16xf32>
    %cst_65 = arith.constant 2.000000e-01 : f32
    %137 = vector.broadcast %cst_65 : f32 to vector<8x16xf32>
    %138 = arith.mulf %137, %134 : vector<8x16xf32>
    %139 = arith.select %136, %134, %138 : vector<8x16xi1>, vector<8x16xf32>
    %cst_66 = arith.constant dense<0xFF800000> : vector<8xf32>
    %140 = vector.multi_reduction <maximumf>, %139, %cst_66 [1] : vector<8x16xf32> to vector<8xf32>
    %141 = vector.shape_cast %140 : vector<8xf32> to vector<8x1xf32>
    %142 = vector.broadcast %141 : vector<8x1xf32> to vector<8x16xf32>
    %143 = arith.subf %139, %142 : vector<8x16xf32>
    %144 = math.exp %143 : vector<8x16xf32>
    %145 = arith.mulf %144, %1 : vector<8x16xf32>
    %cst_67 = arith.constant dense<0.000000e+00> : vector<8xf32>
    %146 = vector.multi_reduction <add>, %145, %cst_67 [1] : vector<8x16xf32> to vector<8xf32>
    %147 = vector.shape_cast %146 : vector<8xf32> to vector<8x1xf32>
    %cst_68 = arith.constant 0.000000e+00 : f32
    %148 = vector.broadcast %cst_68 : f32 to vector<8x1xf32>
    %149 = arith.cmpf ogt, %147, %148 : vector<8x1xf32>
    %150 = tpu.reciprocal %147 : vector<8x1xf32> -> vector<8x1xf32>
    %cst_69 = arith.constant 0.000000e+00 : f32
    %151 = vector.broadcast %cst_69 : f32 to vector<8x1xf32>
    %152 = arith.select %149, %150, %151 : vector<8x1xi1>, vector<8x1xf32>
    %153 = vector.broadcast %152 : vector<8x1xf32> to vector<8x16xf32>
    %154 = arith.mulf %145, %153 : vector<8x16xf32>
    %155 = tpu.concatenate %79, %104, %129, %154 in 1 : vector<8x16xf32>, vector<8x16xf32>, vector<8x16xf32>, vector<8x16xf32> -> vector<8x64xf32>
    %156 = vector.shape_cast %51 : vector<16x128xf32> to vector<16x4x32xf32>
    %157 = tpu.transpose %156, [1, 0, 2] : vector<16x4x32xf32> -> vector<4x16x32xf32>
    %158 = vector.shape_cast %157 : vector<4x16x32xf32> to vector<64x32xf32>
    %cst_70 = arith.constant dense<0.000000e+00> : vector<8x32xf32>
    %159 = tpu.matmul %155, %158, %cst_70 {dimension_numbers = #tpu.dot_dimension_numbers<[1], [0], [0], [1], [0, 0, 1, 1], [], []>} : vector<8x64xf32>, vector<64x32xf32>, vector<8x32xf32> -> vector<8x32xf32>
    %cst_71 = arith.constant 2.500000e-01 : f32
    %160 = vector.broadcast %cst_71 : f32 to vector<8x32xf32>
    %161 = arith.mulf %159, %160 : vector<8x32xf32>
    %162 = vector.broadcast %50 : vector<1x32xf32> to vector<8x32xf32>
    %163 = arith.addf %161, %162 : vector<8x32xf32>
    %cst_72 = arith.constant 0.000000e+00 : f32
    %164 = vector.broadcast %cst_72 : f32 to vector<8x32xf32>
    %165 = arith.maximumf %163, %164 : vector<8x32xf32>
    %c0_73 = arith.constant 0 : index
    %c0_74 = arith.constant 0 : index
    %166 = vector.load %arg16[%c0_73, %c0_74] : memref<32x128xf32, #tpu.memory_space<vmem>>, vector<32x128xf32>
    %c0_75 = arith.constant 0 : index
    %c0_76 = arith.constant 0 : index
    %167 = vector.load %arg17[%c0_75, %c0_76] : memref<32x128xf32, #tpu.memory_space<vmem>>, vector<32x128xf32>
    %c0_77 = arith.constant 0 : index
    %c0_78 = arith.constant 0 : index
    %168 = vector.load %arg18[%c0_77, %c0_78] : memref<4x128xf32, #tpu.memory_space<vmem>>, vector<4x128xf32>
    %c0_79 = arith.constant 0 : index
    %c0_80 = arith.constant 0 : index
    %169 = vector.load %arg19[%c0_79, %c0_80] : memref<4x128xf32, #tpu.memory_space<vmem>>, vector<4x128xf32>
    %c0_81 = arith.constant 0 : index
    %c0_82 = arith.constant 0 : index
    %170 = vector.load %arg20[%c0_81, %c0_82] : memref<1x32xf32, #tpu.memory_space<vmem>>, vector<1x32xf32>
    %cst_83 = arith.constant dense<0.000000e+00> : vector<8x128xf32>
    %171 = tpu.matmul %25, %166, %cst_83 {dimension_numbers = #tpu.dot_dimension_numbers<[1], [0], [0], [1], [0, 0, 1, 1], [], []>} : vector<8x32xf32>, vector<32x128xf32>, vector<8x128xf32> -> vector<8x128xf32>
    %cst_84 = arith.constant dense<0.000000e+00> : vector<16x128xf32>
    %172 = tpu.matmul %45, %167, %cst_84 {dimension_numbers = #tpu.dot_dimension_numbers<[1], [0], [0], [1], [0, 0, 1, 1], [], []>} : vector<16x32xf32>, vector<32x128xf32>, vector<16x128xf32> -> vector<16x128xf32>
    %cst_85 = arith.constant dense<0.000000e+00> : vector<4x8xf32>
    %173 = tpu.matmul %168, %171, %cst_85 {dimension_numbers = #tpu.dot_dimension_numbers<[1], [1], [0], [0], [0, 0, 1, 0], [], []>} : vector<4x128xf32>, vector<8x128xf32>, vector<4x8xf32> -> vector<4x8xf32>
    %cst_86 = arith.constant dense<0.000000e+00> : vector<16x4xf32>
    %174 = tpu.matmul %172, %169, %cst_86 {dimension_numbers = #tpu.dot_dimension_numbers<[1], [1], [0], [0], [0, 0, 1, 0], [], []>} : vector<16x128xf32>, vector<4x128xf32>, vector<16x4xf32> -> vector<16x4xf32>
    %175 = vector.extract_strided_slice %174 {offsets = [0, 0], sizes = [16, 1], strides = [1, 1]} : vector<16x4xf32> to vector<16x1xf32>
    %176 = vector.extract_strided_slice %173 {offsets = [0, 0], sizes = [1, 8], strides = [1, 1]} : vector<4x8xf32> to vector<1x8xf32>
    %177 = vector.broadcast %175 : vector<16x1xf32> to vector<16x8xf32>
    %178 = vector.broadcast %176 : vector<1x8xf32> to vector<16x8xf32>
    %179 = arith.addf %177, %178 : vector<16x8xf32>
    %cst_87 = arith.constant 0.000000e+00 : f32
    %180 = vector.broadcast %cst_87 : f32 to vector<16x8xf32>
    %181 = arith.cmpf ogt, %179, %180 : vector<16x8xf32>
    %cst_88 = arith.constant 2.000000e-01 : f32
    %182 = vector.broadcast %cst_88 : f32 to vector<16x8xf32>
    %183 = arith.mulf %182, %179 : vector<16x8xf32>
    %184 = arith.select %181, %179, %183 : vector<16x8xi1>, vector<16x8xf32>
    %cst_89 = arith.constant dense<0xFF800000> : vector<16xf32>
    %185 = vector.multi_reduction <maximumf>, %184, %cst_89 [1] : vector<16x8xf32> to vector<16xf32>
    %186 = vector.shape_cast %185 : vector<16xf32> to vector<16x1xf32>
    %187 = vector.broadcast %186 : vector<16x1xf32> to vector<16x8xf32>
    %188 = arith.subf %184, %187 : vector<16x8xf32>
    %189 = math.exp %188 : vector<16x8xf32>
    %190 = arith.mulf %189, %3 : vector<16x8xf32>
    %cst_90 = arith.constant dense<0.000000e+00> : vector<16xf32>
    %191 = vector.multi_reduction <add>, %190, %cst_90 [1] : vector<16x8xf32> to vector<16xf32>
    %192 = vector.shape_cast %191 : vector<16xf32> to vector<16x1xf32>
    %cst_91 = arith.constant 0.000000e+00 : f32
    %193 = vector.broadcast %cst_91 : f32 to vector<16x1xf32>
    %194 = arith.cmpf ogt, %192, %193 : vector<16x1xf32>
    %195 = tpu.reciprocal %192 : vector<16x1xf32> -> vector<16x1xf32>
    %cst_92 = arith.constant 0.000000e+00 : f32
    %196 = vector.broadcast %cst_92 : f32 to vector<16x1xf32>
    %197 = arith.select %194, %195, %196 : vector<16x1xi1>, vector<16x1xf32>
    %198 = vector.broadcast %197 : vector<16x1xf32> to vector<16x8xf32>
    %199 = arith.mulf %190, %198 : vector<16x8xf32>
    %200 = vector.extract_strided_slice %174 {offsets = [0, 1], sizes = [16, 1], strides = [1, 1]} : vector<16x4xf32> to vector<16x1xf32>
    %201 = vector.extract_strided_slice %173 {offsets = [1, 0], sizes = [1, 8], strides = [1, 1]} : vector<4x8xf32> to vector<1x8xf32>
    %202 = vector.broadcast %200 : vector<16x1xf32> to vector<16x8xf32>
    %203 = vector.broadcast %201 : vector<1x8xf32> to vector<16x8xf32>
    %204 = arith.addf %202, %203 : vector<16x8xf32>
    %cst_93 = arith.constant 0.000000e+00 : f32
    %205 = vector.broadcast %cst_93 : f32 to vector<16x8xf32>
    %206 = arith.cmpf ogt, %204, %205 : vector<16x8xf32>
    %cst_94 = arith.constant 2.000000e-01 : f32
    %207 = vector.broadcast %cst_94 : f32 to vector<16x8xf32>
    %208 = arith.mulf %207, %204 : vector<16x8xf32>
    %209 = arith.select %206, %204, %208 : vector<16x8xi1>, vector<16x8xf32>
    %cst_95 = arith.constant dense<0xFF800000> : vector<16xf32>
    %210 = vector.multi_reduction <maximumf>, %209, %cst_95 [1] : vector<16x8xf32> to vector<16xf32>
    %211 = vector.shape_cast %210 : vector<16xf32> to vector<16x1xf32>
    %212 = vector.broadcast %211 : vector<16x1xf32> to vector<16x8xf32>
    %213 = arith.subf %209, %212 : vector<16x8xf32>
    %214 = math.exp %213 : vector<16x8xf32>
    %215 = arith.mulf %214, %3 : vector<16x8xf32>
    %cst_96 = arith.constant dense<0.000000e+00> : vector<16xf32>
    %216 = vector.multi_reduction <add>, %215, %cst_96 [1] : vector<16x8xf32> to vector<16xf32>
    %217 = vector.shape_cast %216 : vector<16xf32> to vector<16x1xf32>
    %cst_97 = arith.constant 0.000000e+00 : f32
    %218 = vector.broadcast %cst_97 : f32 to vector<16x1xf32>
    %219 = arith.cmpf ogt, %217, %218 : vector<16x1xf32>
    %220 = tpu.reciprocal %217 : vector<16x1xf32> -> vector<16x1xf32>
    %cst_98 = arith.constant 0.000000e+00 : f32
    %221 = vector.broadcast %cst_98 : f32 to vector<16x1xf32>
    %222 = arith.select %219, %220, %221 : vector<16x1xi1>, vector<16x1xf32>
    %223 = vector.broadcast %222 : vector<16x1xf32> to vector<16x8xf32>
    %224 = arith.mulf %215, %223 : vector<16x8xf32>
    %225 = vector.extract_strided_slice %174 {offsets = [0, 2], sizes = [16, 1], strides = [1, 1]} : vector<16x4xf32> to vector<16x1xf32>
    %226 = vector.extract_strided_slice %173 {offsets = [2, 0], sizes = [1, 8], strides = [1, 1]} : vector<4x8xf32> to vector<1x8xf32>
    %227 = vector.broadcast %225 : vector<16x1xf32> to vector<16x8xf32>
    %228 = vector.broadcast %226 : vector<1x8xf32> to vector<16x8xf32>
    %229 = arith.addf %227, %228 : vector<16x8xf32>
    %cst_99 = arith.constant 0.000000e+00 : f32
    %230 = vector.broadcast %cst_99 : f32 to vector<16x8xf32>
    %231 = arith.cmpf ogt, %229, %230 : vector<16x8xf32>
    %cst_100 = arith.constant 2.000000e-01 : f32
    %232 = vector.broadcast %cst_100 : f32 to vector<16x8xf32>
    %233 = arith.mulf %232, %229 : vector<16x8xf32>
    %234 = arith.select %231, %229, %233 : vector<16x8xi1>, vector<16x8xf32>
    %cst_101 = arith.constant dense<0xFF800000> : vector<16xf32>
    %235 = vector.multi_reduction <maximumf>, %234, %cst_101 [1] : vector<16x8xf32> to vector<16xf32>
    %236 = vector.shape_cast %235 : vector<16xf32> to vector<16x1xf32>
    %237 = vector.broadcast %236 : vector<16x1xf32> to vector<16x8xf32>
    %238 = arith.subf %234, %237 : vector<16x8xf32>
    %239 = math.exp %238 : vector<16x8xf32>
    %240 = arith.mulf %239, %3 : vector<16x8xf32>
    %cst_102 = arith.constant dense<0.000000e+00> : vector<16xf32>
    %241 = vector.multi_reduction <add>, %240, %cst_102 [1] : vector<16x8xf32> to vector<16xf32>
    %242 = vector.shape_cast %241 : vector<16xf32> to vector<16x1xf32>
    %cst_103 = arith.constant 0.000000e+00 : f32
    %243 = vector.broadcast %cst_103 : f32 to vector<16x1xf32>
    %244 = arith.cmpf ogt, %242, %243 : vector<16x1xf32>
    %245 = tpu.reciprocal %242 : vector<16x1xf32> -> vector<16x1xf32>
    %cst_104 = arith.constant 0.000000e+00 : f32
    %246 = vector.broadcast %cst_104 : f32 to vector<16x1xf32>
    %247 = arith.select %244, %245, %246 : vector<16x1xi1>, vector<16x1xf32>
    %248 = vector.broadcast %247 : vector<16x1xf32> to vector<16x8xf32>
    %249 = arith.mulf %240, %248 : vector<16x8xf32>
    %250 = vector.extract_strided_slice %174 {offsets = [0, 3], sizes = [16, 1], strides = [1, 1]} : vector<16x4xf32> to vector<16x1xf32>
    %251 = vector.extract_strided_slice %173 {offsets = [3, 0], sizes = [1, 8], strides = [1, 1]} : vector<4x8xf32> to vector<1x8xf32>
    %252 = vector.broadcast %250 : vector<16x1xf32> to vector<16x8xf32>
    %253 = vector.broadcast %251 : vector<1x8xf32> to vector<16x8xf32>
    %254 = arith.addf %252, %253 : vector<16x8xf32>
    %cst_105 = arith.constant 0.000000e+00 : f32
    %255 = vector.broadcast %cst_105 : f32 to vector<16x8xf32>
    %256 = arith.cmpf ogt, %254, %255 : vector<16x8xf32>
    %cst_106 = arith.constant 2.000000e-01 : f32
    %257 = vector.broadcast %cst_106 : f32 to vector<16x8xf32>
    %258 = arith.mulf %257, %254 : vector<16x8xf32>
    %259 = arith.select %256, %254, %258 : vector<16x8xi1>, vector<16x8xf32>
    %cst_107 = arith.constant dense<0xFF800000> : vector<16xf32>
    %260 = vector.multi_reduction <maximumf>, %259, %cst_107 [1] : vector<16x8xf32> to vector<16xf32>
    %261 = vector.shape_cast %260 : vector<16xf32> to vector<16x1xf32>
    %262 = vector.broadcast %261 : vector<16x1xf32> to vector<16x8xf32>
    %263 = arith.subf %259, %262 : vector<16x8xf32>
    %264 = math.exp %263 : vector<16x8xf32>
    %265 = arith.mulf %264, %3 : vector<16x8xf32>
    %cst_108 = arith.constant dense<0.000000e+00> : vector<16xf32>
    %266 = vector.multi_reduction <add>, %265, %cst_108 [1] : vector<16x8xf32> to vector<16xf32>
    %267 = vector.shape_cast %266 : vector<16xf32> to vector<16x1xf32>
    %cst_109 = arith.constant 0.000000e+00 : f32
    %268 = vector.broadcast %cst_109 : f32 to vector<16x1xf32>
    %269 = arith.cmpf ogt, %267, %268 : vector<16x1xf32>
    %270 = tpu.reciprocal %267 : vector<16x1xf32> -> vector<16x1xf32>
    %cst_110 = arith.constant 0.000000e+00 : f32
    %271 = vector.broadcast %cst_110 : f32 to vector<16x1xf32>
    %272 = arith.select %269, %270, %271 : vector<16x1xi1>, vector<16x1xf32>
    %273 = vector.broadcast %272 : vector<16x1xf32> to vector<16x8xf32>
    %274 = arith.mulf %265, %273 : vector<16x8xf32>
    %275 = tpu.concatenate %199, %224, %249, %274 in 1 : vector<16x8xf32>, vector<16x8xf32>, vector<16x8xf32>, vector<16x8xf32> -> vector<16x32xf32>
    %276 = vector.shape_cast %171 : vector<8x128xf32> to vector<8x4x32xf32>
    %277 = tpu.transpose %276, [1, 0, 2] : vector<8x4x32xf32> -> vector<4x8x32xf32>
    %278 = vector.shape_cast %277 : vector<4x8x32xf32> to vector<32x32xf32>
    %cst_111 = arith.constant dense<0.000000e+00> : vector<16x32xf32>
    %279 = tpu.matmul %275, %278, %cst_111 {dimension_numbers = #tpu.dot_dimension_numbers<[1], [0], [0], [1], [0, 0, 1, 1], [], []>} : vector<16x32xf32>, vector<32x32xf32>, vector<16x32xf32> -> vector<16x32xf32>
    %cst_112 = arith.constant 2.500000e-01 : f32
    %280 = vector.broadcast %cst_112 : f32 to vector<16x32xf32>
    %281 = arith.mulf %279, %280 : vector<16x32xf32>
    %282 = vector.broadcast %170 : vector<1x32xf32> to vector<16x32xf32>
    %283 = arith.addf %281, %282 : vector<16x32xf32>
    %cst_113 = arith.constant 0.000000e+00 : f32
    %284 = vector.broadcast %cst_113 : f32 to vector<16x32xf32>
    %285 = arith.maximumf %283, %284 : vector<16x32xf32>
    %c0_114 = arith.constant 0 : index
    %c0_115 = arith.constant 0 : index
    %286 = vector.load %arg21[%c0_114, %c0_115] : memref<32x16xf32, #tpu.memory_space<vmem>>, vector<32x16xf32>
    %cst_116 = arith.constant dense<0.000000e+00> : vector<16x16xf32>
    %287 = tpu.matmul %285, %286, %cst_116 {dimension_numbers = #tpu.dot_dimension_numbers<[1], [0], [0], [1], [0, 0, 1, 1], [], []>} : vector<16x32xf32>, vector<32x16xf32>, vector<16x16xf32> -> vector<16x16xf32>
    %c0_117 = arith.constant 0 : index
    %c0_118 = arith.constant 0 : index
    %288 = vector.load %arg22[%c0_117, %c0_118] : memref<1x16xf32, #tpu.memory_space<vmem>>, vector<1x16xf32>
    %289 = vector.broadcast %288 : vector<1x16xf32> to vector<16x16xf32>
    %290 = arith.addf %287, %289 : vector<16x16xf32>
    %c0_119 = arith.constant 0 : index
    %c0_120 = arith.constant 0 : index
    %291 = vector.load %arg23[%c0_119, %c0_120] : memref<32x16xf32, #tpu.memory_space<vmem>>, vector<32x16xf32>
    %cst_121 = arith.constant dense<0.000000e+00> : vector<8x16xf32>
    %292 = tpu.matmul %165, %291, %cst_121 {dimension_numbers = #tpu.dot_dimension_numbers<[1], [0], [0], [1], [0, 0, 1, 1], [], []>} : vector<8x32xf32>, vector<32x16xf32>, vector<8x16xf32> -> vector<8x16xf32>
    %c0_122 = arith.constant 0 : index
    %c0_123 = arith.constant 0 : index
    %293 = vector.load %arg24[%c0_122, %c0_123] : memref<1x16xf32, #tpu.memory_space<vmem>>, vector<1x16xf32>
    %294 = vector.broadcast %293 : vector<1x16xf32> to vector<8x16xf32>
    %295 = arith.addf %292, %294 : vector<8x16xf32>
    %c0_124 = arith.constant 0 : index
    %c0_125 = arith.constant 0 : index
    %296 = vector.load %arg25[%c0_124, %c0_125] : memref<1x16xf32, #tpu.memory_space<vmem>>, vector<1x16xf32>
    %297 = vector.broadcast %296 : vector<1x16xf32> to vector<16x16xf32>
    %298 = arith.mulf %290, %297 : vector<16x16xf32>
    %cst_126 = arith.constant dense<0.000000e+00> : vector<16xf32>
    %299 = vector.multi_reduction <add>, %298, %cst_126 [1] : vector<16x16xf32> to vector<16xf32>
    %300 = vector.shape_cast %299 : vector<16xf32> to vector<16x1xf32>
    %c0_127 = arith.constant 0 : index
    %c0_128 = arith.constant 0 : index
    %301 = vector.load %arg26[%c0_127, %c0_128] : memref<1x16xf32, #tpu.memory_space<vmem>>, vector<1x16xf32>
    %302 = vector.broadcast %301 : vector<1x16xf32> to vector<8x16xf32>
    %303 = arith.mulf %295, %302 : vector<8x16xf32>
    %cst_129 = arith.constant dense<0.000000e+00> : vector<8xf32>
    %304 = vector.multi_reduction <add>, %303, %cst_129 [1] : vector<8x16xf32> to vector<8xf32>
    %305 = vector.shape_cast %304 : vector<8xf32> to vector<8x1xf32>
    %c0_130 = arith.constant 0 : index
    %c0_131 = arith.constant 0 : index
    %306 = vector.load %arg4[%c0_130, %c0_131] : memref<2x128xi32, #tpu.memory_space<vmem>>, vector<1x128xi32>
    %c1 = arith.constant 1 : index
    %c0_132 = arith.constant 0 : index
    %307 = vector.load %arg4[%c1, %c0_132] : memref<2x128xi32, #tpu.memory_space<vmem>>, vector<1x128xi32>
    %308 = tpu.iota {dimensions = array<i32: 0>} : vector<16x128xi32>
    %309 = tpu.iota {dimensions = array<i32: 0>} : vector<8x128xi32>
    %310 = vector.broadcast %306 : vector<1x128xi32> to vector<16x128xi32>
    %311 = arith.cmpi eq, %308, %310 : vector<16x128xi32>
    %cst_133 = arith.constant 0.000000e+00 : f32
    %312 = vector.shape_cast %300 : vector<16x1xf32> to vector<16x1xf32>
    %313 = vector.broadcast %312 : vector<16x1xf32> to vector<16x128xf32>
    %314 = vector.broadcast %cst_133 : f32 to vector<16x128xf32>
    %315 = arith.select %311, %313, %314 : vector<16x128xi1>, vector<16x128xf32>
    %cst_134 = arith.constant dense<0.000000e+00> : vector<128xf32>
    %316 = vector.multi_reduction <add>, %315, %cst_134 [0] : vector<16x128xf32> to vector<128xf32>
    %317 = vector.shape_cast %316 : vector<128xf32> to vector<1x128xf32>
    %318 = vector.broadcast %307 : vector<1x128xi32> to vector<8x128xi32>
    %319 = arith.cmpi eq, %309, %318 : vector<8x128xi32>
    %cst_135 = arith.constant 0.000000e+00 : f32
    %320 = vector.shape_cast %305 : vector<8x1xf32> to vector<8x1xf32>
    %321 = vector.broadcast %320 : vector<8x1xf32> to vector<8x128xf32>
    %322 = vector.broadcast %cst_135 : f32 to vector<8x128xf32>
    %323 = arith.select %319, %321, %322 : vector<8x128xi1>, vector<8x128xf32>
    %cst_136 = arith.constant dense<0.000000e+00> : vector<128xf32>
    %324 = vector.multi_reduction <add>, %323, %cst_136 [0] : vector<8x128xf32> to vector<128xf32>
    %325 = vector.shape_cast %324 : vector<128xf32> to vector<1x128xf32>
    %326 = arith.addf %317, %325 : vector<1x128xf32>
    %c0_137 = arith.constant 0 : index
    %c0_138 = arith.constant 0 : index
    %327 = vector.load %arg27[%c0_137, %c0_138] : memref<1x1xf32, #tpu.memory_space<vmem>>, vector<1x1xf32>
    %328 = vector.broadcast %327 : vector<1x1xf32> to vector<1x128xf32>
    %329 = arith.addf %326, %328 : vector<1x128xf32>
    %cst_139 = arith.constant 0.000000e+00 : f32
    %330 = vector.broadcast %cst_139 : f32 to vector<1x128xf32>
    %331 = arith.subf %330, %329 : vector<1x128xf32>
    %332 = math.exp %331 : vector<1x128xf32>
    %cst_140 = arith.constant 1.000000e+00 : f32
    %333 = vector.broadcast %cst_140 : f32 to vector<1x128xf32>
    %334 = arith.addf %333, %332 : vector<1x128xf32>
    %cst_141 = arith.constant 1.000000e+00 : f32
    %335 = vector.broadcast %cst_141 : f32 to vector<1x128xf32>
    %336 = arith.divf %335, %334 : vector<1x128xf32>
    %c0_142 = arith.constant 0 : index
    %c0_143 = arith.constant 0 : index
    %337 = vector.load %arg28[%c0_142, %c0_143] : memref<1x128xf32, #tpu.memory_space<vmem>>, vector<1x128xf32>
    tpu.vector_store %arg28[%c0_142, %c0_143], %336 {strides = array<i32>} : memref<1x128xf32, #tpu.memory_space<vmem>>, vector<1x128xf32>,
    return
  }
}

</mosaic_0001>

<llo_original>
// kernel: hetero_link_prediction_forward.1
$region0: #{hetero_link_prediction_forward.1}
  #allocation0 [shape = 'u32[]', space=smem, size = 0x4, offset = 0x4, fixed_abs, tag = 'smem constant byte address 0x4 - core index']
  #allocation1 [shape = 'u32[144,128]{1,0:T(1,128)}', space=vmem, size = 0x12000, scoped, tag = 'internal scratch']
  #allocation2 [shape = 'f32[1,1]{1,0:T(1,128)S(1)}', space=vmem, size = 0x200, scoped, tag = 'scoped memory for hetero_link_prediction_forward.1']
  %s0 = inlined_call_operand.vmem [shape: bf16[8,16], index: 0, kind: input, shape index: {}]
  %s1 = inlined_call_operand.vmem [shape: bf16[16,8], index: 1, kind: input, shape index: {}]
  %s2 = inlined_call_operand.vmem [shape: f32[16,16], index: 2, kind: input, shape index: {}]
  %s3 = inlined_call_operand.vmem [shape: f32[8,8], index: 3, kind: input, shape index: {}]
  %s4 = inlined_call_operand.vmem [shape: s32[2,128], index: 4, kind: input, shape index: {}]
  %s5 = inlined_call_operand.vmem [shape: f32[16,32], index: 5, kind: input, shape index: {}]
  %s6 = inlined_call_operand.vmem [shape: f32[8,32], index: 6, kind: input, shape index: {}]
  %s7 = inlined_call_operand.vmem [shape: f32[1,32], index: 7, kind: input, shape index: {}]
  %s8 = inlined_call_operand.vmem [shape: f32[8,32], index: 8, kind: input, shape index: {}]
  %s9 = inlined_call_operand.vmem [shape: f32[16,32], index: 9, kind: input, shape index: {}]
  %s10 = inlined_call_operand.vmem [shape: f32[1,32], index: 10, kind: input, shape index: {}]
  %s11 = inlined_call_operand.vmem [shape: f32[32,128], index: 11, kind: input, shape index: {}]
  %s12 = inlined_call_operand.vmem [shape: f32[32,128], index: 12, kind: input, shape index: {}]
  %s13 = inlined_call_operand.vmem [shape: f32[4,128], index: 13, kind: input, shape index: {}]
  %s14 = inlined_call_operand.vmem [shape: f32[4,128], index: 14, kind: input, shape index: {}]
  %s15 = inlined_call_operand.vmem [shape: f32[1,32], index: 15, kind: input, shape index: {}]
  %s16 = inlined_call_operand.vmem [shape: f32[32,128], index: 16, kind: input, shape index: {}]
  %s17 = inlined_call_operand.vmem [shape: f32[32,128], index: 17, kind: input, shape index: {}]
  %s18 = inlined_call_operand.vmem [shape: f32[4,128], index: 18, kind: input, shape index: {}]
  %s19 = inlined_call_operand.vmem [shape: f32[4,128], index: 19, kind: input, shape index: {}]
  %s20 = inlined_call_operand.vmem [shape: f32[1,32], index: 20, kind: input, shape index: {}]
  %s21 = inlined_call_operand.vmem [shape: f32[32,16], index: 21, kind: input, shape index: {}]
  %s22 = inlined_call_operand.vmem [shape: f32[1,16], index: 22, kind: input, shape index: {}]
  %s23 = inlined_call_operand.vmem [shape: f32[32,16], index: 23, kind: input, shape index: {}]
  %s24 = inlined_call_operand.vmem [shape: f32[1,16], index: 24, kind: input, shape index: {}]
  %s25 = inlined_call_operand.vmem [shape: f32[1,16], index: 25, kind: input, shape index: {}]
  %s26 = inlined_call_operand.vmem [shape: f32[1,16], index: 26, kind: input, shape index: {}]
  %s27 = inlined_call_operand.<no memory space> [shape: f32[1,1], index: 27, kind: input, shape index: {}]
  %s28 = inlined_call_operand.vmem [shape: f32[1,128], index: 28, kind: output, shape index: {}]
  %s29 = sld [smem:[#allocation0]]
  $region122: #{hetero_link_prediction_forward.1} parent=0
    _
  %s31 = ssub.s32 1, %s29
  %s32 = scalar_select 0, %s31, %s29
  %v33 = vstv %s27
  %34 = vst [vmem:[#allocation2] sm:$0x1] %v33
  // Predicated region
  $region2: #{hetero_link_prediction_forward.1} parent=0 // pred_check
    _
  $region3: #{hetero_link_prediction_forward.1} parent=0 // pred_check_branch
    %36 = sbr.rel (0) target = $region5
  $region4: #{hetero_link_prediction_forward.1} parent=0 // pred_region
    _
  $region5: #{hetero_link_prediction_forward.1} parent=0 // pred_fallthru
    _
  // Predicated region
  $region6: #{hetero_link_prediction_forward.1} parent=0 // pred_check
    _
  $region7: #{hetero_link_prediction_forward.1} parent=0 // pred_check_branch
    %38 = sbr.rel (0) target = $region9
  $region8: #{hetero_link_prediction_forward.1} parent=0 // pred_region
    _
  $region9: #{hetero_link_prediction_forward.1} parent=0 // pred_fallthru
    _
  // Predicated region
  $region10: #{hetero_link_prediction_forward.1} parent=0 // pred_check
    _
  $region11: #{hetero_link_prediction_forward.1} parent=0 // pred_check_branch
    %40 = sbr.rel (0) target = $region13
  $region12: #{hetero_link_prediction_forward.1} parent=0 // pred_region
    _
  $region13: #{hetero_link_prediction_forward.1} parent=0 // pred_fallthru
    _
  // Predicated region
  $region14: #{hetero_link_prediction_forward.1} parent=0 // pred_check
    _
  $region15: #{hetero_link_prediction_forward.1} parent=0 // pred_check_branch
    %42 = sbr.rel (0) target = $region17
  $region16: #{hetero_link_prediction_forward.1} parent=0 // pred_region
    _
  $region17: #{hetero_link_prediction_forward.1} parent=0 // pred_fallthru
    _
  // Predicated region
  $region18: #{hetero_link_prediction_forward.1} parent=0 // pred_check
    _
  $region19: #{hetero_link_prediction_forward.1} parent=0 // pred_check_branch
    %44 = sbr.rel (0) target = $region21
  $region20: #{hetero_link_prediction_forward.1} parent=0 // pred_region
    _
  $region21: #{hetero_link_prediction_forward.1} parent=0 // pred_fallthru
    _
  // Predicated region
  $region22: #{hetero_link_prediction_forward.1} parent=0 // pred_check
    _
  $region23: #{hetero_link_prediction_forward.1} parent=0 // pred_check_branch
    %46 = sbr.rel (0) target = $region25
  $region24: #{hetero_link_prediction_forward.1} parent=0 // pred_region
    _
  $region25: #{hetero_link_prediction_forward.1} parent=0 // pred_fallthru
    _
  // Predicated region
  $region26: #{hetero_link_prediction_forward.1} parent=0 // pred_check
    _
  $region27: #{hetero_link_prediction_forward.1} parent=0 // pred_check_branch
    %48 = sbr.rel (0) target = $region29
  $region28: #{hetero_link_prediction_forward.1} parent=0 // pred_region
    _
  $region29: #{hetero_link_prediction_forward.1} parent=0 // pred_fallthru
    _
  // Predicated region
  $region30: #{hetero_link_prediction_forward.1} parent=0 // pred_check
    _
  $region31: #{hetero_link_prediction_forward.1} parent=0 // pred_check_branch
    %50 = sbr.rel (0) target = $region33
  $region32: #{hetero_link_prediction_forward.1} parent=0 // pred_region
    _
  $region33: #{hetero_link_prediction_forward.1} parent=0 // pred_fallthru
    _
  // Predicated region
  $region34: #{hetero_link_prediction_forward.1} parent=0 // pred_check
    _
  $region35: #{hetero_link_prediction_forward.1} parent=0 // pred_check_branch
    %52 = sbr.rel (0) target = $region37
  $region36: #{hetero_link_prediction_forward.1} parent=0 // pred_region
    _
  $region37: #{hetero_link_prediction_forward.1} parent=0 // pred_fallthru
    _
  // Predicated region
  $region38: #{hetero_link_prediction_forward.1} parent=0 // pred_check
    _
  $region39: #{hetero_link_prediction_forward.1} parent=0 // pred_check_branch
    %54 = sbr.rel (0) target = $region41
  $region40: #{hetero_link_prediction_forward.1} parent=0 // pred_region
    _
  $region41: #{hetero_link_prediction_forward.1} parent=0 // pred_fallthru
    _
  // Predicated region
  $region42: #{hetero_link_prediction_forward.1} parent=0 // pred_check
    _
  $region43: #{hetero_link_prediction_forward.1} parent=0 // pred_check_branch
    %56 = sbr.rel (0) target = $region45
  $region44: #{hetero_link_prediction_forward.1} parent=0 // pred_region
    _
  $region45: #{hetero_link_prediction_forward.1} parent=0 // pred_fallthru
    _
  // Predicated region
  $region46: #{hetero_link_prediction_forward.1} parent=0 // pred_check
    _
  $region47: #{hetero_link_prediction_forward.1} parent=0 // pred_check_branch
    %58 = sbr.rel (0) target = $region49
  $region48: #{hetero_link_prediction_forward.1} parent=0 // pred_region
    _
  $region49: #{hetero_link_prediction_forward.1} parent=0 // pred_fallthru
    _
  // Predicated region
  $region50: #{hetero_link_prediction_forward.1} parent=0 // pred_check
    _
  $region51: #{hetero_link_prediction_forward.1} parent=0 // pred_check_branch
    %60 = sbr.rel (0) target = $region53
  $region52: #{hetero_link_prediction_forward.1} parent=0 // pred_region
    _
  $region53: #{hetero_link_prediction_forward.1} parent=0 // pred_fallthru
    _
  // Predicated region
  $region54: #{hetero_link_prediction_forward.1} parent=0 // pred_check
    _
  $region55: #{hetero_link_prediction_forward.1} parent=0 // pred_check_branch
    %62 = sbr.rel (0) target = $region57
  $region56: #{hetero_link_prediction_forward.1} parent=0 // pred_region
    _
  $region57: #{hetero_link_prediction_forward.1} parent=0 // pred_fallthru
    _
  // Predicated region
  $region58: #{hetero_link_prediction_forward.1} parent=0 // pred_check
    _
  $region59: #{hetero_link_prediction_forward.1} parent=0 // pred_check_branch
    %64 = sbr.rel (0) target = $region61
  $region60: #{hetero_link_prediction_forward.1} parent=0 // pred_region
    _
  $region61: #{hetero_link_prediction_forward.1} parent=0 // pred_fallthru
    _
  // Predicated region
  $region62: #{hetero_link_prediction_forward.1} parent=0 // pred_check
    _
  $region63: #{hetero_link_prediction_forward.1} parent=0 // pred_check_branch
    %66 = sbr.rel (0) target = $region65
  $region64: #{hetero_link_prediction_forward.1} parent=0 // pred_region
    _
  $region65: #{hetero_link_prediction_forward.1} parent=0 // pred_fallthru
    _
  // Predicated region
  $region66: #{hetero_link_prediction_forward.1} parent=0 // pred_check
    _
  $region67: #{hetero_link_prediction_forward.1} parent=0 // pred_check_branch
    %68 = sbr.rel (0) target = $region69
  $region68: #{hetero_link_prediction_forward.1} parent=0 // pred_region
    _
  $region69: #{hetero_link_prediction_forward.1} parent=0 // pred_fallthru
    _
  // Predicated region
  $region70: #{hetero_link_prediction_forward.1} parent=0 // pred_check
    _
  $region71: #{hetero_link_prediction_forward.1} parent=0 // pred_check_branch
    %70 = sbr.rel (0) target = $region73
  $region72: #{hetero_link_prediction_forward.1} parent=0 // pred_region
    _
  $region73: #{hetero_link_prediction_forward.1} parent=0 // pred_fallthru
    _
  // Predicated region
  $region74: #{hetero_link_prediction_forward.1} parent=0 // pred_check
    _
  $region75: #{hetero_link_prediction_forward.1} parent=0 // pred_check_branch
    %72 = sbr.rel (0) target = $region77
  $region76: #{hetero_link_prediction_forward.1} parent=0 // pred_region
    _
  $region77: #{hetero_link_prediction_forward.1} parent=0 // pred_fallthru
    _
  // Predicated region
  $region78: #{hetero_link_prediction_forward.1} parent=0 // pred_check
    _
  $region79: #{hetero_link_prediction_forward.1} parent=0 // pred_check_branch
    %74 = sbr.rel (0) target = $region81
  $region80: #{hetero_link_prediction_forward.1} parent=0 // pred_region
    _
  $region81: #{hetero_link_prediction_forward.1} parent=0 // pred_fallthru
    _
  // Predicated region
  $region82: #{hetero_link_prediction_forward.1} parent=0 // pred_check
    _
  $region83: #{hetero_link_prediction_forward.1} parent=0 // pred_check_branch
    %76 = sbr.rel (0) target = $region85
  $region84: #{hetero_link_prediction_forward.1} parent=0 // pred_region
    _
  $region85: #{hetero_link_prediction_forward.1} parent=0 // pred_fallthru
    _
  // Predicated region
  $region86: #{hetero_link_prediction_forward.1} parent=0 // pred_check
    _
  $region87: #{hetero_link_prediction_forward.1} parent=0 // pred_check_branch
    %78 = sbr.rel (0) target = $region89
  $region88: #{hetero_link_prediction_forward.1} parent=0 // pred_region
    _
  $region89: #{hetero_link_prediction_forward.1} parent=0 // pred_fallthru
    _
  // Predicated region
  $region90: #{hetero_link_prediction_forward.1} parent=0 // pred_check
    _
  $region91: #{hetero_link_prediction_forward.1} parent=0 // pred_check_branch
    %80 = sbr.rel (0) target = $region93
  $region92: #{hetero_link_prediction_forward.1} parent=0 // pred_region
    _
  $region93: #{hetero_link_prediction_forward.1} parent=0 // pred_fallthru
    _
  // Predicated region
  $region94: #{hetero_link_prediction_forward.1} parent=0 // pred_check
    _
  $region95: #{hetero_link_prediction_forward.1} parent=0 // pred_check_branch
    %82 = sbr.rel (0) target = $region97
  $region96: #{hetero_link_prediction_forward.1} parent=0 // pred_region
    _
  $region97: #{hetero_link_prediction_forward.1} parent=0 // pred_fallthru
    _
  // Predicated region
  $region98: #{hetero_link_prediction_forward.1} parent=0 // pred_check
    _
  $region99: #{hetero_link_prediction_forward.1} parent=0 // pred_check_branch
    %84 = sbr.rel (0) target = $region101
  $region100: #{hetero_link_prediction_forward.1} parent=0 // pred_region
    _
  $region101: #{hetero_link_prediction_forward.1} parent=0 // pred_fallthru
    _
  // Predicated region
  $region102: #{hetero_link_prediction_forward.1} parent=0 // pred_check
    _
  $region103: #{hetero_link_prediction_forward.1} parent=0 // pred_check_branch
    %86 = sbr.rel (0) target = $region105
  $region104: #{hetero_link_prediction_forward.1} parent=0 // pred_region
    _
  $region105: #{hetero_link_prediction_forward.1} parent=0 // pred_fallthru
    _
  // Predicated region
  $region106: #{hetero_link_prediction_forward.1} parent=0 // pred_check
    _
  $region107: #{hetero_link_prediction_forward.1} parent=0 // pred_check_branch
    %88 = sbr.rel (0) target = $region109
  $region108: #{hetero_link_prediction_forward.1} parent=0 // pred_region
    _
  $region109: #{hetero_link_prediction_forward.1} parent=0 // pred_fallthru
    _
  // Predicated region
  $region110: #{hetero_link_prediction_forward.1} parent=0 // pred_check
    _
  $region111: #{hetero_link_prediction_forward.1} parent=0 // pred_check_branch
    %90 = sbr.rel (0) target = $region113
  $region112: #{hetero_link_prediction_forward.1} parent=0 // pred_region
    _
  $region113: #{hetero_link_prediction_forward.1} parent=0 // pred_fallthru
    _
  %v91 = vld [vmem:[%s0] sm:$0xf]
  %v92 = vunpack.c.l.bf16 %v91
  %v93 = vld [vmem:[%s1] sm:$0xf]
  %v94 = vld [vmem:[%s1 + $0x4] sm:$0xf]
  %v95 = vunpack.c.l.bf16 %v93
  %v96 = vunpack.c.l.bf16 %v94
  %v97 = vld [vmem:[%s2] sm:$0xff]
  %v98 = vld [vmem:[%s2 + $0x8] sm:$0xff]
  %v99 = vld [vmem:[%s3] sm:$0xff]
  %v100 = vld [vmem:[%s5] sm:$0xff]
  %v101 = vld [vmem:[%s5 + $0x8] sm:$0xff]
  %v102 = vld [vmem:[%s6] sm:$0xff]
  %v103 = vld [vmem:[%s7] sm:$0x1]
  %vm104 = vcmask 130048
  %v105 = vsel %vm104, %v92, 0.0
  %106 = vadd.xlane.f32.xlu0 %v105
  %v107 = vpop.xlane.xlu0 %106
  %vm108 = vcmp.gt.f32.partialorder %v107, 0.0
  %v109 = vrcp.pop %v107
  %v110 = vsel %vm108, %v109, 0.0
  %v112 = vsel %vm104, %v92, 0
  %114 = vmatprep.subr.mxu0 0.0
  %115 = vmatpush1.msra.mxu0 %v97
  %116 = vmatprep.subr.mxu0 0.0
  %117 = vmatpush1.msra.mxu0 %v98
  %118 = vmatprep.subr.mxu0 0.0
  %119 = vmatpush1.msra.mxu0 0.0
  %120 = vmatprep.subr.mxu0 0.0
  %121 = vmatpush1.msra.mxu0 0.0
  %122 = vmatprep.subr.mxu0 0.0
  %123 = vmatpush1.msra.mxu0 0.0
  %124 = vmatprep.subr.mxu0 0.0
  %125 = vmatpush1.msra.mxu0 0.0
  %126 = vmatprep.subr.mxu0 0.0
  %127 = vmatpush1.msra.mxu0 0.0
  %128 = vmatprep.subr.mxu0 0.0
  %129 = vmatpush1.msra.mxu0 0.0
  %130 = vmatprep.subr.mxu0 0.0
  %131 = vmatpush1.msra.mxu0 0.0
  %132 = vmatprep.subr.mxu0 0.0
  %133 = vmatpush1.msra.mxu0 0.0
  %134 = vmatprep.subr.mxu0 0.0
  %135 = vmatpush1.msra.mxu0 0.0
  %136 = vmatprep.subr.mxu0 0.0
  %137 = vmatpush1.msra.mxu0 0.0
  %138 = vmatprep.subr.mxu0 0.0
  %139 = vmatpush1.msra.mxu0 0.0
  %140 = vmatprep.subr.mxu0 0.0
  %141 = vmatpush1.msra.mxu0 0.0
  %142 = vmatprep.subr.mxu0 0.0
  %143 = vmatpush1.msra.mxu0 0.0
  %144 = vmatprep.subr.mxu0 0.0
  %145 = vmatpush1.msra.mxu0 0.0
  %146 = vmatprep.subr.mxu0 0.0
  %147 = vmatpush1.msra.mxu0 0.0
  %148 = vmatprep.subr.mxu0 0.0
  %149 = vmatpush1.msra.mxu0 0.0
  %150 = vmatprep.subr.mxu0 0.0
  %151 = vmatpush1.msra.mxu0 0.0
  %152 = vmatprep.subr.mxu0 0.0
  %153 = vmatpush1.msra.mxu0 0.0
  %154 = vmatprep.subr.mxu0 0.0
  %155 = vmatpush1.msra.mxu0 0.0
  %156 = vmatprep.subr.mxu0 0.0
  %157 = vmatpush1.msra.mxu0 0.0
  %158 = vmatprep.subr.mxu0 0.0
  %159 = vmatpush1.msra.mxu0 0.0
  %160 = vmatprep.subr.mxu0 0.0
  %161 = vmatpush1.msra.mxu0 0.0
  %162 = vmatprep.subr.mxu0 0.0
  %163 = vmatpush1.msra.mxu0 0.0
  %164 = vmatprep.subr.mxu0 0.0
  %165 = vmatpush1.msra.mxu0 0.0
  %166 = vmatprep.subr.mxu0 0.0
  %167 = vmatpush1.msra.mxu0 0.0
  %168 = vmatprep.subr.mxu0 0.0
  %169 = vmatpush1.msra.mxu0 0.0
  %170 = vmatprep.subr.mxu0 0.0
  %171 = vmatpush1.msra.mxu0 0.0
  %172 = vmatprep.subr.mxu0 0.0
  %173 = vmatpush1.msra.mxu0 0.0
  %174 = vmatprep.subr.mxu0 0.0
  %175 = vmatpush1.msra.mxu0 0.0
  %176 = vmatprep.subr.mxu0 0.0
  %177 = vmatpush1.msra.mxu0 0.0
  %178 = vmatprep.mubr.f32.mxu0 0.0
  %179 = vmatmul.mubr.f32.gmra.mrb[0].mxu0 %v112
  %v180 = vpop.f32.mrb[0].mxu0
  %v181 = vadd.f32 0.0, %v180
  %v182 = vpop.f32.mrb[0].mxu0
  %183 = vdwg.mxu0
  %v184 = vmul.f32 %v181, %v110
  %vm185 = vcmask 64512
  %v187 = vsel %vm185, %v99, 0
  %189 = vmatprep.subr.mxu0 0.0
  %190 = vmatpush1.msra.mxu0 %v102
  %191 = vmatprep.subr.mxu0 0.0
  %192 = vmatpush1.msra.mxu0 0.0
  %193 = vmatprep.subr.mxu0 0.0
  %194 = vmatpush1.msra.mxu0 0.0
  %195 = vmatprep.subr.mxu0 0.0
  %196 = vmatpush1.msra.mxu0 0.0
  %197 = vmatprep.subr.mxu0 0.0
  %198 = vmatpush1.msra.mxu0 0.0
  %199 = vmatprep.subr.mxu0 0.0
  %200 = vmatpush1.msra.mxu0 0.0
  %201 = vmatprep.subr.mxu0 0.0
  %202 = vmatpush1.msra.mxu0 0.0
  %203 = vmatprep.subr.mxu0 0.0
  %204 = vmatpush1.msra.mxu0 0.0
  %205 = vmatprep.subr.mxu0 0.0
  %206 = vmatpush1.msra.mxu0 0.0
  %207 = vmatprep.subr.mxu0 0.0
  %208 = vmatpush1.msra.mxu0 0.0
  %209 = vmatprep.subr.mxu0 0.0
  %210 = vmatpush1.msra.mxu0 0.0
  %211 = vmatprep.subr.mxu0 0.0
  %212 = vmatpush1.msra.mxu0 0.0
  %213 = vmatprep.subr.mxu0 0.0
  %214 = vmatpush1.msra.mxu0 0.0
  %215 = vmatprep.subr.mxu0 0.0
  %216 = vmatpush1.msra.mxu0 0.0
  %217 = vmatprep.subr.mxu0 0.0
  %218 = vmatpush1.msra.mxu0 0.0
  %219 = vmatprep.subr.mxu0 0.0
  %220 = vmatpush1.msra.mxu0 0.0
  %221 = vmatprep.subr.mxu0 0.0
  %222 = vmatpush1.msra.mxu0 0.0
  %223 = vmatprep.subr.mxu0 0.0
  %224 = vmatpush1.msra.mxu0 0.0
  %225 = vmatprep.subr.mxu0 0.0
  %226 = vmatpush1.msra.mxu0 0.0
  %227 = vmatprep.subr.mxu0 0.0
  %228 = vmatpush1.msra.mxu0 0.0
  %229 = vmatprep.subr.mxu0 0.0
  %230 = vmatpush1.msra.mxu0 0.0
  %231 = vmatprep.subr.mxu0 0.0
  %232 = vmatpush1.msra.mxu0 0.0
  %233 = vmatprep.subr.mxu0 0.0
  %234 = vmatpush1.msra.mxu0 0.0
  %235 = vmatprep.subr.mxu0 0.0
  %236 = vmatpush1.msra.mxu0 0.0
  %237 = vmatprep.subr.mxu0 0.0
  %238 = vmatpush1.msra.mxu0 0.0
  %239 = vmatprep.subr.mxu0 0.0
  %240 = vmatpush1.msra.mxu0 0.0
  %241 = vmatprep.subr.mxu0 0.0
  %242 = vmatpush1.msra.mxu0 0.0
  %243 = vmatprep.subr.mxu0 0.0
  %244 = vmatpush1.msra.mxu0 0.0
  %245 = vmatprep.subr.mxu0 0.0
  %246 = vmatpush1.msra.mxu0 0.0
  %247 = vmatprep.subr.mxu0 0.0
  %248 = vmatpush1.msra.mxu0 0.0
  %249 = vmatprep.subr.mxu0 0.0
  %250 = vmatpush1.msra.mxu0 0.0
  %251 = vmatprep.subr.mxu0 0.0
  %252 = vmatpush1.msra.mxu0 0.0
  %253 = vmatprep.mubr.f32.mxu0 0.0
  %254 = vmatmul.mubr.f32.gmra.mrb[0].mxu0 %v187
  %v255 = vpop.f32.mrb[0].mxu0
  %v256 = vadd.f32 0.0, %v255
  %v257 = vpop.f32.mrb[0].mxu0
  %258 = vdwg.mxu0
  %v260 = vsel %vm104, %v184, 0
  %262 = vmatprep.subr.mxu0 0.0
  %263 = vmatpush1.msra.mxu0 %v100
  %264 = vmatprep.subr.mxu0 0.0
  %265 = vmatpush1.msra.mxu0 %v101
  %266 = vmatprep.subr.mxu0 0.0
  %267 = vmatpush1.msra.mxu0 0.0
  %268 = vmatprep.subr.mxu0 0.0
  %269 = vmatpush1.msra.mxu0 0.0
  %270 = vmatprep.subr.mxu0 0.0
  %271 = vmatpush1.msra.mxu0 0.0
  %272 = vmatprep.subr.mxu0 0.0
  %273 = vmatpush1.msra.mxu0 0.0
  %274 = vmatprep.subr.mxu0 0.0
  %275 = vmatpush1.msra.mxu0 0.0
  %276 = vmatprep.subr.mxu0 0.0
  %277 = vmatpush1.msra.mxu0 0.0
  %278 = vmatprep.subr.mxu0 0.0
  %279 = vmatpush1.msra.mxu0 0.0
  %280 = vmatprep.subr.mxu0 0.0
  %281 = vmatpush1.msra.mxu0 0.0
  %282 = vmatprep.subr.mxu0 0.0
  %283 = vmatpush1.msra.mxu0 0.0
  %284 = vmatprep.subr.mxu0 0.0
  %285 = vmatpush1.msra.mxu0 0.0
  %286 = vmatprep.subr.mxu0 0.0
  %287 = vmatpush1.msra.mxu0 0.0
  %288 = vmatprep.subr.mxu0 0.0
  %289 = vmatpush1.msra.mxu0 0.0
  %290 = vmatprep.subr.mxu0 0.0
  %291 = vmatpush1.msra.mxu0 0.0
  %292 = vmatprep.subr.mxu0 0.0
  %293 = vmatpush1.msra.mxu0 0.0
  %294 = vmatprep.subr.mxu0 0.0
  %295 = vmatpush1.msra.mxu0 0.0
  %296 = vmatprep.subr.mxu0 0.0
  %297 = vmatpush1.msra.mxu0 0.0
  %298 = vmatprep.subr.mxu0 0.0
  %299 = vmatpush1.msra.mxu0 0.0
  %300 = vmatprep.subr.mxu0 0.0
  %301 = vmatpush1.msra.mxu0 0.0
  %302 = vmatprep.subr.mxu0 0.0
  %303 = vmatpush1.msra.mxu0 0.0
  %304 = vmatprep.subr.mxu0 0.0
  %305 = vmatpush1.msra.mxu0 0.0
  %306 = vmatprep.subr.mxu0 0.0
  %307 = vmatpush1.msra.mxu0 0.0
  %308 = vmatprep.subr.mxu0 0.0
  %309 = vmatpush1.msra.mxu0 0.0
  %310 = vmatprep.subr.mxu0 0.0
  %311 = vmatpush1.msra.mxu0 0.0
  %312 = vmatprep.subr.mxu0 0.0
  %313 = vmatpush1.msra.mxu0 0.0
  %314 = vmatprep.subr.mxu0 0.0
  %315 = vmatpush1.msra.mxu0 0.0
  %316 = vmatprep.subr.mxu0 0.0
  %317 = vmatpush1.msra.mxu0 0.0
  %318 = vmatprep.subr.mxu0 0.0
  %319 = vmatpush1.msra.mxu0 0.0
  %320 = vmatprep.subr.mxu0 0.0
  %321 = vmatpush1.msra.mxu0 0.0
  %322 = vmatprep.subr.mxu0 0.0
  %323 = vmatpush1.msra.mxu0 0.0
  %324 = vmatprep.subr.mxu0 0.0
  %325 = vmatpush1.msra.mxu0 0.0
  %326 = vmatprep.mubr.f32.mxu0 0.0
  %327 = vmatmul.mubr.f32.gmra.mrb[0].mxu0 %v260
  %v328 = vpop.f32.mrb[0].mxu0
  %v329 = vadd.f32 %v256, %v328
  %v330 = vpop.f32.mrb[0].mxu0
  %331 = vdwg.mxu0
  %v333 = vlaneseq
  %v334 = vshrl.u32 %v333, 7
  %v335 = vsub.s32 0, %v334
  %v336 = vrot.slane %v103, %v335
  %v338 = vadd.f32 %v329, %v336
  %v339 = vmax.f32 %v338, 0.0
  %v340 = vld [vmem:[%s8] sm:$0xff]
  %v341 = vld [vmem:[%s9] sm:$0xff]
  %v342 = vld [vmem:[%s9 + $0x8] sm:$0xff]
  %v343 = vld [vmem:[%s10] sm:$0x1]
  %v344 = vsel %vm185, %v95, 0.0
  %345 = vadd.xlane.f32.xlu0 %v344
  %v346 = vpop.xlane.xlu0 %345
  %v347 = vsel %vm185, %v96, 0.0
  %348 = vadd.xlane.f32.xlu0 %v347
  %v349 = vpop.xlane.xlu0 %348
  %vm350 = vcmp.gt.f32.partialorder %v346, 0.0
  %vm351 = vcmp.gt.f32.partialorder %v349, 0.0
  %v352 = vrcp.pop %v346
  %v353 = vrcp.pop %v349
  %v354 = vsel %vm350, %v352, 0.0
  %v355 = vsel %vm351, %v353, 0.0
  %v357 = vsel %vm185, %v95, 0
  %v360 = vsel %vm185, %v96, 0
  %362 = vmatprep.subr.mxu0 0.0
  %363 = vmatpush1.msra.mxu0 %v99
  %364 = vmatprep.subr.mxu0 0.0
  %365 = vmatpush1.msra.mxu0 0.0
  %366 = vmatprep.subr.mxu0 0.0
  %367 = vmatpush1.msra.mxu0 0.0
  %368 = vmatprep.subr.mxu0 0.0
  %369 = vmatpush1.msra.mxu0 0.0
  %370 = vmatprep.subr.mxu0 0.0
  %371 = vmatpush1.msra.mxu0 0.0
  %372 = vmatprep.subr.mxu0 0.0
  %373 = vmatpush1.msra.mxu0 0.0
  %374 = vmatprep.subr.mxu0 0.0
  %375 = vmatpush1.msra.mxu0 0.0
  %376 = vmatprep.subr.mxu0 0.0
  %377 = vmatpush1.msra.mxu0 0.0
  %378 = vmatprep.subr.mxu0 0.0
  %379 = vmatpush1.msra.mxu0 0.0
  %380 = vmatprep.subr.mxu0 0.0
  %381 = vmatpush1.msra.mxu0 0.0
  %382 = vmatprep.subr.mxu0 0.0
  %383 = vmatpush1.msra.mxu0 0.0
  %384 = vmatprep.subr.mxu0 0.0
  %385 = vmatpush1.msra.mxu0 0.0
  %386 = vmatprep.subr.mxu0 0.0
  %387 = vmatpush1.msra.mxu0 0.0
  %388 = vmatprep.subr.mxu0 0.0
  %389 = vmatpush1.msra.mxu0 0.0
  %390 = vmatprep.subr.mxu0 0.0
  %391 = vmatpush1.msra.mxu0 0.0
  %392 = vmatprep.subr.mxu0 0.0
  %393 = vmatpush1.msra.mxu0 0.0
  %394 = vmatprep.subr.mxu0 0.0
  %395 = vmatpush1.msra.mxu0 0.0
  %396 = vmatprep.subr.mxu0 0.0
  %397 = vmatpush1.msra.mxu0 0.0
  %398 = vmatprep.subr.mxu0 0.0
  %399 = vmatpush1.msra.mxu0 0.0
  %400 = vmatprep.subr.mxu0 0.0
  %401 = vmatpush1.msra.mxu0 0.0
  %402 = vmatprep.subr.mxu0 0.0
  %403 = vmatpush1.msra.mxu0 0.0
  %404 = vmatprep.subr.mxu0 0.0
  %405 = vmatpush1.msra.mxu0 0.0
  %406 = vmatprep.subr.mxu0 0.0
  %407 = vmatpush1.msra.mxu0 0.0
  %408 = vmatprep.subr.mxu0 0.0
  %409 = vmatpush1.msra.mxu0 0.0
  %410 = vmatprep.subr.mxu0 0.0
  %411 = vmatpush1.msra.mxu0 0.0
  %412 = vmatprep.subr.mxu0 0.0
  %413 = vmatpush1.msra.mxu0 0.0
  %414 = vmatprep.subr.mxu0 0.0
  %415 = vmatpush1.msra.mxu0 0.0
  %416 = vmatprep.subr.mxu0 0.0
  %417 = vmatpush1.msra.mxu0 0.0
  %418 = vmatprep.subr.mxu0 0.0
  %419 = vmatpush1.msra.mxu0 0.0
  %420 = vmatprep.subr.mxu0 0.0
  %421 = vmatpush1.msra.mxu0 0.0
  %422 = vmatprep.subr.mxu0 0.0
  %423 = vmatpush1.msra.mxu0 0.0
  %424 = vmatprep.subr.mxu0 0.0
  %425 = vmatpush1.msra.mxu0 0.0
  %426 = vmatprep.mubr.f32.mxu0 0.0
  %427 = vmatmul.mubr.f32.gmra.mrb[0].mxu0 %v357
  %v428 = vpop.f32.mrb[0].mxu0
  %v429 = vadd.f32 0.0, %v428
  %v430 = vpop.f32.mrb[0].mxu0
  %431 = vmatprep.mubr.f32.mxu0 0.0
  %432 = vmatmul.mubr.f32.gmra.mrb[0].mxu0 %v360
  %v433 = vpop.f32.mrb[0].mxu0
  %v434 = vadd.f32 0.0, %v433
  %v435 = vpop.f32.mrb[0].mxu0
  %436 = vdwg.mxu0
  %v437 = vmul.f32 %v429, %v354
  %v438 = vmul.f32 %v434, %v355
  %v440 = vsel %vm104, %v97, 0
  %v443 = vsel %vm104, %v98, 0
  %445 = vmatprep.subr.mxu0 0.0
  %446 = vmatpush1.msra.mxu0 %v341
  %447 = vmatprep.subr.mxu0 0.0
  %448 = vmatpush1.msra.mxu0 %v342
  %449 = vmatprep.subr.mxu0 0.0
  %450 = vmatpush1.msra.mxu0 0.0
  %451 = vmatprep.subr.mxu0 0.0
  %452 = vmatpush1.msra.mxu0 0.0
  %453 = vmatprep.subr.mxu0 0.0
  %454 = vmatpush1.msra.mxu0 0.0
  %455 = vmatprep.subr.mxu0 0.0
  %456 = vmatpush1.msra.mxu0 0.0
  %457 = vmatprep.subr.mxu0 0.0
  %458 = vmatpush1.msra.mxu0 0.0
  %459 = vmatprep.subr.mxu0 0.0
  %460 = vmatpush1.msra.mxu0 0.0
  %461 = vmatprep.subr.mxu0 0.0
  %462 = vmatpush1.msra.mxu0 0.0
  %463 = vmatprep.subr.mxu0 0.0
  %464 = vmatpush1.msra.mxu0 0.0
  %465 = vmatprep.subr.mxu0 0.0
  %466 = vmatpush1.msra.mxu0 0.0
  %467 = vmatprep.subr.mxu0 0.0
  %468 = vmatpush1.msra.mxu0 0.0
  %469 = vmatprep.subr.mxu0 0.0
  %470 = vmatpush1.msra.mxu0 0.0
  %471 = vmatprep.subr.mxu0 0.0
  %472 = vmatpush1.msra.mxu0 0.0
  %473 = vmatprep.subr.mxu0 0.0
  %474 = vmatpush1.msra.mxu0 0.0
  %475 = vmatprep.subr.mxu0 0.0
  %476 = vmatpush1.msra.mxu0 0.0
  %477 = vmatprep.subr.mxu0 0.0
  %478 = vmatpush1.msra.mxu0 0.0
  %479 = vmatprep.subr.mxu0 0.0
  %480 = vmatpush1.msra.mxu0 0.0
  %481 = vmatprep.subr.mxu0 0.0
  %482 = vmatpush1.msra.mxu0 0.0
  %483 = vmatprep.subr.mxu0 0.0
  %484 = vmatpush1.msra.mxu0 0.0
  %485 = vmatprep.subr.mxu0 0.0
  %486 = vmatpush1.msra.mxu0 0.0
  %487 = vmatprep.subr.mxu0 0.0
  %488 = vmatpush1.msra.mxu0 0.0
  %489 = vmatprep.subr.mxu0 0.0
  %490 = vmatpush1.msra.mxu0 0.0
  %491 = vmatprep.subr.mxu0 0.0
  %492 = vmatpush1.msra.mxu0 0.0
  %493 = vmatprep.subr.mxu0 0.0
  %494 = vmatpush1.msra.mxu0 0.0
  %495 = vmatprep.subr.mxu0 0.0
  %496 = vmatpush1.msra.mxu0 0.0
  %497 = vmatprep.subr.mxu0 0.0
  %498 = vmatpush1.msra.mxu0 0.0
  %499 = vmatprep.subr.mxu0 0.0
  %500 = vmatpush1.msra.mxu0 0.0
  %501 = vmatprep.subr.mxu0 0.0
  %502 = vmatpush1.msra.mxu0 0.0
  %503 = vmatprep.subr.mxu0 0.0
  %504 = vmatpush1.msra.mxu0 0.0
  %505 = vmatprep.subr.mxu0 0.0
  %506 = vmatpush1.msra.mxu0 0.0
  %507 = vmatprep.subr.mxu0 0.0
  %508 = vmatpush1.msra.mxu0 0.0
  %509 = vmatprep.mubr.f32.mxu0 0.0
  %510 = vmatmul.mubr.f32.gmra.mrb[0].mxu0 %v440
  %v511 = vpop.f32.mrb[0].mxu0
  %v512 = vadd.f32 0.0, %v511
  %v513 = vpop.f32.mrb[0].mxu0
  %514 = vmatprep.mubr.f32.mxu0 0.0
  %515 = vmatmul.mubr.f32.gmra.mrb[0].mxu0 %v443
  %v516 = vpop.f32.mrb[0].mxu0
  %v517 = vadd.f32 0.0, %v516
  %v518 = vpop.f32.mrb[0].mxu0
  %519 = vdwg.mxu0
  %v521 = vsel %vm185, %v437, 0
  %v524 = vsel %vm185, %v438, 0
  %526 = vmatprep.subr.mxu0 0.0
  %527 = vmatpush1.msra.mxu0 %v340
  %528 = vmatprep.subr.mxu0 0.0
  %529 = vmatpush1.msra.mxu0 0.0
  %530 = vmatprep.subr.mxu0 0.0
  %531 = vmatpush1.msra.mxu0 0.0
  %532 = vmatprep.subr.mxu0 0.0
  %533 = vmatpush1.msra.mxu0 0.0
  %534 = vmatprep.subr.mxu0 0.0
  %535 = vmatpush1.msra.mxu0 0.0
  %536 = vmatprep.subr.mxu0 0.0
  %537 = vmatpush1.msra.mxu0 0.0
  %538 = vmatprep.subr.mxu0 0.0
  %539 = vmatpush1.msra.mxu0 0.0
  %540 = vmatprep.subr.mxu0 0.0
  %541 = vmatpush1.msra.mxu0 0.0
  %542 = vmatprep.subr.mxu0 0.0
  %543 = vmatpush1.msra.mxu0 0.0
  %544 = vmatprep.subr.mxu0 0.0
  %545 = vmatpush1.msra.mxu0 0.0
  %546 = vmatprep.subr.mxu0 0.0
  %547 = vmatpush1.msra.mxu0 0.0
  %548 = vmatprep.subr.mxu0 0.0
  %549 = vmatpush1.msra.mxu0 0.0
  %550 = vmatprep.subr.mxu0 0.0
  %551 = vmatpush1.msra.mxu0 0.0
  %552 = vmatprep.subr.mxu0 0.0
  %553 = vmatpush1.msra.mxu0 0.0
  %554 = vmatprep.subr.mxu0 0.0
  %555 = vmatpush1.msra.mxu0 0.0
  %556 = vmatprep.subr.mxu0 0.0
  %557 = vmatpush1.msra.mxu0 0.0
  %558 = vmatprep.subr.mxu0 0.0
  %559 = vmatpush1.msra.mxu0 0.0
  %560 = vmatprep.subr.mxu0 0.0
  %561 = vmatpush1.msra.mxu0 0.0
  %562 = vmatprep.subr.mxu0 0.0
  %563 = vmatpush1.msra.mxu0 0.0
  %564 = vmatprep.subr.mxu0 0.0
  %565 = vmatpush1.msra.mxu0 0.0
  %566 = vmatprep.subr.mxu0 0.0
  %567 = vmatpush1.msra.mxu0 0.0
  %568 = vmatprep.subr.mxu0 0.0
  %569 = vmatpush1.msra.mxu0 0.0
  %570 = vmatprep.subr.mxu0 0.0
  %571 = vmatpush1.msra.mxu0 0.0
  %572 = vmatprep.subr.mxu0 0.0
  %573 = vmatpush1.msra.mxu0 0.0
  %574 = vmatprep.subr.mxu0 0.0
  %575 = vmatpush1.msra.mxu0 0.0
  %576 = vmatprep.subr.mxu0 0.0
  %577 = vmatpush1.msra.mxu0 0.0
  %578 = vmatprep.subr.mxu0 0.0
  %579 = vmatpush1.msra.mxu0 0.0
  %580 = vmatprep.subr.mxu0 0.0
  %581 = vmatpush1.msra.mxu0 0.0
  %582 = vmatprep.subr.mxu0 0.0
  %583 = vmatpush1.msra.mxu0 0.0
  %584 = vmatprep.subr.mxu0 0.0
  %585 = vmatpush1.msra.mxu0 0.0
  %586 = vmatprep.subr.mxu0 0.0
  %587 = vmatpush1.msra.mxu0 0.0
  %588 = vmatprep.subr.mxu0 0.0
  %589 = vmatpush1.msra.mxu0 0.0
  %590 = vmatprep.mubr.f32.mxu0 0.0
  %591 = vmatmul.mubr.f32.gmra.mrb[0].mxu0 %v521
  %v592 = vpop.f32.mrb[0].mxu0
  %v593 = vadd.f32 %v512, %v592
  %v594 = vpop.f32.mrb[0].mxu0
  %595 = vmatprep.mubr.f32.mxu0 0.0
  %596 = vmatmul.mubr.f32.gmra.mrb[0].mxu0 %v524
  %v597 = vpop.f32.mrb[0].mxu0
  %v598 = vadd.f32 %v517, %v597
  %v599 = vpop.f32.mrb[0].mxu0
  %600 = vdwg.mxu0
  %v602 = vlaneseq
  %v603 = vshrl.u32 %v602, 7
  %v604 = vsub.s32 0, %v603
  %v605 = vrot.slane %v343, %v604
  %v607 = vadd.f32 %v593, %v605
  %v608 = vadd.f32 %v598, %v605
  %v609 = vmax.f32 %v607, 0.0
  %v610 = vmax.f32 %v608, 0.0
  %v611 = vld [vmem:[%s11] sm:$0xff]
  %v612 = vld [vmem:[%s11 + $0x8] sm:$0xff]
  %v613 = vld [vmem:[%s11 + $0x10] sm:$0xff]
  %v614 = vld [vmem:[%s11 + $0x18] sm:$0xff]
  %v615 = vld [vmem:[%s12] sm:$0xff]
  %v616 = vld [vmem:[%s12 + $0x8] sm:$0xff]
  %v617 = vld [vmem:[%s12 + $0x10] sm:$0xff]
  %v618 = vld [vmem:[%s12 + $0x18] sm:$0xff]
  %v619 = vld [vmem:[%s13] sm:$0xf]
  %v620 = vld [vmem:[%s14] sm:$0xf]
  %v621 = vld [vmem:[%s15] sm:$0x1]
  %vm622 = vcmask 261120
  %v624 = vsel %vm622, %v609, 0
  %v627 = vsel %vm622, %v610, 0
  %629 = vmatprep.subr.mxu0 0.0
  %630 = vmatpush1.msra.mxu0 %v611
  %631 = vmatprep.subr.mxu0 0.0
  %632 = vmatpush1.msra.mxu0 %v612
  %633 = vmatprep.subr.mxu0 0.0
  %634 = vmatpush1.msra.mxu0 %v613
  %635 = vmatprep.subr.mxu0 0.0
  %636 = vmatpush1.msra.mxu0 %v614
  %637 = vmatprep.subr.mxu0 0.0
  %638 = vmatpush1.msra.mxu0 0.0
  %639 = vmatprep.subr.mxu0 0.0
  %640 = vmatpush1.msra.mxu0 0.0
  %641 = vmatprep.subr.mxu0 0.0
  %642 = vmatpush1.msra.mxu0 0.0
  %643 = vmatprep.subr.mxu0 0.0
  %644 = vmatpush1.msra.mxu0 0.0
  %645 = vmatprep.subr.mxu0 0.0
  %646 = vmatpush1.msra.mxu0 0.0
  %647 = vmatprep.subr.mxu0 0.0
  %648 = vmatpush1.msra.mxu0 0.0
  %649 = vmatprep.subr.mxu0 0.0
  %650 = vmatpush1.msra.mxu0 0.0
  %651 = vmatprep.subr.mxu0 0.0
  %652 = vmatpush1.msra.mxu0 0.0
  %653 = vmatprep.subr.mxu0 0.0
  %654 = vmatpush1.msra.mxu0 0.0
  %655 = vmatprep.subr.mxu0 0.0
  %656 = vmatpush1.msra.mxu0 0.0
  %657 = vmatprep.subr.mxu0 0.0
  %658 = vmatpush1.msra.mxu0 0.0
  %659 = vmatprep.subr.mxu0 0.0
  %660 = vmatpush1.msra.mxu0 0.0
  %661 = vmatprep.subr.mxu0 0.0
  %662 = vmatpush1.msra.mxu0 0.0
  %663 = vmatprep.subr.mxu0 0.0
  %664 = vmatpush1.msra.mxu0 0.0
  %665 = vmatprep.subr.mxu0 0.0
  %666 = vmatpush1.msra.mxu0 0.0
  %667 = vmatprep.subr.mxu0 0.0
  %668 = vmatpush1.msra.mxu0 0.0
  %669 = vmatprep.subr.mxu0 0.0
  %670 = vmatpush1.msra.mxu0 0.0
  %671 = vmatprep.subr.mxu0 0.0
  %672 = vmatpush1.msra.mxu0 0.0
  %673 = vmatprep.subr.mxu0 0.0
  %674 = vmatpush1.msra.mxu0 0.0
  %675 = vmatprep.subr.mxu0 0.0
  %676 = vmatpush1.msra.mxu0 0.0
  %677 = vmatprep.subr.mxu0 0.0
  %678 = vmatpush1.msra.mxu0 0.0
  %679 = vmatprep.subr.mxu0 0.0
  %680 = vmatpush1.msra.mxu0 0.0
  %681 = vmatprep.subr.mxu0 0.0
  %682 = vmatpush1.msra.mxu0 0.0
  %683 = vmatprep.subr.mxu0 0.0
  %684 = vmatpush1.msra.mxu0 0.0
  %685 = vmatprep.subr.mxu0 0.0
  %686 = vmatpush1.msra.mxu0 0.0
  %687 = vmatprep.subr.mxu0 0.0
  %688 = vmatpush1.msra.mxu0 0.0
  %689 = vmatprep.subr.mxu0 0.0
  %690 = vmatpush1.msra.mxu0 0.0
  %691 = vmatprep.subr.mxu0 0.0
  %692 = vmatpush1.msra.mxu0 0.0
  %693 = vmatprep.mubr.f32.mxu0 0.0
  %694 = vmatmul.mubr.f32.gmra.mrb[0].mxu0 %v624
  %v695 = vpop.f32.mrb[0].mxu0
  %v696 = vadd.f32 0.0, %v695
  %v697 = vpop.f32.mrb[0].mxu0
  %698 = vmatprep.mubr.f32.mxu0 0.0
  %699 = vmatmul.mubr.f32.gmra.mrb[0].mxu0 %v627
  %v700 = vpop.f32.mrb[0].mxu0
  %v701 = vadd.f32 0.0, %v700
  %v702 = vpop.f32.mrb[0].mxu0
  %703 = vdwg.mxu0
  %v705 = vsel %vm622, %v339, 0
  %707 = vmatprep.subr.mxu0 0.0
  %708 = vmatpush1.msra.mxu0 %v615
  %709 = vmatprep.subr.mxu0 0.0
  %710 = vmatpush1.msra.mxu0 %v616
  %711 = vmatprep.subr.mxu0 0.0
  %712 = vmatpush1.msra.mxu0 %v617
  %713 = vmatprep.subr.mxu0 0.0
  %714 = vmatpush1.msra.mxu0 %v618
  %715 = vmatprep.subr.mxu0 0.0
  %716 = vmatpush1.msra.mxu0 0.0
  %717 = vmatprep.subr.mxu0 0.0
  %718 = vmatpush1.msra.mxu0 0.0
  %719 = vmatprep.subr.mxu0 0.0
  %720 = vmatpush1.msra.mxu0 0.0
  %721 = vmatprep.subr.mxu0 0.0
  %722 = vmatpush1.msra.mxu0 0.0
  %723 = vmatprep.subr.mxu0 0.0
  %724 = vmatpush1.msra.mxu0 0.0
  %725 = vmatprep.subr.mxu0 0.0
  %726 = vmatpush1.msra.mxu0 0.0
  %727 = vmatprep.subr.mxu0 0.0
  %728 = vmatpush1.msra.mxu0 0.0
  %729 = vmatprep.subr.mxu0 0.0
  %730 = vmatpush1.msra.mxu0 0.0
  %731 = vmatprep.subr.mxu0 0.0
  %732 = vmatpush1.msra.mxu0 0.0
  %733 = vmatprep.subr.mxu0 0.0
  %734 = vmatpush1.msra.mxu0 0.0
  %735 = vmatprep.subr.mxu0 0.0
  %736 = vmatpush1.msra.mxu0 0.0
  %737 = vmatprep.subr.mxu0 0.0
  %738 = vmatpush1.msra.mxu0 0.0
  %739 = vmatprep.subr.mxu0 0.0
  %740 = vmatpush1.msra.mxu0 0.0
  %741 = vmatprep.subr.mxu0 0.0
  %742 = vmatpush1.msra.mxu0 0.0
  %743 = vmatprep.subr.mxu0 0.0
  %744 = vmatpush1.msra.mxu0 0.0
  %745 = vmatprep.subr.mxu0 0.0
  %746 = vmatpush1.msra.mxu0 0.0
  %747 = vmatprep.subr.mxu0 0.0
  %748 = vmatpush1.msra.mxu0 0.0
  %749 = vmatprep.subr.mxu0 0.0
  %750 = vmatpush1.msra.mxu0 0.0
  %751 = vmatprep.subr.mxu0 0.0
  %752 = vmatpush1.msra.mxu0 0.0
  %753 = vmatprep.subr.mxu0 0.0
  %754 = vmatpush1.msra.mxu0 0.0
  %755 = vmatprep.subr.mxu0 0.0
  %756 = vmatpush1.msra.mxu0 0.0
  %757 = vmatprep.subr.mxu0 0.0
  %758 = vmatpush1.msra.mxu0 0.0
  %759 = vmatprep.subr.mxu0 0.0
  %760 = vmatpush1.msra.mxu0 0.0
  %761 = vmatprep.subr.mxu0 0.0
  %762 = vmatpush1.msra.mxu0 0.0
  %763 = vmatprep.subr.mxu0 0.0
  %764 = vmatpush1.msra.mxu0 0.0
  %765 = vmatprep.subr.mxu0 0.0
  %766 = vmatpush1.msra.mxu0 0.0
  %767 = vmatprep.subr.mxu0 0.0
  %768 = vmatpush1.msra.mxu0 0.0
  %769 = vmatprep.subr.mxu0 0.0
  %770 = vmatpush1.msra.mxu0 0.0
  %771 = vmatprep.mubr.f32.mxu0 0.0
  %772 = vmatmul.mubr.f32.gmra.mrb[0].mxu0 %v705
  %v773 = vpop.f32.mrb[0].mxu0
  %v774 = vadd.f32 0.0, %v773
  %v775 = vpop.f32.mrb[0].mxu0
  %776 = vdwg.mxu0
  %777 = vmatprep.subr.mxu0 0.0
  %778 = vmatpush1.xpose.msra.mxu0 %v696
  %779 = vmatprep.subr.mxu0 0.0
  %780 = vmatpush1.xpose.msra.mxu0 %v701
  %781 = vmatprep.subr.mxu0 0.0
  %782 = vmatpush1.xpose.msra.mxu0 0.0
  %783 = vmatprep.subr.mxu0 0.0
  %784 = vmatpush1.xpose.msra.mxu0 0.0
  %785 = vmatprep.subr.mxu0 0.0
  %786 = vmatpush1.xpose.msra.mxu0 0.0
  %787 = vmatprep.subr.mxu0 0.0
  %788 = vmatpush1.xpose.msra.mxu0 0.0
  %789 = vmatprep.subr.mxu0 0.0
  %790 = vmatpush1.xpose.msra.mxu0 0.0
  %791 = vmatprep.subr.mxu0 0.0
  %792 = vmatpush1.xpose.msra.mxu0 0.0
  %793 = vmatprep.subr.mxu0 0.0
  %794 = vmatpush1.xpose.msra.mxu0 0.0
  %795 = vmatprep.subr.mxu0 0.0
  %796 = vmatpush1.xpose.msra.mxu0 0.0
  %797 = vmatprep.subr.mxu0 0.0
  %798 = vmatpush1.xpose.msra.mxu0 0.0
  %799 = vmatprep.subr.mxu0 0.0
  %800 = vmatpush1.xpose.msra.mxu0 0.0
  %801 = vmatprep.subr.mxu0 0.0
  %802 = vmatpush1.xpose.msra.mxu0 0.0
  %803 = vmatprep.subr.mxu0 0.0
  %804 = vmatpush1.xpose.msra.mxu0 0.0
  %805 = vmatprep.subr.mxu0 0.0
  %806 = vmatpush1.xpose.msra.mxu0 0.0
  %807 = vmatprep.subr.mxu0 0.0
  %808 = vmatpush1.xpose.msra.mxu0 0.0
  %809 = vmatprep.subr.mxu0 0.0
  %810 = vmatpush1.xpose.msra.mxu0 0.0
  %811 = vmatprep.subr.mxu0 0.0
  %812 = vmatpush1.xpose.msra.mxu0 0.0
  %813 = vmatprep.subr.mxu0 0.0
  %814 = vmatpush1.xpose.msra.mxu0 0.0
  %815 = vmatprep.subr.mxu0 0.0
  %816 = vmatpush1.xpose.msra.mxu0 0.0
  %817 = vmatprep.subr.mxu0 0.0
  %818 = vmatpush1.xpose.msra.mxu0 0.0
  %819 = vmatprep.subr.mxu0 0.0
  %820 = vmatpush1.xpose.msra.mxu0 0.0
  %821 = vmatprep.subr.mxu0 0.0
  %822 = vmatpush1.xpose.msra.mxu0 0.0
  %823 = vmatprep.subr.mxu0 0.0
  %824 = vmatpush1.xpose.msra.mxu0 0.0
  %825 = vmatprep.subr.mxu0 0.0
  %826 = vmatpush1.xpose.msra.mxu0 0.0
  %827 = vmatprep.subr.mxu0 0.0
  %828 = vmatpush1.xpose.msra.mxu0 0.0
  %829 = vmatprep.subr.mxu0 0.0
  %830 = vmatpush1.xpose.msra.mxu0 0.0
  %831 = vmatprep.subr.mxu0 0.0
  %832 = vmatpush1.xpose.msra.mxu0 0.0
  %833 = vmatprep.subr.mxu0 0.0
  %834 = vmatpush1.xpose.msra.mxu0 0.0
  %835 = vmatprep.subr.mxu0 0.0
  %836 = vmatpush1.xpose.msra.mxu0 0.0
  %837 = vmatprep.subr.mxu0 0.0
  %838 = vmatpush1.xpose.msra.mxu0 0.0
  %839 = vmatprep.subr.mxu0 0.0
  %840 = vmatpush1.xpose.msra.mxu0 0.0
  %841 = vmatprep.mubr.f32.mxu0 0.0
  %842 = vmatmul.mubr.f32.gmra.mrb[0].mxu0 %v619
  %v843 = vpop.f32.mrb[0].mxu0
  %v844 = vadd.f32 0.0, %v843
  %v845 = vpop.f32.mrb[0].mxu0
  %846 = vdwg.mxu0
  %847 = vmatprep.subr.mxu0 0.0
  %848 = vmatpush1.xpose.msra.mxu0 %v620
  %849 = vmatprep.subr.mxu0 0.0
  %850 = vmatpush1.xpose.msra.mxu0 0.0
  %851 = vmatprep.subr.mxu0 0.0
  %852 = vmatpush1.xpose.msra.mxu0 0.0
  %853 = vmatprep.subr.mxu0 0.0
  %854 = vmatpush1.xpose.msra.mxu0 0.0
  %855 = vmatprep.subr.mxu0 0.0
  %856 = vmatpush1.xpose.msra.mxu0 0.0
  %857 = vmatprep.subr.mxu0 0.0
  %858 = vmatpush1.xpose.msra.mxu0 0.0
  %859 = vmatprep.subr.mxu0 0.0
  %860 = vmatpush1.xpose.msra.mxu0 0.0
  %861 = vmatprep.subr.mxu0 0.0
  %862 = vmatpush1.xpose.msra.mxu0 0.0
  %863 = vmatprep.subr.mxu0 0.0
  %864 = vmatpush1.xpose.msra.mxu0 0.0
  %865 = vmatprep.subr.mxu0 0.0
  %866 = vmatpush1.xpose.msra.mxu0 0.0
  %867 = vmatprep.subr.mxu0 0.0
  %868 = vmatpush1.xpose.msra.mxu0 0.0
  %869 = vmatprep.subr.mxu0 0.0
  %870 = vmatpush1.xpose.msra.mxu0 0.0
  %871 = vmatprep.subr.mxu0 0.0
  %872 = vmatpush1.xpose.msra.mxu0 0.0
  %873 = vmatprep.subr.mxu0 0.0
  %874 = vmatpush1.xpose.msra.mxu0 0.0
  %875 = vmatprep.subr.mxu0 0.0
  %876 = vmatpush1.xpose.msra.mxu0 0.0
  %877 = vmatprep.subr.mxu0 0.0
  %878 = vmatpush1.xpose.msra.mxu0 0.0
  %879 = vmatprep.subr.mxu0 0.0
  %880 = vmatpush1.xpose.msra.mxu0 0.0
  %881 = vmatprep.subr.mxu0 0.0
  %882 = vmatpush1.xpose.msra.mxu0 0.0
  %883 = vmatprep.subr.mxu0 0.0
  %884 = vmatpush1.xpose.msra.mxu0 0.0
  %885 = vmatprep.subr.mxu0 0.0
  %886 = vmatpush1.xpose.msra.mxu0 0.0
  %887 = vmatprep.subr.mxu0 0.0
  %888 = vmatpush1.xpose.msra.mxu0 0.0
  %889 = vmatprep.subr.mxu0 0.0
  %890 = vmatpush1.xpose.msra.mxu0 0.0
  %891 = vmatprep.subr.mxu0 0.0
  %892 = vmatpush1.xpose.msra.mxu0 0.0
  %893 = vmatprep.subr.mxu0 0.0
  %894 = vmatpush1.xpose.msra.mxu0 0.0
  %895 = vmatprep.subr.mxu0 0.0
  %896 = vmatpush1.xpose.msra.mxu0 0.0
  %897 = vmatprep.subr.mxu0 0.0
  %898 = vmatpush1.xpose.msra.mxu0 0.0
  %899 = vmatprep.subr.mxu0 0.0
  %900 = vmatpush1.xpose.msra.mxu0 0.0
  %901 = vmatprep.subr.mxu0 0.0
  %902 = vmatpush1.xpose.msra.mxu0 0.0
  %903 = vmatprep.subr.mxu0 0.0
  %904 = vmatpush1.xpose.msra.mxu0 0.0
  %905 = vmatprep.subr.mxu0 0.0
  %906 = vmatpush1.xpose.msra.mxu0 0.0
  %907 = vmatprep.subr.mxu0 0.0
  %908 = vmatpush1.xpose.msra.mxu0 0.0
  %909 = vmatprep.subr.mxu0 0.0
  %910 = vmatpush1.xpose.msra.mxu0 0.0
  %911 = vmatprep.mubr.f32.mxu0 0.0
  %912 = vmatmul.mubr.f32.gmra.mrb[0].mxu0 %v774
  %v913 = vpop.f32.mrb[0].mxu0
  %v914 = vadd.f32 0.0, %v913
  %v915 = vpop.f32.mrb[0].mxu0
  %916 = vdwg.mxu0
  %918 = vset.pattern.permute.xlu0 0
  %919 = vperm.xlu0 %918, %v914
  %v920 = vpop.permute.xlu0 %919
  %v922 = vlaneseq
  %v923 = vshrl.u32 %v922, 7
  %v924 = vsub.s32 0, %v923
  %v925 = vrot.slane %v844, %v924
  %v926 = vadd.f32 %v920, %v925
  %vm927 = vcmp.gt.f32.partialorder %v926, 0.0
  %v928 = vmul.f32 %v926, 0.2
  %v929 = vsel %vm927, %v926, %v928
  %v930 = vsel %vm104, %v929, -inf
  %931 = vmax.xlane.f32.xlu0 %v930
  %v932 = vpop.xlane.xlu0 %931
  %v933 = vsub.f32 %v929, %v932
  %v934 = vmul.f32 %v933, 1.442695
  %v935 = vpow.pop %v934
  %v936 = vmul.f32 %v935, %v92
  %v937 = vsel %vm104, %v936, 0.0
  %938 = vadd.xlane.f32.xlu0 %v937
  %v939 = vpop.xlane.xlu0 %938
  %vm940 = vcmp.gt.f32.partialorder %v939, 0.0
  %v941 = vrcp.pop %v939
  %v942 = vsel %vm940, %v941, 0.0
  %v943 = vmul.f32 %v936, %v942
  %944 = vset.pattern.permute.xlu0 1
  %945 = vperm.xlu0 %944, %v914
  %v946 = vpop.permute.xlu0 %945
  %v948 = vlaneseq
  %v949 = vshrl.u32 %v948, 7
  %v950 = vsub.s32 1, %v949
  %v951 = vrot.slane %v844, %v950
  %v952 = vadd.f32 %v946, %v951
  %vm953 = vcmp.gt.f32.partialorder %v952, 0.0
  %v954 = vmul.f32 %v952, 0.2
  %v955 = vsel %vm953, %v952, %v954
  %v956 = vsel %vm104, %v955, -inf
  %957 = vmax.xlane.f32.xlu0 %v956
  %v958 = vpop.xlane.xlu0 %957
  %v959 = vsub.f32 %v955, %v958
  %v960 = vmul.f32 %v959, 1.442695
  %v961 = vpow.pop %v960
  %v962 = vmul.f32 %v961, %v92
  %v963 = vsel %vm104, %v962, 0.0
  %964 = vadd.xlane.f32.xlu0 %v963
  %v965 = vpop.xlane.xlu0 %964
  %vm966 = vcmp.gt.f32.partialorder %v965, 0.0
  %v967 = vrcp.pop %v965
  %v968 = vsel %vm966, %v967, 0.0
  %v969 = vmul.f32 %v962, %v968
  %970 = vset.pattern.permute.xlu0 2
  %971 = vperm.xlu0 %970, %v914
  %v972 = vpop.permute.xlu0 %971
  %v974 = vlaneseq
  %v975 = vshrl.u32 %v974, 7
  %v976 = vsub.s32 2, %v975
  %v977 = vrot.slane %v844, %v976
  %v978 = vadd.f32 %v972, %v977
  %vm979 = vcmp.gt.f32.partialorder %v978, 0.0
  %v980 = vmul.f32 %v978, 0.2
  %v981 = vsel %vm979, %v978, %v980
  %v982 = vsel %vm104, %v981, -inf
  %983 = vmax.xlane.f32.xlu0 %v982
  %v984 = vpop.xlane.xlu0 %983
  %v985 = vsub.f32 %v981, %v984
  %v986 = vmul.f32 %v985, 1.442695
  %v987 = vpow.pop %v986
  %v988 = vmul.f32 %v987, %v92
  %v989 = vsel %vm104, %v988, 0.0
  %990 = vadd.xlane.f32.xlu0 %v989
  %v991 = vpop.xlane.xlu0 %990
  %vm992 = vcmp.gt.f32.partialorder %v991, 0.0
  %v993 = vrcp.pop %v991
  %v994 = vsel %vm992, %v993, 0.0
  %v995 = vmul.f32 %v988, %v994
  %996 = vset.pattern.permute.xlu0 3
  %997 = vperm.xlu0 %996, %v914
  %v998 = vpop.permute.xlu0 %997
  %v1000 = vlaneseq
  %v1001 = vshrl.u32 %v1000, 7
  %v1002 = vsub.s32 3, %v1001
  %v1003 = vrot.slane %v844, %v1002
  %v1004 = vadd.f32 %v998, %v1003
  %vm1005 = vcmp.gt.f32.partialorder %v1004, 0.0
  %v1006 = vmul.f32 %v1004, 0.2
  %v1007 = vsel %vm1005, %v1004, %v1006
  %v1008 = vsel %vm104, %v1007, -inf
  %1009 = vmax.xlane.f32.xlu0 %v1008
  %v1010 = vpop.xlane.xlu0 %1009
  %v1011 = vsub.f32 %v1007, %v1010
  %v1012 = vmul.f32 %v1011, 1.442695
  %v1013 = vpow.pop %v1012
  %v1014 = vmul.f32 %v1013, %v92
  %v1015 = vsel %vm104, %v1014, 0.0
  %1016 = vadd.xlane.f32.xlu0 %v1015
  %v1017 = vpop.xlane.xlu0 %1016
  %vm1018 = vcmp.gt.f32.partialorder %v1017, 0.0
  %v1019 = vrcp.pop %v1017
  %v1020 = vsel %vm1018, %v1019, 0.0
  %v1021 = vmul.f32 %v1014, %v1020
  %1023 = vrot.lane.b32.xlu0 %v969, 16
  %v1024 = vpop.permute.xlu0 %1023
  %1027 = vrot.lane.b32.xlu0 %v995, 32
  %v1028 = vpop.permute.xlu0 %1027
  %1031 = vrot.lane.b32.xlu0 %v1021, 48
  %v1032 = vpop.permute.xlu0 %1031
  %v1034 = vsel %vm104, %v943, %v1024
  %v1035 = vsel %vm622, %v1034, %v1028
  %vm1036 = vcmask 392192
  %v1037 = vsel %vm1036, %v1035, %v1032
  %1040 = vrot.lane.b32.xlu0 %v696, 96
  %v1041 = vpop.permute.xlu0 %1040
  %1042 = vrot.lane.b32.xlu0 %v701, 96
  %v1043 = vpop.permute.xlu0 %1042
  %1046 = vrot.lane.b32.xlu0 %v696, 64
  %v1047 = vpop.permute.xlu0 %1046
  %1048 = vrot.lane.b32.xlu0 %v701, 64
  %v1049 = vpop.permute.xlu0 %1048
  %1052 = vrot.lane.b32.xlu0 %v696, 32
  %v1053 = vpop.permute.xlu0 %1052
  %1054 = vrot.lane.b32.xlu0 %v701, 32
  %v1055 = vpop.permute.xlu0 %1054
  %v1058 = vcombine.low %v696, %v1047
  %v1059 = vcombine.high %v696, %v1047
  %v1061 = vunpack.c.l.s4 1983009808
  %v1062 = vunpack.c.0.s8 %v1061
  %v1063 = vlaneseq
  %v1064 = vshrl.u32 %v1063, 7
  %v1065 = vsub.s32 %v1062, %v1064
  %v1066 = vrot.slane %v1058, %v1065
  %v1068 = vunpack.c.l.s4 1983009808
  %v1069 = vunpack.c.0.s8 %v1068
  %v1070 = vlaneseq
  %v1071 = vshrl.u32 %v1070, 7
  %v1072 = vsub.s32 %v1069, %v1071
  %v1073 = vrot.slane %v1059, %v1072
  %v1074 = vcombine.low %v1041, %v1053
  %v1075 = vcombine.high %v1041, %v1053
  %v1077 = vunpack.c.l.s4 1983009808
  %v1078 = vunpack.c.0.s8 %v1077
  %v1079 = vlaneseq
  %v1080 = vshrl.u32 %v1079, 7
  %v1081 = vsub.s32 %v1078, %v1080
  %v1082 = vrot.slane %v1074, %v1081
  %v1084 = vunpack.c.l.s4 1983009808
  %v1085 = vunpack.c.0.s8 %v1084
  %v1086 = vlaneseq
  %v1087 = vshrl.u32 %v1086, 7
  %v1088 = vsub.s32 %v1085, %v1087
  %v1089 = vrot.slane %v1075, %v1088
  %v1090 = vcombine.low %v1066, %v1082
  %v1091 = vcombine.high %v1066, %v1082
  %v1093 = vunpack.c.l.s4 1934713408
  %v1094 = vunpack.c.0.s8 %v1093
  %v1095 = vlaneseq
  %v1096 = vshrl.u32 %v1095, 7
  %v1097 = vsub.s32 %v1094, %v1096
  %v1098 = vrot.slane %v1090, %v1097
  %v1100 = vunpack.c.l.s4 1934713408
  %v1101 = vunpack.c.0.s8 %v1100
  %v1102 = vlaneseq
  %v1103 = vshrl.u32 %v1102, 7
  %v1104 = vsub.s32 %v1101, %v1103
  %v1105 = vrot.slane %v1091, %v1104
  %v1106 = vcombine.low %v1073, %v1089
  %v1107 = vcombine.high %v1073, %v1089
  %v1109 = vunpack.c.l.s4 1934713408
  %v1110 = vunpack.c.0.s8 %v1109
  %v1111 = vlaneseq
  %v1112 = vshrl.u32 %v1111, 7
  %v1113 = vsub.s32 %v1110, %v1112
  %v1114 = vrot.slane %v1106, %v1113
  %v1116 = vunpack.c.l.s4 1934713408
  %v1117 = vunpack.c.0.s8 %v1116
  %v1118 = vlaneseq
  %v1119 = vshrl.u32 %v1118, 7
  %v1120 = vsub.s32 %v1117, %v1119
  %v1121 = vrot.slane %v1107, %v1120
  %v1122 = vcombine.high %v1098, 0.0
  %v1123 = vcombine.high %v1105, 0.0
  %v1124 = vcombine.high %v1114, 0.0
  %v1125 = vcombine.high %v1121, 0.0
  %v1126 = vcombine.low %v701, %v1049
  %v1127 = vcombine.high %v701, %v1049
  %v1129 = vunpack.c.l.s4 1983009808
  %v1130 = vunpack.c.0.s8 %v1129
  %v1131 = vlaneseq
  %v1132 = vshrl.u32 %v1131, 7
  %v1133 = vsub.s32 %v1130, %v1132
  %v1134 = vrot.slane %v1126, %v1133
  %v1136 = vunpack.c.l.s4 1983009808
  %v1137 = vunpack.c.0.s8 %v1136
  %v1138 = vlaneseq
  %v1139 = vshrl.u32 %v1138, 7
  %v1140 = vsub.s32 %v1137, %v1139
  %v1141 = vrot.slane %v1127, %v1140
  %v1142 = vcombine.low %v1043, %v1055
  %v1143 = vcombine.high %v1043, %v1055
  %v1145 = vunpack.c.l.s4 1983009808
  %v1146 = vunpack.c.0.s8 %v1145
  %v1147 = vlaneseq
  %v1148 = vshrl.u32 %v1147, 7
  %v1149 = vsub.s32 %v1146, %v1148
  %v1150 = vrot.slane %v1142, %v1149
  %v1152 = vunpack.c.l.s4 1983009808
  %v1153 = vunpack.c.0.s8 %v1152
  %v1154 = vlaneseq
  %v1155 = vshrl.u32 %v1154, 7
  %v1156 = vsub.s32 %v1153, %v1155
  %v1157 = vrot.slane %v1143, %v1156
  %v1158 = vcombine.low %v1134, %v1150
  %v1159 = vcombine.high %v1134, %v1150
  %v1161 = vunpack.c.l.s4 1934713408
  %v1162 = vunpack.c.0.s8 %v1161
  %v1163 = vlaneseq
  %v1164 = vshrl.u32 %v1163, 7
  %v1165 = vsub.s32 %v1162, %v1164
  %v1166 = vrot.slane %v1158, %v1165
  %v1168 = vunpack.c.l.s4 1934713408
  %v1169 = vunpack.c.0.s8 %v1168
  %v1170 = vlaneseq
  %v1171 = vshrl.u32 %v1170, 7
  %v1172 = vsub.s32 %v1169, %v1171
  %v1173 = vrot.slane %v1159, %v1172
  %v1174 = vcombine.low %v1141, %v1157
  %v1175 = vcombine.high %v1141, %v1157
  %v1177 = vunpack.c.l.s4 1934713408
  %v1178 = vunpack.c.0.s8 %v1177
  %v1179 = vlaneseq
  %v1180 = vshrl.u32 %v1179, 7
  %v1181 = vsub.s32 %v1178, %v1180
  %v1182 = vrot.slane %v1174, %v1181
  %v1184 = vunpack.c.l.s4 1934713408
  %v1185 = vunpack.c.0.s8 %v1184
  %v1186 = vlaneseq
  %v1187 = vshrl.u32 %v1186, 7
  %v1188 = vsub.s32 %v1185, %v1187
  %v1189 = vrot.slane %v1175, %v1188
  %v1190 = vcombine.high %v1166, 0.0
  %v1191 = vcombine.high %v1173, 0.0
  %v1192 = vcombine.high %v1182, 0.0
  %v1193 = vcombine.high %v1189, 0.0
  %v1194 = vcombine.low %v1098, %v1105
  %v1196 = vunpack.c.l.s4 1983009808
  %v1197 = vunpack.c.0.s8 %v1196
  %v1198 = vlaneseq
  %v1199 = vshrl.u32 %v1198, 7
  %v1200 = vsub.s32 %v1197, %v1199
  %v1201 = vrot.slane %v1194, %v1200
  %v1202 = vcombine.low %v1122, %v1123
  %v1204 = vunpack.c.l.s4 1983009808
  %v1205 = vunpack.c.0.s8 %v1204
  %v1206 = vlaneseq
  %v1207 = vshrl.u32 %v1206, 7
  %v1208 = vsub.s32 %v1205, %v1207
  %v1209 = vrot.slane %v1202, %v1208
  %v1210 = vcombine.low %v1114, %v1121
  %v1212 = vunpack.c.l.s4 1983009808
  %v1213 = vunpack.c.0.s8 %v1212
  %v1214 = vlaneseq
  %v1215 = vshrl.u32 %v1214, 7
  %v1216 = vsub.s32 %v1213, %v1215
  %v1217 = vrot.slane %v1210, %v1216
  %v1218 = vcombine.low %v1124, %v1125
  %v1220 = vunpack.c.l.s4 1983009808
  %v1221 = vunpack.c.0.s8 %v1220
  %v1222 = vlaneseq
  %v1223 = vshrl.u32 %v1222, 7
  %v1224 = vsub.s32 %v1221, %v1223
  %v1225 = vrot.slane %v1218, %v1224
  %v1226 = vcombine.low %v1201, %v1209
  %v1227 = vcombine.high %v1201, %v1209
  %v1229 = vunpack.c.l.s4 1934713408
  %v1230 = vunpack.c.0.s8 %v1229
  %v1231 = vlaneseq
  %v1232 = vshrl.u32 %v1231, 7
  %v1233 = vsub.s32 %v1230, %v1232
  %v1234 = vrot.slane %v1226, %v1233
  %v1236 = vunpack.c.l.s4 1934713408
  %v1237 = vunpack.c.0.s8 %v1236
  %v1238 = vlaneseq
  %v1239 = vshrl.u32 %v1238, 7
  %v1240 = vsub.s32 %v1237, %v1239
  %v1241 = vrot.slane %v1227, %v1240
  %v1242 = vcombine.low %v1217, %v1225
  %v1243 = vcombine.high %v1217, %v1225
  %v1245 = vunpack.c.l.s4 1934713408
  %v1246 = vunpack.c.0.s8 %v1245
  %v1247 = vlaneseq
  %v1248 = vshrl.u32 %v1247, 7
  %v1249 = vsub.s32 %v1246, %v1248
  %v1250 = vrot.slane %v1242, %v1249
  %v1252 = vunpack.c.l.s4 1934713408
  %v1253 = vunpack.c.0.s8 %v1252
  %v1254 = vlaneseq
  %v1255 = vshrl.u32 %v1254, 7
  %v1256 = vsub.s32 %v1253, %v1255
  %v1257 = vrot.slane %v1243, %v1256
  %v1258 = vcombine.low %v1234, %v1250
  %v1259 = vcombine.high %v1234, %v1250
  %v1260 = vcombine.low %v1241, %v1257
  %v1261 = vcombine.high %v1241, %v1257
  %v1262 = vcombine.low %v1166, %v1173
  %v1264 = vunpack.c.l.s4 1983009808
  %v1265 = vunpack.c.0.s8 %v1264
  %v1266 = vlaneseq
  %v1267 = vshrl.u32 %v1266, 7
  %v1268 = vsub.s32 %v1265, %v1267
  %v1269 = vrot.slane %v1262, %v1268
  %v1270 = vcombine.low %v1190, %v1191
  %v1272 = vunpack.c.l.s4 1983009808
  %v1273 = vunpack.c.0.s8 %v1272
  %v1274 = vlaneseq
  %v1275 = vshrl.u32 %v1274, 7
  %v1276 = vsub.s32 %v1273, %v1275
  %v1277 = vrot.slane %v1270, %v1276
  %v1278 = vcombine.low %v1182, %v1189
  %v1280 = vunpack.c.l.s4 1983009808
  %v1281 = vunpack.c.0.s8 %v1280
  %v1282 = vlaneseq
  %v1283 = vshrl.u32 %v1282, 7
  %v1284 = vsub.s32 %v1281, %v1283
  %v1285 = vrot.slane %v1278, %v1284
  %v1286 = vcombine.low %v1192, %v1193
  %v1288 = vunpack.c.l.s4 1983009808
  %v1289 = vunpack.c.0.s8 %v1288
  %v1290 = vlaneseq
  %v1291 = vshrl.u32 %v1290, 7
  %v1292 = vsub.s32 %v1289, %v1291
  %v1293 = vrot.slane %v1286, %v1292
  %v1294 = vcombine.low %v1269, %v1277
  %v1295 = vcombine.high %v1269, %v1277
  %v1297 = vunpack.c.l.s4 1934713408
  %v1298 = vunpack.c.0.s8 %v1297
  %v1299 = vlaneseq
  %v1300 = vshrl.u32 %v1299, 7
  %v1301 = vsub.s32 %v1298, %v1300
  %v1302 = vrot.slane %v1294, %v1301
  %v1304 = vunpack.c.l.s4 1934713408
  %v1305 = vunpack.c.0.s8 %v1304
  %v1306 = vlaneseq
  %v1307 = vshrl.u32 %v1306, 7
  %v1308 = vsub.s32 %v1305, %v1307
  %v1309 = vrot.slane %v1295, %v1308
  %v1310 = vcombine.low %v1285, %v1293
  %v1311 = vcombine.high %v1285, %v1293
  %v1313 = vunpack.c.l.s4 1934713408
  %v1314 = vunpack.c.0.s8 %v1313
  %v1315 = vlaneseq
  %v1316 = vshrl.u32 %v1315, 7
  %v1317 = vsub.s32 %v1314, %v1316
  %v1318 = vrot.slane %v1310, %v1317
  %v1320 = vunpack.c.l.s4 1934713408
  %v1321 = vunpack.c.0.s8 %v1320
  %v1322 = vlaneseq
  %v1323 = vshrl.u32 %v1322, 7
  %v1324 = vsub.s32 %v1321, %v1323
  %v1325 = vrot.slane %v1311, %v1324
  %v1326 = vcombine.low %v1302, %v1318
  %v1327 = vcombine.high %v1302, %v1318
  %v1328 = vcombine.low %v1309, %v1325
  %v1329 = vcombine.high %v1309, %v1325
  %vm1330 = vcmask 523264
  %v1332 = vsel %vm1330, %v1037, 0
  %1334 = vmatprep.subr.mxu0 0.0
  %1335 = vmatpush1.msra.mxu0 %v1258
  %1336 = vmatprep.subr.mxu0 0.0
  %1337 = vmatpush1.msra.mxu0 %v1326
  %1338 = vmatprep.subr.mxu0 0.0
  %1339 = vmatpush1.msra.mxu0 %v1259
  %1340 = vmatprep.subr.mxu0 0.0
  %1341 = vmatpush1.msra.mxu0 %v1327
  %1342 = vmatprep.subr.mxu0 0.0
  %1343 = vmatpush1.msra.mxu0 %v1260
  %1344 = vmatprep.subr.mxu0 0.0
  %1345 = vmatpush1.msra.mxu0 %v1328
  %1346 = vmatprep.subr.mxu0 0.0
  %1347 = vmatpush1.msra.mxu0 %v1261
  %1348 = vmatprep.subr.mxu0 0.0
  %1349 = vmatpush1.msra.mxu0 %v1329
  %1350 = vmatprep.subr.mxu0 0.0
  %1351 = vmatpush1.msra.mxu0 0.0
  %1352 = vmatprep.subr.mxu0 0.0
  %1353 = vmatpush1.msra.mxu0 0.0
  %1354 = vmatprep.subr.mxu0 0.0
  %1355 = vmatpush1.msra.mxu0 0.0
  %1356 = vmatprep.subr.mxu0 0.0
  %1357 = vmatpush1.msra.mxu0 0.0
  %1358 = vmatprep.subr.mxu0 0.0
  %1359 = vmatpush1.msra.mxu0 0.0
  %1360 = vmatprep.subr.mxu0 0.0
  %1361 = vmatpush1.msra.mxu0 0.0
  %1362 = vmatprep.subr.mxu0 0.0
  %1363 = vmatpush1.msra.mxu0 0.0
  %1364 = vmatprep.subr.mxu0 0.0
  %1365 = vmatpush1.msra.mxu0 0.0
  %1366 = vmatprep.subr.mxu0 0.0
  %1367 = vmatpush1.msra.mxu0 0.0
  %1368 = vmatprep.subr.mxu0 0.0
  %1369 = vmatpush1.msra.mxu0 0.0
  %1370 = vmatprep.subr.mxu0 0.0
  %1371 = vmatpush1.msra.mxu0 0.0
  %1372 = vmatprep.subr.mxu0 0.0
  %1373 = vmatpush1.msra.mxu0 0.0
  %1374 = vmatprep.subr.mxu0 0.0
  %1375 = vmatpush1.msra.mxu0 0.0
  %1376 = vmatprep.subr.mxu0 0.0
  %1377 = vmatpush1.msra.mxu0 0.0
  %1378 = vmatprep.subr.mxu0 0.0
  %1379 = vmatpush1.msra.mxu0 0.0
  %1380 = vmatprep.subr.mxu0 0.0
  %1381 = vmatpush1.msra.mxu0 0.0
  %1382 = vmatprep.subr.mxu0 0.0
  %1383 = vmatpush1.msra.mxu0 0.0
  %1384 = vmatprep.subr.mxu0 0.0
  %1385 = vmatpush1.msra.mxu0 0.0
  %1386 = vmatprep.subr.mxu0 0.0
  %1387 = vmatpush1.msra.mxu0 0.0
  %1388 = vmatprep.subr.mxu0 0.0
  %1389 = vmatpush1.msra.mxu0 0.0
  %1390 = vmatprep.subr.mxu0 0.0
  %1391 = vmatpush1.msra.mxu0 0.0
  %1392 = vmatprep.subr.mxu0 0.0
  %1393 = vmatpush1.msra.mxu0 0.0
  %1394 = vmatprep.subr.mxu0 0.0
  %1395 = vmatpush1.msra.mxu0 0.0
  %1396 = vmatprep.subr.mxu0 0.0
  %1397 = vmatpush1.msra.mxu0 0.0
  %1398 = vmatprep.mubr.f32.mxu0 0.0
  %1399 = vmatmul.mubr.f32.gmra.mrb[0].mxu0 %v1332
  %v1400 = vpop.f32.mrb[0].mxu0
  %v1401 = vadd.f32 0.0, %v1400
  %v1402 = vpop.f32.mrb[0].mxu0
  %1403 = vdwg.mxu0
  %v1404 = vmul.f32 %v1401, 0.25
  %v1406 = vlaneseq
  %v1407 = vshrl.u32 %v1406, 7
  %v1408 = vsub.s32 0, %v1407
  %v1409 = vrot.slane %v621, %v1408
  %v1411 = vadd.f32 %v1404, %v1409
  %v1412 = vmax.f32 %v1411, 0.0
  %v1413 = vld [vmem:[%s16] sm:$0xff]
  %v1414 = vld [vmem:[%s16 + $0x8] sm:$0xff]
  %v1415 = vld [vmem:[%s16 + $0x10] sm:$0xff]
  %v1416 = vld [vmem:[%s16 + $0x18] sm:$0xff]
  %v1417 = vld [vmem:[%s17] sm:$0xff]
  %v1418 = vld [vmem:[%s17 + $0x8] sm:$0xff]
  %v1419 = vld [vmem:[%s17 + $0x10] sm:$0xff]
  %v1420 = vld [vmem:[%s17 + $0x18] sm:$0xff]
  %v1421 = vld [vmem:[%s18] sm:$0xf]
  %v1422 = vld [vmem:[%s19] sm:$0xf]
  %v1423 = vld [vmem:[%s20] sm:$0x1]
  %1424 = vmatprep.subr.mxu0 0.0
  %1425 = vmatpush1.msra.mxu0 %v1413
  %1426 = vmatprep.subr.mxu0 0.0
  %1427 = vmatpush1.msra.mxu0 %v1414
  %1428 = vmatprep.subr.mxu0 0.0
  %1429 = vmatpush1.msra.mxu0 %v1415
  %1430 = vmatprep.subr.mxu0 0.0
  %1431 = vmatpush1.msra.mxu0 %v1416
  %1432 = vmatprep.subr.mxu0 0.0
  %1433 = vmatpush1.msra.mxu0 0.0
  %1434 = vmatprep.subr.mxu0 0.0
  %1435 = vmatpush1.msra.mxu0 0.0
  %1436 = vmatprep.subr.mxu0 0.0
  %1437 = vmatpush1.msra.mxu0 0.0
  %1438 = vmatprep.subr.mxu0 0.0
  %1439 = vmatpush1.msra.mxu0 0.0
  %1440 = vmatprep.subr.mxu0 0.0
  %1441 = vmatpush1.msra.mxu0 0.0
  %1442 = vmatprep.subr.mxu0 0.0
  %1443 = vmatpush1.msra.mxu0 0.0
  %1444 = vmatprep.subr.mxu0 0.0
  %1445 = vmatpush1.msra.mxu0 0.0
  %1446 = vmatprep.subr.mxu0 0.0
  %1447 = vmatpush1.msra.mxu0 0.0
  %1448 = vmatprep.subr.mxu0 0.0
  %1449 = vmatpush1.msra.mxu0 0.0
  %1450 = vmatprep.subr.mxu0 0.0
  %1451 = vmatpush1.msra.mxu0 0.0
  %1452 = vmatprep.subr.mxu0 0.0
  %1453 = vmatpush1.msra.mxu0 0.0
  %1454 = vmatprep.subr.mxu0 0.0
  %1455 = vmatpush1.msra.mxu0 0.0
  %1456 = vmatprep.subr.mxu0 0.0
  %1457 = vmatpush1.msra.mxu0 0.0
  %1458 = vmatprep.subr.mxu0 0.0
  %1459 = vmatpush1.msra.mxu0 0.0
  %1460 = vmatprep.subr.mxu0 0.0
  %1461 = vmatpush1.msra.mxu0 0.0
  %1462 = vmatprep.subr.mxu0 0.0
  %1463 = vmatpush1.msra.mxu0 0.0
  %1464 = vmatprep.subr.mxu0 0.0
  %1465 = vmatpush1.msra.mxu0 0.0
  %1466 = vmatprep.subr.mxu0 0.0
  %1467 = vmatpush1.msra.mxu0 0.0
  %1468 = vmatprep.subr.mxu0 0.0
  %1469 = vmatpush1.msra.mxu0 0.0
  %1470 = vmatprep.subr.mxu0 0.0
  %1471 = vmatpush1.msra.mxu0 0.0
  %1472 = vmatprep.subr.mxu0 0.0
  %1473 = vmatpush1.msra.mxu0 0.0
  %1474 = vmatprep.subr.mxu0 0.0
  %1475 = vmatpush1.msra.mxu0 0.0
  %1476 = vmatprep.subr.mxu0 0.0
  %1477 = vmatpush1.msra.mxu0 0.0
  %1478 = vmatprep.subr.mxu0 0.0
  %1479 = vmatpush1.msra.mxu0 0.0
  %1480 = vmatprep.subr.mxu0 0.0
  %1481 = vmatpush1.msra.mxu0 0.0
  %1482 = vmatprep.subr.mxu0 0.0
  %1483 = vmatpush1.msra.mxu0 0.0
  %1484 = vmatprep.subr.mxu0 0.0
  %1485 = vmatpush1.msra.mxu0 0.0
  %1486 = vmatprep.subr.mxu0 0.0
  %1487 = vmatpush1.msra.mxu0 0.0
  %1488 = vmatprep.mubr.f32.mxu0 0.0
  %1489 = vmatmul.mubr.f32.gmra.mrb[0].mxu0 %v705
  %v1490 = vpop.f32.mrb[0].mxu0
  %v1491 = vadd.f32 0.0, %v1490
  %v1492 = vpop.f32.mrb[0].mxu0
  %1493 = vdwg.mxu0
  %1494 = vmatprep.subr.mxu0 0.0
  %1495 = vmatpush1.msra.mxu0 %v1417
  %1496 = vmatprep.subr.mxu0 0.0
  %1497 = vmatpush1.msra.mxu0 %v1418
  %1498 = vmatprep.subr.mxu0 0.0
  %1499 = vmatpush1.msra.mxu0 %v1419
  %1500 = vmatprep.subr.mxu0 0.0
  %1501 = vmatpush1.msra.mxu0 %v1420
  %1502 = vmatprep.subr.mxu0 0.0
  %1503 = vmatpush1.msra.mxu0 0.0
  %1504 = vmatprep.subr.mxu0 0.0
  %1505 = vmatpush1.msra.mxu0 0.0
  %1506 = vmatprep.subr.mxu0 0.0
  %1507 = vmatpush1.msra.mxu0 0.0
  %1508 = vmatprep.subr.mxu0 0.0
  %1509 = vmatpush1.msra.mxu0 0.0
  %1510 = vmatprep.subr.mxu0 0.0
  %1511 = vmatpush1.msra.mxu0 0.0
  %1512 = vmatprep.subr.mxu0 0.0
  %1513 = vmatpush1.msra.mxu0 0.0
  %1514 = vmatprep.subr.mxu0 0.0
  %1515 = vmatpush1.msra.mxu0 0.0
  %1516 = vmatprep.subr.mxu0 0.0
  %1517 = vmatpush1.msra.mxu0 0.0
  %1518 = vmatprep.subr.mxu0 0.0
  %1519 = vmatpush1.msra.mxu0 0.0
  %1520 = vmatprep.subr.mxu0 0.0
  %1521 = vmatpush1.msra.mxu0 0.0
  %1522 = vmatprep.subr.mxu0 0.0
  %1523 = vmatpush1.msra.mxu0 0.0
  %1524 = vmatprep.subr.mxu0 0.0
  %1525 = vmatpush1.msra.mxu0 0.0
  %1526 = vmatprep.subr.mxu0 0.0
  %1527 = vmatpush1.msra.mxu0 0.0
  %1528 = vmatprep.subr.mxu0 0.0
  %1529 = vmatpush1.msra.mxu0 0.0
  %1530 = vmatprep.subr.mxu0 0.0
  %1531 = vmatpush1.msra.mxu0 0.0
  %1532 = vmatprep.subr.mxu0 0.0
  %1533 = vmatpush1.msra.mxu0 0.0
  %1534 = vmatprep.subr.mxu0 0.0
  %1535 = vmatpush1.msra.mxu0 0.0
  %1536 = vmatprep.subr.mxu0 0.0
  %1537 = vmatpush1.msra.mxu0 0.0
  %1538 = vmatprep.subr.mxu0 0.0
  %1539 = vmatpush1.msra.mxu0 0.0
  %1540 = vmatprep.subr.mxu0 0.0
  %1541 = vmatpush1.msra.mxu0 0.0
  %1542 = vmatprep.subr.mxu0 0.0
  %1543 = vmatpush1.msra.mxu0 0.0
  %1544 = vmatprep.subr.mxu0 0.0
  %1545 = vmatpush1.msra.mxu0 0.0
  %1546 = vmatprep.subr.mxu0 0.0
  %1547 = vmatpush1.msra.mxu0 0.0
  %1548 = vmatprep.subr.mxu0 0.0
  %1549 = vmatpush1.msra.mxu0 0.0
  %1550 = vmatprep.subr.mxu0 0.0
  %1551 = vmatpush1.msra.mxu0 0.0
  %1552 = vmatprep.subr.mxu0 0.0
  %1553 = vmatpush1.msra.mxu0 0.0
  %1554 = vmatprep.subr.mxu0 0.0
  %1555 = vmatpush1.msra.mxu0 0.0
  %1556 = vmatprep.subr.mxu0 0.0
  %1557 = vmatpush1.msra.mxu0 0.0
  %1558 = vmatprep.mubr.f32.mxu0 0.0
  %1559 = vmatmul.mubr.f32.gmra.mrb[0].mxu0 %v624
  %v1560 = vpop.f32.mrb[0].mxu0
  %v1561 = vadd.f32 0.0, %v1560
  %v1562 = vpop.f32.mrb[0].mxu0
  %1563 = vmatprep.mubr.f32.mxu0 0.0
  %1564 = vmatmul.mubr.f32.gmra.mrb[0].mxu0 %v627
  %v1565 = vpop.f32.mrb[0].mxu0
  %v1566 = vadd.f32 0.0, %v1565
  %v1567 = vpop.f32.mrb[0].mxu0
  %1568 = vdwg.mxu0
  %1569 = vmatprep.subr.mxu0 0.0
  %1570 = vmatpush1.xpose.msra.mxu0 %v1491
  %1571 = vmatprep.subr.mxu0 0.0
  %1572 = vmatpush1.xpose.msra.mxu0 0.0
  %1573 = vmatprep.subr.mxu0 0.0
  %1574 = vmatpush1.xpose.msra.mxu0 0.0
  %1575 = vmatprep.subr.mxu0 0.0
  %1576 = vmatpush1.xpose.msra.mxu0 0.0
  %1577 = vmatprep.subr.mxu0 0.0
  %1578 = vmatpush1.xpose.msra.mxu0 0.0
  %1579 = vmatprep.subr.mxu0 0.0
  %1580 = vmatpush1.xpose.msra.mxu0 0.0
  %1581 = vmatprep.subr.mxu0 0.0
  %1582 = vmatpush1.xpose.msra.mxu0 0.0
  %1583 = vmatprep.subr.mxu0 0.0
  %1584 = vmatpush1.xpose.msra.mxu0 0.0
  %1585 = vmatprep.subr.mxu0 0.0
  %1586 = vmatpush1.xpose.msra.mxu0 0.0
  %1587 = vmatprep.subr.mxu0 0.0
  %1588 = vmatpush1.xpose.msra.mxu0 0.0
  %1589 = vmatprep.subr.mxu0 0.0
  %1590 = vmatpush1.xpose.msra.mxu0 0.0
  %1591 = vmatprep.subr.mxu0 0.0
  %1592 = vmatpush1.xpose.msra.mxu0 0.0
  %1593 = vmatprep.subr.mxu0 0.0
  %1594 = vmatpush1.xpose.msra.mxu0 0.0
  %1595 = vmatprep.subr.mxu0 0.0
  %1596 = vmatpush1.xpose.msra.mxu0 0.0
  %1597 = vmatprep.subr.mxu0 0.0
  %1598 = vmatpush1.xpose.msra.mxu0 0.0
  %1599 = vmatprep.subr.mxu0 0.0
  %1600 = vmatpush1.xpose.msra.mxu0 0.0
  %1601 = vmatprep.subr.mxu0 0.0
  %1602 = vmatpush1.xpose.msra.mxu0 0.0
  %1603 = vmatprep.subr.mxu0 0.0
  %1604 = vmatpush1.xpose.msra.mxu0 0.0
  %1605 = vmatprep.subr.mxu0 0.0
  %1606 = vmatpush1.xpose.msra.mxu0 0.0
  %1607 = vmatprep.subr.mxu0 0.0
  %1608 = vmatpush1.xpose.msra.mxu0 0.0
  %1609 = vmatprep.subr.mxu0 0.0
  %1610 = vmatpush1.xpose.msra.mxu0 0.0
  %1611 = vmatprep.subr.mxu0 0.0
  %1612 = vmatpush1.xpose.msra.mxu0 0.0
  %1613 = vmatprep.subr.mxu0 0.0
  %1614 = vmatpush1.xpose.msra.mxu0 0.0
  %1615 = vmatprep.subr.mxu0 0.0
  %1616 = vmatpush1.xpose.msra.mxu0 0.0
  %1617 = vmatprep.subr.mxu0 0.0
  %1618 = vmatpush1.xpose.msra.mxu0 0.0
  %1619 = vmatprep.subr.mxu0 0.0
  %1620 = vmatpush1.xpose.msra.mxu0 0.0
  %1621 = vmatprep.subr.mxu0 0.0
  %1622 = vmatpush1.xpose.msra.mxu0 0.0
  %1623 = vmatprep.subr.mxu0 0.0
  %1624 = vmatpush1.xpose.msra.mxu0 0.0
  %1625 = vmatprep.subr.mxu0 0.0
  %1626 = vmatpush1.xpose.msra.mxu0 0.0
  %1627 = vmatprep.subr.mxu0 0.0
  %1628 = vmatpush1.xpose.msra.mxu0 0.0
  %1629 = vmatprep.subr.mxu0 0.0
  %1630 = vmatpush1.xpose.msra.mxu0 0.0
  %1631 = vmatprep.subr.mxu0 0.0
  %1632 = vmatpush1.xpose.msra.mxu0 0.0
  %1633 = vmatprep.mubr.f32.mxu0 0.0
  %1634 = vmatmul.mubr.f32.gmra.mrb[0].mxu0 %v1421
  %v1635 = vpop.f32.mrb[0].mxu0
  %v1636 = vadd.f32 0.0, %v1635
  %v1637 = vpop.f32.mrb[0].mxu0
  %1638 = vdwg.mxu0
  %1639 = vmatprep.subr.mxu0 0.0
  %1640 = vmatpush1.xpose.msra.mxu0 %v1422
  %1641 = vmatprep.subr.mxu0 0.0
  %1642 = vmatpush1.xpose.msra.mxu0 0.0
  %1643 = vmatprep.subr.mxu0 0.0
  %1644 = vmatpush1.xpose.msra.mxu0 0.0
  %1645 = vmatprep.subr.mxu0 0.0
  %1646 = vmatpush1.xpose.msra.mxu0 0.0
  %1647 = vmatprep.subr.mxu0 0.0
  %1648 = vmatpush1.xpose.msra.mxu0 0.0
  %1649 = vmatprep.subr.mxu0 0.0
  %1650 = vmatpush1.xpose.msra.mxu0 0.0
  %1651 = vmatprep.subr.mxu0 0.0
  %1652 = vmatpush1.xpose.msra.mxu0 0.0
  %1653 = vmatprep.subr.mxu0 0.0
  %1654 = vmatpush1.xpose.msra.mxu0 0.0
  %1655 = vmatprep.subr.mxu0 0.0
  %1656 = vmatpush1.xpose.msra.mxu0 0.0
  %1657 = vmatprep.subr.mxu0 0.0
  %1658 = vmatpush1.xpose.msra.mxu0 0.0
  %1659 = vmatprep.subr.mxu0 0.0
  %1660 = vmatpush1.xpose.msra.mxu0 0.0
  %1661 = vmatprep.subr.mxu0 0.0
  %1662 = vmatpush1.xpose.msra.mxu0 0.0
  %1663 = vmatprep.subr.mxu0 0.0
  %1664 = vmatpush1.xpose.msra.mxu0 0.0
  %1665 = vmatprep.subr.mxu0 0.0
  %1666 = vmatpush1.xpose.msra.mxu0 0.0
  %1667 = vmatprep.subr.mxu0 0.0
  %1668 = vmatpush1.xpose.msra.mxu0 0.0
  %1669 = vmatprep.subr.mxu0 0.0
  %1670 = vmatpush1.xpose.msra.mxu0 0.0
  %1671 = vmatprep.subr.mxu0 0.0
  %1672 = vmatpush1.xpose.msra.mxu0 0.0
  %1673 = vmatprep.subr.mxu0 0.0
  %1674 = vmatpush1.xpose.msra.mxu0 0.0
  %1675 = vmatprep.subr.mxu0 0.0
  %1676 = vmatpush1.xpose.msra.mxu0 0.0
  %1677 = vmatprep.subr.mxu0 0.0
  %1678 = vmatpush1.xpose.msra.mxu0 0.0
  %1679 = vmatprep.subr.mxu0 0.0
  %1680 = vmatpush1.xpose.msra.mxu0 0.0
  %1681 = vmatprep.subr.mxu0 0.0
  %1682 = vmatpush1.xpose.msra.mxu0 0.0
  %1683 = vmatprep.subr.mxu0 0.0
  %1684 = vmatpush1.xpose.msra.mxu0 0.0
  %1685 = vmatprep.subr.mxu0 0.0
  %1686 = vmatpush1.xpose.msra.mxu0 0.0
  %1687 = vmatprep.subr.mxu0 0.0
  %1688 = vmatpush1.xpose.msra.mxu0 0.0
  %1689 = vmatprep.subr.mxu0 0.0
  %1690 = vmatpush1.xpose.msra.mxu0 0.0
  %1691 = vmatprep.subr.mxu0 0.0
  %1692 = vmatpush1.xpose.msra.mxu0 0.0
  %1693 = vmatprep.subr.mxu0 0.0
  %1694 = vmatpush1.xpose.msra.mxu0 0.0
  %1695 = vmatprep.subr.mxu0 0.0
  %1696 = vmatpush1.xpose.msra.mxu0 0.0
  %1697 = vmatprep.subr.mxu0 0.0
  %1698 = vmatpush1.xpose.msra.mxu0 0.0
  %1699 = vmatprep.subr.mxu0 0.0
  %1700 = vmatpush1.xpose.msra.mxu0 0.0
  %1701 = vmatprep.subr.mxu0 0.0
  %1702 = vmatpush1.xpose.msra.mxu0 0.0
  %1703 = vmatprep.mubr.f32.mxu0 0.0
  %1704 = vmatmul.mubr.f32.gmra.mrb[0].mxu0 %v1561
  %v1705 = vpop.f32.mrb[0].mxu0
  %v1706 = vadd.f32 0.0, %v1705
  %v1707 = vpop.f32.mrb[0].mxu0
  %1708 = vmatprep.mubr.f32.mxu0 0.0
  %1709 = vmatmul.mubr.f32.gmra.mrb[0].mxu0 %v1566
  %v1710 = vpop.f32.mrb[0].mxu0
  %v1711 = vadd.f32 0.0, %v1710
  %v1712 = vpop.f32.mrb[0].mxu0
  %1713 = vdwg.mxu0
  %1715 = vset.pattern.permute.xlu0 0
  %1716 = vperm.xlu0 %1715, %v1706
  %v1717 = vpop.permute.xlu0 %1716
  %1720 = vset.pattern.permute.xlu0 0
  %1721 = vperm.xlu0 %1720, %v1711
  %v1722 = vpop.permute.xlu0 %1721
  %v1724 = vlaneseq
  %v1725 = vshrl.u32 %v1724, 7
  %v1726 = vsub.s32 0, %v1725
  %v1727 = vrot.slane %v1636, %v1726
  %v1728 = vadd.f32 %v1717, %v1727
  %v1729 = vadd.f32 %v1722, %v1727
  %vm1730 = vcmp.gt.f32.partialorder %v1728, 0.0
  %vm1731 = vcmp.gt.f32.partialorder %v1729, 0.0
  %v1732 = vmul.f32 %v1728, 0.2
  %v1733 = vmul.f32 %v1729, 0.2
  %v1734 = vsel %vm1730, %v1728, %v1732
  %v1735 = vsel %vm1731, %v1729, %v1733
  %v1736 = vsel %vm185, %v1734, -inf
  %1737 = vmax.xlane.f32.xlu0 %v1736
  %v1738 = vpop.xlane.xlu0 %1737
  %v1739 = vsel %vm185, %v1735, -inf
  %1740 = vmax.xlane.f32.xlu0 %v1739
  %v1741 = vpop.xlane.xlu0 %1740
  %v1742 = vsub.f32 %v1734, %v1738
  %v1743 = vsub.f32 %v1735, %v1741
  %v1744 = vmul.f32 %v1742, 1.442695
  %v1745 = vpow.pop %v1744
  %v1746 = vmul.f32 %v1743, 1.442695
  %v1747 = vpow.pop %v1746
  %v1748 = vmul.f32 %v1745, %v95
  %v1749 = vmul.f32 %v1747, %v96
  %v1750 = vsel %vm185, %v1748, 0.0
  %1751 = vadd.xlane.f32.xlu0 %v1750
  %v1752 = vpop.xlane.xlu0 %1751
  %v1753 = vsel %vm185, %v1749, 0.0
  %1754 = vadd.xlane.f32.xlu0 %v1753
  %v1755 = vpop.xlane.xlu0 %1754
  %vm1756 = vcmp.gt.f32.partialorder %v1752, 0.0
  %vm1757 = vcmp.gt.f32.partialorder %v1755, 0.0
  %v1758 = vrcp.pop %v1752
  %v1759 = vrcp.pop %v1755
  %v1760 = vsel %vm1756, %v1758, 0.0
  %v1761 = vsel %vm1757, %v1759, 0.0
  %v1762 = vmul.f32 %v1748, %v1760
  %v1763 = vmul.f32 %v1749, %v1761
  %1764 = vset.pattern.permute.xlu0 1
  %1765 = vperm.xlu0 %1764, %v1706
  %v1766 = vpop.permute.xlu0 %1765
  %1768 = vset.pattern.permute.xlu0 1
  %1769 = vperm.xlu0 %1768, %v1711
  %v1770 = vpop.permute.xlu0 %1769
  %v1772 = vlaneseq
  %v1773 = vshrl.u32 %v1772, 7
  %v1774 = vsub.s32 1, %v1773
  %v1775 = vrot.slane %v1636, %v1774
  %v1776 = vadd.f32 %v1766, %v1775
  %v1777 = vadd.f32 %v1770, %v1775
  %vm1778 = vcmp.gt.f32.partialorder %v1776, 0.0
  %vm1779 = vcmp.gt.f32.partialorder %v1777, 0.0
  %v1780 = vmul.f32 %v1776, 0.2
  %v1781 = vmul.f32 %v1777, 0.2
  %v1782 = vsel %vm1778, %v1776, %v1780
  %v1783 = vsel %vm1779, %v1777, %v1781
  %v1784 = vsel %vm185, %v1782, -inf
  %1785 = vmax.xlane.f32.xlu0 %v1784
  %v1786 = vpop.xlane.xlu0 %1785
  %v1787 = vsel %vm185, %v1783, -inf
  %1788 = vmax.xlane.f32.xlu0 %v1787
  %v1789 = vpop.xlane.xlu0 %1788
  %v1790 = vsub.f32 %v1782, %v1786
  %v1791 = vsub.f32 %v1783, %v1789
  %v1792 = vmul.f32 %v1790, 1.442695
  %v1793 = vpow.pop %v1792
  %v1794 = vmul.f32 %v1791, 1.442695
  %v1795 = vpow.pop %v1794
  %v1796 = vmul.f32 %v1793, %v95
  %v1797 = vmul.f32 %v1795, %v96
  %v1798 = vsel %vm185, %v1796, 0.0
  %1799 = vadd.xlane.f32.xlu0 %v1798
  %v1800 = vpop.xlane.xlu0 %1799
  %v1801 = vsel %vm185, %v1797, 0.0
  %1802 = vadd.xlane.f32.xlu0 %v1801
  %v1803 = vpop.xlane.xlu0 %1802
  %vm1804 = vcmp.gt.f32.partialorder %v1800, 0.0
  %vm1805 = vcmp.gt.f32.partialorder %v1803, 0.0
  %v1806 = vrcp.pop %v1800
  %v1807 = vrcp.pop %v1803
  %v1808 = vsel %vm1804, %v1806, 0.0
  %v1809 = vsel %vm1805, %v1807, 0.0
  %v1810 = vmul.f32 %v1796, %v1808
  %v1811 = vmul.f32 %v1797, %v1809
  %1812 = vset.pattern.permute.xlu0 2
  %1813 = vperm.xlu0 %1812, %v1706
  %v1814 = vpop.permute.xlu0 %1813
  %1816 = vset.pattern.permute.xlu0 2
  %1817 = vperm.xlu0 %1816, %v1711
  %v1818 = vpop.permute.xlu0 %1817
  %v1820 = vlaneseq
  %v1821 = vshrl.u32 %v1820, 7
  %v1822 = vsub.s32 2, %v1821
  %v1823 = vrot.slane %v1636, %v1822
  %v1824 = vadd.f32 %v1814, %v1823
  %v1825 = vadd.f32 %v1818, %v1823
  %vm1826 = vcmp.gt.f32.partialorder %v1824, 0.0
  %vm1827 = vcmp.gt.f32.partialorder %v1825, 0.0
  %v1828 = vmul.f32 %v1824, 0.2
  %v1829 = vmul.f32 %v1825, 0.2
  %v1830 = vsel %vm1826, %v1824, %v1828
  %v1831 = vsel %vm1827, %v1825, %v1829
  %v1832 = vsel %vm185, %v1830, -inf
  %1833 = vmax.xlane.f32.xlu0 %v1832
  %v1834 = vpop.xlane.xlu0 %1833
  %v1835 = vsel %vm185, %v1831, -inf
  %1836 = vmax.xlane.f32.xlu0 %v1835
  %v1837 = vpop.xlane.xlu0 %1836
  %v1838 = vsub.f32 %v1830, %v1834
  %v1839 = vsub.f32 %v1831, %v1837
  %v1840 = vmul.f32 %v1838, 1.442695
  %v1841 = vpow.pop %v1840
  %v1842 = vmul.f32 %v1839, 1.442695
  %v1843 = vpow.pop %v1842
  %v1844 = vmul.f32 %v1841, %v95
  %v1845 = vmul.f32 %v1843, %v96
  %v1846 = vsel %vm185, %v1844, 0.0
  %1847 = vadd.xlane.f32.xlu0 %v1846
  %v1848 = vpop.xlane.xlu0 %1847
  %v1849 = vsel %vm185, %v1845, 0.0
  %1850 = vadd.xlane.f32.xlu0 %v1849
  %v1851 = vpop.xlane.xlu0 %1850
  %vm1852 = vcmp.gt.f32.partialorder %v1848, 0.0
  %vm1853 = vcmp.gt.f32.partialorder %v1851, 0.0
  %v1854 = vrcp.pop %v1848
  %v1855 = vrcp.pop %v1851
  %v1856 = vsel %vm1852, %v1854, 0.0
  %v1857 = vsel %vm1853, %v1855, 0.0
  %v1858 = vmul.f32 %v1844, %v1856
  %v1859 = vmul.f32 %v1845, %v1857
  %1860 = vset.pattern.permute.xlu0 3
  %1861 = vperm.xlu0 %1860, %v1706
  %v1862 = vpop.permute.xlu0 %1861
  %1864 = vset.pattern.permute.xlu0 3
  %1865 = vperm.xlu0 %1864, %v1711
  %v1866 = vpop.permute.xlu0 %1865
  %v1868 = vlaneseq
  %v1869 = vshrl.u32 %v1868, 7
  %v1870 = vsub.s32 3, %v1869
  %v1871 = vrot.slane %v1636, %v1870
  %v1872 = vadd.f32 %v1862, %v1871
  %v1873 = vadd.f32 %v1866, %v1871
  %vm1874 = vcmp.gt.f32.partialorder %v1872, 0.0
  %vm1875 = vcmp.gt.f32.partialorder %v1873, 0.0
  %v1876 = vmul.f32 %v1872, 0.2
  %v1877 = vmul.f32 %v1873, 0.2
  %v1878 = vsel %vm1874, %v1872, %v1876
  %v1879 = vsel %vm1875, %v1873, %v1877
  %v1880 = vsel %vm185, %v1878, -inf
  %1881 = vmax.xlane.f32.xlu0 %v1880
  %v1882 = vpop.xlane.xlu0 %1881
  %v1883 = vsel %vm185, %v1879, -inf
  %1884 = vmax.xlane.f32.xlu0 %v1883
  %v1885 = vpop.xlane.xlu0 %1884
  %v1886 = vsub.f32 %v1878, %v1882
  %v1887 = vsub.f32 %v1879, %v1885
  %v1888 = vmul.f32 %v1886, 1.442695
  %v1889 = vpow.pop %v1888
  %v1890 = vmul.f32 %v1887, 1.442695
  %v1891 = vpow.pop %v1890
  %v1892 = vmul.f32 %v1889, %v95
  %v1893 = vmul.f32 %v1891, %v96
  %v1894 = vsel %vm185, %v1892, 0.0
  %1895 = vadd.xlane.f32.xlu0 %v1894
  %v1896 = vpop.xlane.xlu0 %1895
  %v1897 = vsel %vm185, %v1893, 0.0
  %1898 = vadd.xlane.f32.xlu0 %v1897
  %v1899 = vpop.xlane.xlu0 %1898
  %vm1900 = vcmp.gt.f32.partialorder %v1896, 0.0
  %vm1901 = vcmp.gt.f32.partialorder %v1899, 0.0
  %v1902 = vrcp.pop %v1896
  %v1903 = vrcp.pop %v1899
  %v1904 = vsel %vm1900, %v1902, 0.0
  %v1905 = vsel %vm1901, %v1903, 0.0
  %v1906 = vmul.f32 %v1892, %v1904
  %v1907 = vmul.f32 %v1893, %v1905
  %1910 = vrot.lane.b32.xlu0 %v1810, 8
  %v1911 = vpop.permute.xlu0 %1910
  %1912 = vrot.lane.b32.xlu0 %v1811, 8
  %v1913 = vpop.permute.xlu0 %1912
  %1918 = vrot.lane.b32.xlu0 %v1858, 16
  %v1919 = vpop.permute.xlu0 %1918
  %1920 = vrot.lane.b32.xlu0 %v1859, 16
  %v1921 = vpop.permute.xlu0 %1920
  %1926 = vrot.lane.b32.xlu0 %v1906, 24
  %v1927 = vpop.permute.xlu0 %1926
  %1928 = vrot.lane.b32.xlu0 %v1907, 24
  %v1929 = vpop.permute.xlu0 %1928
  %v1932 = vsel %vm185, %v1762, %v1911
  %v1933 = vsel %vm185, %v1763, %v1913
  %v1934 = vsel %vm104, %v1932, %v1919
  %v1935 = vsel %vm104, %v1933, %v1921
  %vm1936 = vcmask 195584
  %v1937 = vsel %vm1936, %v1934, %v1927
  %v1938 = vsel %vm1936, %v1935, %v1929
  %1940 = vrot.lane.b32.xlu0 %v1491, 96
  %v1941 = vpop.permute.xlu0 %1940
  %1943 = vrot.lane.b32.xlu0 %v1491, 64
  %v1944 = vpop.permute.xlu0 %1943
  %1946 = vrot.lane.b32.xlu0 %v1491, 32
  %v1947 = vpop.permute.xlu0 %1946
  %v1949 = vcombine.low %v1491, %v1944
  %v1950 = vcombine.high %v1491, %v1944
  %v1952 = vunpack.c.l.s4 1983009808
  %v1953 = vunpack.c.0.s8 %v1952
  %v1954 = vlaneseq
  %v1955 = vshrl.u32 %v1954, 7
  %v1956 = vsub.s32 %v1953, %v1955
  %v1957 = vrot.slane %v1949, %v1956
  %v1959 = vunpack.c.l.s4 1983009808
  %v1960 = vunpack.c.0.s8 %v1959
  %v1961 = vlaneseq
  %v1962 = vshrl.u32 %v1961, 7
  %v1963 = vsub.s32 %v1960, %v1962
  %v1964 = vrot.slane %v1950, %v1963
  %v1965 = vcombine.low %v1941, %v1947
  %v1966 = vcombine.high %v1941, %v1947
  %v1968 = vunpack.c.l.s4 1983009808
  %v1969 = vunpack.c.0.s8 %v1968
  %v1970 = vlaneseq
  %v1971 = vshrl.u32 %v1970, 7
  %v1972 = vsub.s32 %v1969, %v1971
  %v1973 = vrot.slane %v1965, %v1972
  %v1975 = vunpack.c.l.s4 1983009808
  %v1976 = vunpack.c.0.s8 %v1975
  %v1977 = vlaneseq
  %v1978 = vshrl.u32 %v1977, 7
  %v1979 = vsub.s32 %v1976, %v1978
  %v1980 = vrot.slane %v1966, %v1979
  %v1981 = vcombine.low %v1957, %v1973
  %v1982 = vcombine.high %v1957, %v1973
  %v1984 = vunpack.c.l.s4 1934713408
  %v1985 = vunpack.c.0.s8 %v1984
  %v1986 = vlaneseq
  %v1987 = vshrl.u32 %v1986, 7
  %v1988 = vsub.s32 %v1985, %v1987
  %v1989 = vrot.slane %v1981, %v1988
  %v1991 = vunpack.c.l.s4 1934713408
  %v1992 = vunpack.c.0.s8 %v1991
  %v1993 = vlaneseq
  %v1994 = vshrl.u32 %v1993, 7
  %v1995 = vsub.s32 %v1992, %v1994
  %v1996 = vrot.slane %v1982, %v1995
  %v1997 = vcombine.low %v1964, %v1980
  %v1998 = vcombine.high %v1964, %v1980
  %v2000 = vunpack.c.l.s4 1934713408
  %v2001 = vunpack.c.0.s8 %v2000
  %v2002 = vlaneseq
  %v2003 = vshrl.u32 %v2002, 7
  %v2004 = vsub.s32 %v2001, %v2003
  %v2005 = vrot.slane %v1997, %v2004
  %v2007 = vunpack.c.l.s4 1934713408
  %v2008 = vunpack.c.0.s8 %v2007
  %v2009 = vlaneseq
  %v2010 = vshrl.u32 %v2009, 7
  %v2011 = vsub.s32 %v2008, %v2010
  %v2012 = vrot.slane %v1998, %v2011
  %v2013 = vcombine.high %v1989, 0.0
  %v2014 = vcombine.high %v1996, 0.0
  %v2015 = vcombine.high %v2005, 0.0
  %v2016 = vcombine.high %v2012, 0.0
  %v2017 = vcombine.low %v1989, %v1996
  %v2019 = vunpack.c.l.s4 1983009808
  %v2020 = vunpack.c.0.s8 %v2019
  %v2021 = vlaneseq
  %v2022 = vshrl.u32 %v2021, 7
  %v2023 = vsub.s32 %v2020, %v2022
  %v2024 = vrot.slane %v2017, %v2023
  %v2025 = vcombine.low %v2013, %v2014
  %v2027 = vunpack.c.l.s4 1983009808
  %v2028 = vunpack.c.0.s8 %v2027
  %v2029 = vlaneseq
  %v2030 = vshrl.u32 %v2029, 7
  %v2031 = vsub.s32 %v2028, %v2030
  %v2032 = vrot.slane %v2025, %v2031
  %v2033 = vcombine.low %v2005, %v2012
  %v2035 = vunpack.c.l.s4 1983009808
  %v2036 = vunpack.c.0.s8 %v2035
  %v2037 = vlaneseq
  %v2038 = vshrl.u32 %v2037, 7
  %v2039 = vsub.s32 %v2036, %v2038
  %v2040 = vrot.slane %v2033, %v2039
  %v2041 = vcombine.low %v2015, %v2016
  %v2043 = vunpack.c.l.s4 1983009808
  %v2044 = vunpack.c.0.s8 %v2043
  %v2045 = vlaneseq
  %v2046 = vshrl.u32 %v2045, 7
  %v2047 = vsub.s32 %v2044, %v2046
  %v2048 = vrot.slane %v2041, %v2047
  %v2049 = vcombine.low %v2024, %v2032
  %v2050 = vcombine.high %v2024, %v2032
  %v2052 = vunpack.c.l.s4 1934713408
  %v2053 = vunpack.c.0.s8 %v2052
  %v2054 = vlaneseq
  %v2055 = vshrl.u32 %v2054, 7
  %v2056 = vsub.s32 %v2053, %v2055
  %v2057 = vrot.slane %v2049, %v2056
  %v2059 = vunpack.c.l.s4 1934713408
  %v2060 = vunpack.c.0.s8 %v2059
  %v2061 = vlaneseq
  %v2062 = vshrl.u32 %v2061, 7
  %v2063 = vsub.s32 %v2060, %v2062
  %v2064 = vrot.slane %v2050, %v2063
  %v2065 = vcombine.low %v2040, %v2048
  %v2066 = vcombine.high %v2040, %v2048
  %v2068 = vunpack.c.l.s4 1934713408
  %v2069 = vunpack.c.0.s8 %v2068
  %v2070 = vlaneseq
  %v2071 = vshrl.u32 %v2070, 7
  %v2072 = vsub.s32 %v2069, %v2071
  %v2073 = vrot.slane %v2065, %v2072
  %v2075 = vunpack.c.l.s4 1934713408
  %v2076 = vunpack.c.0.s8 %v2075
  %v2077 = vlaneseq
  %v2078 = vshrl.u32 %v2077, 7
  %v2079 = vsub.s32 %v2076, %v2078
  %v2080 = vrot.slane %v2066, %v2079
  %v2081 = vcombine.low %v2057, %v2073
  %v2082 = vcombine.high %v2057, %v2073
  %v2083 = vcombine.low %v2064, %v2080
  %v2084 = vcombine.high %v2064, %v2080
  %v2086 = vsel %vm622, %v1937, 0
  %v2089 = vsel %vm622, %v1938, 0
  %2091 = vmatprep.subr.mxu0 0.0
  %2092 = vmatpush1.msra.mxu0 %v2081
  %2093 = vmatprep.subr.mxu0 0.0
  %2094 = vmatpush1.msra.mxu0 %v2082
  %2095 = vmatprep.subr.mxu0 0.0
  %2096 = vmatpush1.msra.mxu0 %v2083
  %2097 = vmatprep.subr.mxu0 0.0
  %2098 = vmatpush1.msra.mxu0 %v2084
  %2099 = vmatprep.subr.mxu0 0.0
  %2100 = vmatpush1.msra.mxu0 0.0
  %2101 = vmatprep.subr.mxu0 0.0
  %2102 = vmatpush1.msra.mxu0 0.0
  %2103 = vmatprep.subr.mxu0 0.0
  %2104 = vmatpush1.msra.mxu0 0.0
  %2105 = vmatprep.subr.mxu0 0.0
  %2106 = vmatpush1.msra.mxu0 0.0
  %2107 = vmatprep.subr.mxu0 0.0
  %2108 = vmatpush1.msra.mxu0 0.0
  %2109 = vmatprep.subr.mxu0 0.0
  %2110 = vmatpush1.msra.mxu0 0.0
  %2111 = vmatprep.subr.mxu0 0.0
  %2112 = vmatpush1.msra.mxu0 0.0
  %2113 = vmatprep.subr.mxu0 0.0
  %2114 = vmatpush1.msra.mxu0 0.0
  %2115 = vmatprep.subr.mxu0 0.0
  %2116 = vmatpush1.msra.mxu0 0.0
  %2117 = vmatprep.subr.mxu0 0.0
  %2118 = vmatpush1.msra.mxu0 0.0
  %2119 = vmatprep.subr.mxu0 0.0
  %2120 = vmatpush1.msra.mxu0 0.0
  %2121 = vmatprep.subr.mxu0 0.0
  %2122 = vmatpush1.msra.mxu0 0.0
  %2123 = vmatprep.subr.mxu0 0.0
  %2124 = vmatpush1.msra.mxu0 0.0
  %2125 = vmatprep.subr.mxu0 0.0
  %2126 = vmatpush1.msra.mxu0 0.0
  %2127 = vmatprep.subr.mxu0 0.0
  %2128 = vmatpush1.msra.mxu0 0.0
  %2129 = vmatprep.subr.mxu0 0.0
  %2130 = vmatpush1.msra.mxu0 0.0
  %2131 = vmatprep.subr.mxu0 0.0
  %2132 = vmatpush1.msra.mxu0 0.0
  %2133 = vmatprep.subr.mxu0 0.0
  %2134 = vmatpush1.msra.mxu0 0.0
  %2135 = vmatprep.subr.mxu0 0.0
  %2136 = vmatpush1.msra.mxu0 0.0
  %2137 = vmatprep.subr.mxu0 0.0
  %2138 = vmatpush1.msra.mxu0 0.0
  %2139 = vmatprep.subr.mxu0 0.0
  %2140 = vmatpush1.msra.mxu0 0.0
  %2141 = vmatprep.subr.mxu0 0.0
  %2142 = vmatpush1.msra.mxu0 0.0
  %2143 = vmatprep.subr.mxu0 0.0
  %2144 = vmatpush1.msra.mxu0 0.0
  %2145 = vmatprep.subr.mxu0 0.0
  %2146 = vmatpush1.msra.mxu0 0.0
  %2147 = vmatprep.subr.mxu0 0.0
  %2148 = vmatpush1.msra.mxu0 0.0
  %2149 = vmatprep.subr.mxu0 0.0
  %2150 = vmatpush1.msra.mxu0 0.0
  %2151 = vmatprep.subr.mxu0 0.0
  %2152 = vmatpush1.msra.mxu0 0.0
  %2153 = vmatprep.subr.mxu0 0.0
  %2154 = vmatpush1.msra.mxu0 0.0
  %2155 = vmatprep.mubr.f32.mxu0 0.0
  %2156 = vmatmul.mubr.f32.gmra.mrb[0].mxu0 %v2086
  %v2157 = vpop.f32.mrb[0].mxu0
  %v2158 = vadd.f32 0.0, %v2157
  %v2159 = vpop.f32.mrb[0].mxu0
  %2160 = vmatprep.mubr.f32.mxu0 0.0
  %2161 = vmatmul.mubr.f32.gmra.mrb[0].mxu0 %v2089
  %v2162 = vpop.f32.mrb[0].mxu0
  %v2163 = vadd.f32 0.0, %v2162
  %v2164 = vpop.f32.mrb[0].mxu0
  %2165 = vdwg.mxu0
  %v2166 = vmul.f32 %v2158, 0.25
  %v2167 = vmul.f32 %v2163, 0.25
  %v2169 = vlaneseq
  %v2170 = vshrl.u32 %v2169, 7
  %v2171 = vsub.s32 0, %v2170
  %v2172 = vrot.slane %v1423, %v2171
  %v2174 = vadd.f32 %v2166, %v2172
  %v2175 = vadd.f32 %v2167, %v2172
  %v2176 = vmax.f32 %v2174, 0.0
  %v2177 = vmax.f32 %v2175, 0.0
  %v2178 = vld [vmem:[%s21] sm:$0xff]
  %v2179 = vld [vmem:[%s21 + $0x8] sm:$0xff]
  %v2180 = vld [vmem:[%s21 + $0x10] sm:$0xff]
  %v2181 = vld [vmem:[%s21 + $0x18] sm:$0xff]
  %v2182 = vld [vmem:[%s22] sm:$0x1]
  %v2184 = vlaneseq
  %v2185 = vshrl.u32 %v2184, 7
  %v2186 = vsub.s32 0, %v2185
  %v2187 = vrot.slane %v2182, %v2186
  %v2190 = vsel %vm622, %v2176, 0
  %v2193 = vsel %vm622, %v2177, 0
  %2195 = vmatprep.subr.mxu0 0.0
  %2196 = vmatpush1.msra.mxu0 %v2178
  %2197 = vmatprep.subr.mxu0 0.0
  %2198 = vmatpush1.msra.mxu0 %v2179
  %2199 = vmatprep.subr.mxu0 0.0
  %2200 = vmatpush1.msra.mxu0 %v2180
  %2201 = vmatprep.subr.mxu0 0.0
  %2202 = vmatpush1.msra.mxu0 %v2181
  %2203 = vmatprep.subr.mxu0 0.0
  %2204 = vmatpush1.msra.mxu0 0.0
  %2205 = vmatprep.subr.mxu0 0.0
  %2206 = vmatpush1.msra.mxu0 0.0
  %2207 = vmatprep.subr.mxu0 0.0
  %2208 = vmatpush1.msra.mxu0 0.0
  %2209 = vmatprep.subr.mxu0 0.0
  %2210 = vmatpush1.msra.mxu0 0.0
  %2211 = vmatprep.subr.mxu0 0.0
  %2212 = vmatpush1.msra.mxu0 0.0
  %2213 = vmatprep.subr.mxu0 0.0
  %2214 = vmatpush1.msra.mxu0 0.0
  %2215 = vmatprep.subr.mxu0 0.0
  %2216 = vmatpush1.msra.mxu0 0.0
  %2217 = vmatprep.subr.mxu0 0.0
  %2218 = vmatpush1.msra.mxu0 0.0
  %2219 = vmatprep.subr.mxu0 0.0
  %2220 = vmatpush1.msra.mxu0 0.0
  %2221 = vmatprep.subr.mxu0 0.0
  %2222 = vmatpush1.msra.mxu0 0.0
  %2223 = vmatprep.subr.mxu0 0.0
  %2224 = vmatpush1.msra.mxu0 0.0
  %2225 = vmatprep.subr.mxu0 0.0
  %2226 = vmatpush1.msra.mxu0 0.0
  %2227 = vmatprep.subr.mxu0 0.0
  %2228 = vmatpush1.msra.mxu0 0.0
  %2229 = vmatprep.subr.mxu0 0.0
  %2230 = vmatpush1.msra.mxu0 0.0
  %2231 = vmatprep.subr.mxu0 0.0
  %2232 = vmatpush1.msra.mxu0 0.0
  %2233 = vmatprep.subr.mxu0 0.0
  %2234 = vmatpush1.msra.mxu0 0.0
  %2235 = vmatprep.subr.mxu0 0.0
  %2236 = vmatpush1.msra.mxu0 0.0
  %2237 = vmatprep.subr.mxu0 0.0
  %2238 = vmatpush1.msra.mxu0 0.0
  %2239 = vmatprep.subr.mxu0 0.0
  %2240 = vmatpush1.msra.mxu0 0.0
  %2241 = vmatprep.subr.mxu0 0.0
  %2242 = vmatpush1.msra.mxu0 0.0
  %2243 = vmatprep.subr.mxu0 0.0
  %2244 = vmatpush1.msra.mxu0 0.0
  %2245 = vmatprep.subr.mxu0 0.0
  %2246 = vmatpush1.msra.mxu0 0.0
  %2247 = vmatprep.subr.mxu0 0.0
  %2248 = vmatpush1.msra.mxu0 0.0
  %2249 = vmatprep.subr.mxu0 0.0
  %2250 = vmatpush1.msra.mxu0 0.0
  %2251 = vmatprep.subr.mxu0 0.0
  %2252 = vmatpush1.msra.mxu0 0.0
  %2253 = vmatprep.subr.mxu0 0.0
  %2254 = vmatpush1.msra.mxu0 0.0
  %2255 = vmatprep.subr.mxu0 0.0
  %2256 = vmatpush1.msra.mxu0 0.0
  %2257 = vmatprep.subr.mxu0 0.0
  %2258 = vmatpush1.msra.mxu0 0.0
  %2259 = vmatprep.mubr.f32.mxu0 0.0
  %2260 = vmatmul.mubr.f32.gmra.mrb[0].mxu0 %v2190
  %v2261 = vpop.f32.mrb[0].mxu0
  %v2262 = vadd.f32 %v2187, %v2261
  %v2263 = vpop.f32.mrb[0].mxu0
  %2264 = vmatprep.mubr.f32.mxu0 0.0
  %2265 = vmatmul.mubr.f32.gmra.mrb[0].mxu0 %v2193
  %v2266 = vpop.f32.mrb[0].mxu0
  %v2267 = vadd.f32 %v2187, %v2266
  %v2268 = vpop.f32.mrb[0].mxu0
  %2269 = vdwg.mxu0
  %v2270 = vld [vmem:[%s23] sm:$0xff]
  %v2271 = vld [vmem:[%s23 + $0x8] sm:$0xff]
  %v2272 = vld [vmem:[%s23 + $0x10] sm:$0xff]
  %v2273 = vld [vmem:[%s23 + $0x18] sm:$0xff]
  %v2274 = vld [vmem:[%s24] sm:$0x1]
  %v2276 = vlaneseq
  %v2277 = vshrl.u32 %v2276, 7
  %v2278 = vsub.s32 0, %v2277
  %v2279 = vrot.slane %v2274, %v2278
  %v2282 = vsel %vm622, %v1412, 0
  %2284 = vmatprep.subr.mxu0 0.0
  %2285 = vmatpush1.msra.mxu0 %v2270
  %2286 = vmatprep.subr.mxu0 0.0
  %2287 = vmatpush1.msra.mxu0 %v2271
  %2288 = vmatprep.subr.mxu0 0.0
  %2289 = vmatpush1.msra.mxu0 %v2272
  %2290 = vmatprep.subr.mxu0 0.0
  %2291 = vmatpush1.msra.mxu0 %v2273
  %2292 = vmatprep.subr.mxu0 0.0
  %2293 = vmatpush1.msra.mxu0 0.0
  %2294 = vmatprep.subr.mxu0 0.0
  %2295 = vmatpush1.msra.mxu0 0.0
  %2296 = vmatprep.subr.mxu0 0.0
  %2297 = vmatpush1.msra.mxu0 0.0
  %2298 = vmatprep.subr.mxu0 0.0
  %2299 = vmatpush1.msra.mxu0 0.0
  %2300 = vmatprep.subr.mxu0 0.0
  %2301 = vmatpush1.msra.mxu0 0.0
  %2302 = vmatprep.subr.mxu0 0.0
  %2303 = vmatpush1.msra.mxu0 0.0
  %2304 = vmatprep.subr.mxu0 0.0
  %2305 = vmatpush1.msra.mxu0 0.0
  %2306 = vmatprep.subr.mxu0 0.0
  %2307 = vmatpush1.msra.mxu0 0.0
  %2308 = vmatprep.subr.mxu0 0.0
  %2309 = vmatpush1.msra.mxu0 0.0
  %2310 = vmatprep.subr.mxu0 0.0
  %2311 = vmatpush1.msra.mxu0 0.0
  %2312 = vmatprep.subr.mxu0 0.0
  %2313 = vmatpush1.msra.mxu0 0.0
  %2314 = vmatprep.subr.mxu0 0.0
  %2315 = vmatpush1.msra.mxu0 0.0
  %2316 = vmatprep.subr.mxu0 0.0
  %2317 = vmatpush1.msra.mxu0 0.0
  %2318 = vmatprep.subr.mxu0 0.0
  %2319 = vmatpush1.msra.mxu0 0.0
  %2320 = vmatprep.subr.mxu0 0.0
  %2321 = vmatpush1.msra.mxu0 0.0
  %2322 = vmatprep.subr.mxu0 0.0
  %2323 = vmatpush1.msra.mxu0 0.0
  %2324 = vmatprep.subr.mxu0 0.0
  %2325 = vmatpush1.msra.mxu0 0.0
  %2326 = vmatprep.subr.mxu0 0.0
  %2327 = vmatpush1.msra.mxu0 0.0
  %2328 = vmatprep.subr.mxu0 0.0
  %2329 = vmatpush1.msra.mxu0 0.0
  %2330 = vmatprep.subr.mxu0 0.0
  %2331 = vmatpush1.msra.mxu0 0.0
  %2332 = vmatprep.subr.mxu0 0.0
  %2333 = vmatpush1.msra.mxu0 0.0
  %2334 = vmatprep.subr.mxu0 0.0
  %2335 = vmatpush1.msra.mxu0 0.0
  %2336 = vmatprep.subr.mxu0 0.0
  %2337 = vmatpush1.msra.mxu0 0.0
  %2338 = vmatprep.subr.mxu0 0.0
  %2339 = vmatpush1.msra.mxu0 0.0
  %2340 = vmatprep.subr.mxu0 0.0
  %2341 = vmatpush1.msra.mxu0 0.0
  %2342 = vmatprep.subr.mxu0 0.0
  %2343 = vmatpush1.msra.mxu0 0.0
  %2344 = vmatprep.subr.mxu0 0.0
  %2345 = vmatpush1.msra.mxu0 0.0
  %2346 = vmatprep.subr.mxu0 0.0
  %2347 = vmatpush1.msra.mxu0 0.0
  %2348 = vmatprep.mubr.f32.mxu0 0.0
  %2349 = vmatmul.mubr.f32.gmra.mrb[0].mxu0 %v2282
  %v2350 = vpop.f32.mrb[0].mxu0
  %v2351 = vadd.f32 %v2279, %v2350
  %v2352 = vpop.f32.mrb[0].mxu0
  %2353 = vdwg.mxu0
  %v2354 = vld [vmem:[%s25] sm:$0x1]
  %v2356 = vlaneseq
  %v2357 = vshrl.u32 %v2356, 7
  %v2358 = vsub.s32 0, %v2357
  %v2359 = vrot.slane %v2354, %v2358
  %v2361 = vmul.f32 %v2262, %v2359
  %v2362 = vmul.f32 %v2267, %v2359
  %v2363 = vsel %vm104, %v2361, 0.0
  %2364 = vadd.xlane.f32.xlu0 %v2363
  %v2365 = vpop.xlane.xlu0 %2364
  %v2366 = vsel %vm104, %v2362, 0.0
  %2367 = vadd.xlane.f32.xlu0 %v2366
  %v2368 = vpop.xlane.xlu0 %2367
  %v2369 = vld [vmem:[%s26] sm:$0x1]
  %v2371 = vlaneseq
  %v2372 = vshrl.u32 %v2371, 7
  %v2373 = vsub.s32 0, %v2372
  %v2374 = vrot.slane %v2369, %v2373
  %v2376 = vmul.f32 %v2351, %v2374
  %v2377 = vsel %vm104, %v2376, 0.0
  %2378 = vadd.xlane.f32.xlu0 %v2377
  %v2379 = vpop.xlane.xlu0 %2378
  %v2380 = vld [vmem:[%s4] sm:$0x1]
  %v2381 = vld [vmem:[%s4 + $0x1] sm:$0x1]
  %v2382 = vlaneseq
  %v2383 = vshrl.u32 %v2382, 7
  %v2384 = vadd.s32 %v2383, 8
  %v2385 = vlaneseq
  %v2386 = vshrl.u32 %v2385, 7
  %v2387 = vsub.s32 0, %v2386
  %v2388 = vrot.slane %v2380, %v2387
  %vm2389 = vcmp.eq.s32.totalorder %v2383, %v2388
  %vm2390 = vcmp.eq.s32.totalorder %v2384, %v2388
  %v2391 = vsel %vm2389, %v2365, 0.0
  %v2392 = vsel %vm2390, %v2368, 0.0
  %v2393 = vadd.f32 %v2391, %v2392
  %v2394 = vrot.slane %v2393, 4
  %v2395 = vadd.f32 %v2393, %v2394
  %v2396 = vrot.slane %v2395, 2
  %v2397 = vadd.f32 %v2395, %v2396
  %v2398 = vrot.slane %v2397, 1
  %v2399 = vadd.f32 %v2397, %v2398
  %v2400 = vlaneseq
  %v2401 = vshrl.u32 %v2400, 7
  %v2402 = vsub.s32 0, %v2401
  %v2403 = vrot.slane %v2381, %v2402
  %vm2404 = vcmp.eq.s32.totalorder %v2383, %v2403
  %v2405 = vsel %vm2404, %v2379, 0.0
  %v2406 = vrot.slane %v2405, 4
  %v2407 = vadd.f32 %v2405, %v2406
  %v2408 = vrot.slane %v2407, 2
  %v2409 = vadd.f32 %v2407, %v2408
  %v2410 = vrot.slane %v2409, 1
  %v2411 = vadd.f32 %v2409, %v2410
  %v2412 = vadd.f32 %v2399, %v2411
  %v2413 = vld [vmem:[#allocation2] sm:$0x1]
  %2415 = vset.pattern.permute.xlu0 0
  %2416 = vperm.xlu0 %2415, %v2413
  %v2417 = vpop.permute.xlu0 %2416
  %v2419 = vlaneseq
  %v2420 = vshrl.u32 %v2419, 7
  %v2421 = vsub.s32 0, %v2420
  %v2422 = vrot.slane %v2417, %v2421
  %v2423 = vadd.f32 %v2412, %v2422
  %v2424 = vsub.f32 0.0, %v2423
  %v2425 = vmul.f32 %v2424, 1.442695
  %v2426 = vpow.pop %v2425
  %v2427 = vadd.f32 %v2426, 1.0
  %v2428 = vrcp.pop %v2427
  %v2429 = vmul.f32 1.0, %v2428
  %2430 = vst [vmem:[%s28] sm:$0x1] %v2429
  // Predicated region
  $region114: #{hetero_link_prediction_forward.1} parent=0 // pred_check
    _
  $region115: #{hetero_link_prediction_forward.1} parent=0 // pred_check_branch
    %2432 = sbr.rel (0) target = $region117
  $region116: #{hetero_link_prediction_forward.1} parent=0 // pred_region
    _
  $region117: #{hetero_link_prediction_forward.1} parent=0 // pred_fallthru
    _
  // Predicated region
  $region118: #{hetero_link_prediction_forward.1} parent=0 // pred_check
    _
  $region119: #{hetero_link_prediction_forward.1} parent=0 // pred_check_branch
    %2434 = sbr.rel (0) target = $region121
  $region120: #{hetero_link_prediction_forward.1} parent=0 // pred_region
    _
  $region121: #{hetero_link_prediction_forward.1} parent=0 // pred_fallthru
    _

</llo_original>
